<compile_context>
chip_gen: v7x
topology: tpu7x:2x2x1
jax: 0.10.0
libtpu: 0.0.40
codegen_flags: <defaults>
</compile_context>

<pallas_src>
import functools
import math

import jax
import jax.numpy as jnp
from jax import lax
from jax.experimental import pallas as pl
from jax.experimental.pallas import tpu as pltpu


def _layernorm(x, gamma, beta, eps=1e-5):
    mu = jnp.mean(x, axis=-1, keepdims=True)
    var = jnp.mean(jnp.square(x - mu), axis=-1, keepdims=True)
    return (x - mu) * lax.rsqrt(var + eps) * gamma + beta


def encoder_layer_kernel(nhead, seq,
                         x_ref, p_ref,
                         wqk_ref, wv_ref, wo_ref, w1_ref, w2_ref,
                         b1_ref, vecs_ref,
                         out_ref):
    R, E = x_ref.shape                  # R = NB * seq rows (batch fused into M)
    nb = R // seq
    dh = E // nhead
    scale = 1.0 / math.sqrt(dh)
    bf16 = jnp.bfloat16

    x = x_ref[...].astype(jnp.float32)              # (R, E), rows (batch, seq)
    p = p_ref[...].astype(jnp.float32)

    vecs = vecs_ref[...]                            # packed (16, E) f32 vectors
    bq, bk, bv, bo, b2 = (vecs[i:i + 1, :] for i in range(5))
    g1, be1, g2, be2 = (vecs[i:i + 1, :] for i in range(5, 9))

    # --- fused q/k projection (one wide bf16 matmul), v separate ---
    qk_in = (x + p).astype(bf16)
    x_b = x.astype(bf16)
    qk = jnp.dot(qk_in, wqk_ref[...], preferred_element_type=jnp.float32)  # (R, 2E)
    q = (qk[:, :E] + bq) * scale                    # scale once, after bias (PyTorch)
    k = qk[:, E:] + bk
    v = jnp.dot(x_b, wv_ref[...], preferred_element_type=jnp.float32) + bv

    qb, kb, vb = q.astype(bf16), k.astype(bf16), v.astype(bf16)

    # --- self attention: short static head loop, batched over NB per head ---
    # Per-head out-projection contribution is accumulated straight into src2
    # (no (R, E) scratch round trip, no masked per-head stores).
    src2 = jnp.zeros((R, E), jnp.float32)
    for h in range(nhead):
        c0, c1 = h * dh, (h + 1) * dh
        qh = qb[:, c0:c1].reshape(nb, seq, dh)      # free: rows are batch-major
        kh = kb[:, c0:c1].reshape(nb, seq, dh)
        vh = vb[:, c0:c1].reshape(nb, seq, dh)
        s = jnp.einsum("bqd,bkd->bqk", qh, kh,
                       preferred_element_type=jnp.float32)          # (nb, S, S)
        s = s - jnp.max(s, axis=-1, keepdims=True)
        e = jnp.exp(s)
        a = e * pl.reciprocal(jnp.sum(e, axis=-1, keepdims=True), approx=True)
        oh = jnp.einsum("bqk,bkd->bqd", a.astype(bf16), vh,
                        preferred_element_type=jnp.float32)         # (nb, S, dh)
        src2 = src2 + jnp.dot(oh.reshape(R, dh).astype(bf16),
                              wo_ref[c0:c1, :],
                              preferred_element_type=jnp.float32)
    src2 = src2 + bo

    # residual + norm1 (dropout1 == identity in eval mode)
    h1 = _layernorm(x + src2, g1, be1)

    # --- feed forward: linear1 -> relu -> linear2 (bf16 operands, f32 accum) ---
    ff = jnp.dot(h1.astype(bf16), w1_ref[...],
                 preferred_element_type=jnp.float32) + b1_ref[...]
    ff = jnp.maximum(ff, 0.0)
    ff = jnp.dot(ff.astype(bf16), w2_ref[...],
                 preferred_element_type=jnp.float32) + b2

    # residual + norm2 (dropout2 == identity in eval mode)
    out_ref[...] = _layernorm(h1 + ff, g2, be2).astype(out_ref.dtype)


def transformer_encoder_layer(src, pos, params, nhead):
    """src, pos: (S, N, E) in PyTorch MultiheadAttention layout."""
    S, N, E = src.shape
    FF = params["w1"].shape[1]
    f32, bf16 = jnp.float32, jnp.bfloat16

    # Block size: target ~128 MXU rows, but keep >=4 grid steps when the batch
    # allows so the x/p/out DMA pipelines have depth (and v7x's 2 TCs each get
    # several steps).  Awkward N is padded up rather than shrinking NB to 1.
    NB = max(1, min(max(1, 128 // S), max(1, N // 4)))
    Np = ((N + NB - 1) // NB) * NB
    R = NB * S
    grid = (Np // NB,)

    # TODO(synk): keep the encoder stack batch-major end-to-end in production so
    #             these two HBM-level transposes (and the final one) disappear.
    x = jnp.transpose(src, (1, 0, 2))
    p = jnp.transpose(pos, (1, 0, 2))
    if Np != N:
        pad = jnp.zeros((Np - N, S, E), x.dtype)
        x = jnp.concatenate([x, pad], axis=0)
        p = jnp.concatenate([p, pad], axis=0)
    x = x.reshape(Np * S, E)
    p = p.reshape(Np * S, E)

    # Fused q/k weight; all big matmul weights cast to bf16 once (f32 accum in
    # the kernel).  Small (1, E) vectors packed into one (16, E) f32 stream.
    wqk = jnp.concatenate([params["wq"], params["wk"]], axis=1).astype(bf16)
    wv = params["wv"].astype(bf16)
    wo = params["wo"].astype(bf16)
    w1 = params["w1"].astype(bf16)
    w2 = params["w2"].astype(bf16)
    b1 = params["b1"].astype(f32)
    small = jnp.stack([params[k][0] for k in
                       ("bq", "bk", "bv", "bo", "b2", "g1", "be1", "g2", "be2")])
    vecs = jnp.zeros((16, E), f32).at[:9, :].set(small.astype(f32))

    row_spec = pl.BlockSpec((R, E), lambda b: (b, 0))

    def const_spec(shape):
        # Constant across the grid: single-buffer to halve weight VMEM residency.
        return pl.BlockSpec(shape, lambda b: (0, 0), pipeline_mode=pl.Buffered(1))

    # Explicit scoped-VMEM budget computed from the actual buffers (+ headroom):
    # x/p/out row blocks double-buffered, weights single-buffered.
    act_bytes = R * E * 4
    weight_bytes = (E * 2 * E + 2 * E * E + E * FF + FF * E) * 2 + (FF + 16 * E) * 4
    vmem_limit = int(min(64 << 20, max(8 << 20, 4 * (6 * act_bytes + weight_bytes)
                                       + (2 << 20))))

    kernel = functools.partial(encoder_layer_kernel, nhead, S)
    out = pl.pallas_call(
        kernel,
        out_shape=jax.ShapeDtypeStruct((Np * S, E), src.dtype),
        grid=grid,
        in_specs=[
            row_spec, row_spec,                       # src, pos row blocks
            const_spec((E, 2 * E)),                   # fused q/k weight
            const_spec((E, E)), const_spec((E, E)),   # v proj, out proj
            const_spec((E, FF)), const_spec((FF, E)), # linear1, linear2
            const_spec((1, FF)),                      # linear1 bias
            const_spec((16, E)),                      # packed biases / LN params
        ],
        out_specs=row_spec,
        compiler_params=pltpu.CompilerParams(
            dimension_semantics=("parallel",),        # batch blocks are independent
            vmem_limit_bytes=vmem_limit),
    )(x, p, wqk, wv, wo, w1, w2, b1, vecs)

    out = out.reshape(Np, S, E)[:N]                   # drop batch padding
    return jnp.transpose(out, (1, 0, 2))              # back to (S, N, E)


def _reference(src, pos, params, nhead, mm_dtype=jnp.float32):
    """Pure-JAX reference.  mm_dtype=f32 -> exact PyTorch eval-mode semantics;
    mm_dtype=bf16 mirrors the kernel's matmul-operand precision."""
    S, N, E = src.shape
    dh = E // nhead
    scale = 1.0 / math.sqrt(dh)

    def mm(a, b):
        return jnp.dot(a.astype(mm_dtype), b.astype(mm_dtype),
                       preferred_element_type=jnp.float32)

    x = jnp.transpose(src, (1, 0, 2)).astype(jnp.float32)   # (N, S, E)
    p = jnp.transpose(pos, (1, 0, 2)).astype(jnp.float32)
    qk_in = x + p
    q = (mm(qk_in, params["wq"]) + params["bq"][0]) * scale
    k = mm(qk_in, params["wk"]) + params["bk"][0]
    v = mm(x, params["wv"]) + params["bv"][0]

    qh = q.reshape(N, S, nhead, dh).transpose(0, 2, 1, 3)
    kh = k.reshape(N, S, nhead, dh).transpose(0, 2, 1, 3)
    vh = v.reshape(N, S, nhead, dh).transpose(0, 2, 1, 3)
    s = jnp.einsum("nhqd,nhkd->nhqk", qh.astype(mm_dtype), kh.astype(mm_dtype),
                   preferred_element_type=jnp.float32)
    a = jax.nn.softmax(s, axis=-1)
    o = jnp.einsum("nhqk,nhkd->nhqd", a.astype(mm_dtype), vh.astype(mm_dtype),
                   preferred_element_type=jnp.float32)
    o = o.transpose(0, 2, 1, 3).reshape(N, S, E)
    src2 = mm(o, params["wo"]) + params["bo"][0]

    h1 = _layernorm(x + src2, params["g1"][0], params["be1"][0])
    ff = jnp.maximum(mm(h1, params["w1"]) + params["b1"][0], 0.0)
    ff = mm(ff, params["w2"]) + params["b2"][0]
    out = _layernorm(h1 + ff, params["g2"][0], params["be2"][0])
    return jnp.transpose(out, (1, 0, 2))


if __name__ == "__main__":
    # seq, batch, d_model, nhead, dim_feedforward
    S, N, E, H, FF = 8, 32, 32, 4, 64

    key = jax.random.PRNGKey(0)
    ks = jax.random.split(key, 16)
    nrm = lambda k, shape: (0.1 * jax.random.normal(k, shape)).astype(jnp.float32)

    params = {
        # stored pre-transposed so the kernel computes x @ W  (PyTorch: x @ W.T)
        "wq": nrm(ks[0], (E, E)),  "bq": nrm(ks[1], (1, E)),
        "wk": nrm(ks[2], (E, E)),  "bk": nrm(ks[3], (1, E)),
        "wv": nrm(ks[4], (E, E)),  "bv": nrm(ks[5], (1, E)),
        "wo": nrm(ks[6], (E, E)),  "bo": nrm(ks[7], (1, E)),
        "w1": nrm(ks[8], (E, FF)), "b1": nrm(ks[9], (1, FF)),
        "w2": nrm(ks[10], (FF, E)), "b2": nrm(ks[11], (1, E)),
        "g1": jnp.ones((1, E), jnp.float32),  "be1": jnp.zeros((1, E), jnp.float32),
        "g2": jnp.ones((1, E), jnp.float32),  "be2": jnp.zeros((1, E), jnp.float32),
    }

    src = nrm(ks[12], (S, N, E))
    pos = nrm(ks[13], (S, N, E))

    out = transformer_encoder_layer(src, pos, params, H)
    out = jax.block_until_ready(out)
    assert out.shape == (S, N, E)

    # Tight check vs. a reference that mirrors the kernel's bf16 matmul operands,
    # loose check vs. the exact f32 (PyTorch-semantics) reference.
    ref_b = _reference(src, pos, params, H, mm_dtype=jnp.bfloat16)
    ref_f = _reference(src, pos, params, H, mm_dtype=jnp.float32)
    err_b = float(jnp.max(jnp.abs(out - ref_b)))
    err_f = float(jnp.max(jnp.abs(out - ref_f)))
    assert jnp.allclose(out, ref_b, atol=1e-2, rtol=1e-2), f"bf16-ref mismatch {err_b}"
    assert jnp.allclose(out, ref_f, atol=3e-2, rtol=3e-2), f"f32-ref mismatch {err_f}"

    print("KERNEL_OK")
</pallas_src>

<mosaic_0001>
module attributes {stable_mosaic.version = 11 : i64} {
  func.func @encoder_layer_kernel(%arg0: i32, %arg1: memref<64x32xf32, #tpu.memory_space<vmem>>, %arg2: memref<64x32xf32, #tpu.memory_space<vmem>>, %arg3: memref<32x64xbf16, #tpu.memory_space<vmem>>, %arg4: memref<32x32xbf16, #tpu.memory_space<vmem>>, %arg5: memref<32x32xbf16, #tpu.memory_space<vmem>>, %arg6: memref<32x64xbf16, #tpu.memory_space<vmem>>, %arg7: memref<64x32xbf16, #tpu.memory_space<vmem>>, %arg8: memref<1x64xf32, #tpu.memory_space<vmem>>, %arg9: memref<16x32xf32, #tpu.memory_space<vmem>>, %arg10: memref<64x32xf32, #tpu.memory_space<vmem>>) attributes {dimension_semantics = [#tpu.dimension_semantics<parallel>], iteration_bounds = array<i64: 4>, scalar_prefetch = 0 : i64, scratch_operands = 0 : i64, tpu.core_type = #tpu.core_type<tc>, window_params = [{transform_indices = @transform_0, window_bounds = array<i64: 64, 32>}, {transform_indices = @transform_1, window_bounds = array<i64: 64, 32>}, {pipeline_mode = #tpu.pipeline_mode<synchronous>, transform_indices = @transform_2, window_bounds = array<i64: 32, 64>}, {pipeline_mode = #tpu.pipeline_mode<synchronous>, transform_indices = @transform_3, window_bounds = array<i64: 32, 32>}, {pipeline_mode = #tpu.pipeline_mode<synchronous>, transform_indices = @transform_4, window_bounds = array<i64: 32, 32>}, {pipeline_mode = #tpu.pipeline_mode<synchronous>, transform_indices = @transform_5, window_bounds = array<i64: 32, 64>}, {pipeline_mode = #tpu.pipeline_mode<synchronous>, transform_indices = @transform_6, window_bounds = array<i64: 64, 32>}, {pipeline_mode = #tpu.pipeline_mode<synchronous>, transform_indices = @transform_7, window_bounds = array<i64: 1, 64>}, {pipeline_mode = #tpu.pipeline_mode<synchronous>, transform_indices = @transform_8, window_bounds = array<i64: 16, 32>}, {transform_indices = @transform_9, window_bounds = array<i64: 64, 32>}]} {
    %c0 = arith.constant 0 : index
    %c0_0 = arith.constant 0 : index
    %0 = vector.load %arg1[%c0, %c0_0] : memref<64x32xf32, #tpu.memory_space<vmem>>, vector<64x32xf32>
    %c0_1 = arith.constant 0 : index
    %c0_2 = arith.constant 0 : index
    %1 = vector.load %arg2[%c0_1, %c0_2] : memref<64x32xf32, #tpu.memory_space<vmem>>, vector<64x32xf32>
    %c0_3 = arith.constant 0 : index
    %c0_4 = arith.constant 0 : index
    %2 = vector.load %arg9[%c0_3, %c0_4] : memref<16x32xf32, #tpu.memory_space<vmem>>, vector<16x32xf32>
    %3 = vector.extract_strided_slice %2 {offsets = [0, 0], sizes = [1, 32], strides = [1, 1]} : vector<16x32xf32> to vector<1x32xf32>
    %4 = vector.extract_strided_slice %2 {offsets = [1, 0], sizes = [1, 32], strides = [1, 1]} : vector<16x32xf32> to vector<1x32xf32>
    %5 = vector.extract_strided_slice %2 {offsets = [2, 0], sizes = [1, 32], strides = [1, 1]} : vector<16x32xf32> to vector<1x32xf32>
    %6 = vector.extract_strided_slice %2 {offsets = [3, 0], sizes = [1, 32], strides = [1, 1]} : vector<16x32xf32> to vector<1x32xf32>
    %7 = vector.extract_strided_slice %2 {offsets = [4, 0], sizes = [1, 32], strides = [1, 1]} : vector<16x32xf32> to vector<1x32xf32>
    %8 = vector.extract_strided_slice %2 {offsets = [5, 0], sizes = [1, 32], strides = [1, 1]} : vector<16x32xf32> to vector<1x32xf32>
    %9 = vector.extract_strided_slice %2 {offsets = [6, 0], sizes = [1, 32], strides = [1, 1]} : vector<16x32xf32> to vector<1x32xf32>
    %10 = vector.extract_strided_slice %2 {offsets = [7, 0], sizes = [1, 32], strides = [1, 1]} : vector<16x32xf32> to vector<1x32xf32>
    %11 = vector.extract_strided_slice %2 {offsets = [8, 0], sizes = [1, 32], strides = [1, 1]} : vector<16x32xf32> to vector<1x32xf32>
    %12 = arith.addf %0, %1 : vector<64x32xf32>
    %13 = arith.truncf %12 : vector<64x32xf32> to vector<64x32xbf16>
    %14 = arith.truncf %0 : vector<64x32xf32> to vector<64x32xbf16>
    %c0_5 = arith.constant 0 : index
    %c0_6 = arith.constant 0 : index
    %15 = vector.load %arg3[%c0_5, %c0_6] : memref<32x64xbf16, #tpu.memory_space<vmem>>, vector<32x64xbf16>
    %cst = arith.constant dense<0.000000e+00> : vector<64x64xf32>
    %16 = tpu.matmul %13, %15, %cst {dimension_numbers = #tpu.dot_dimension_numbers<[1], [0], [0], [1], [0, 0, 1, 1], [], []>} : vector<64x32xbf16>, vector<32x64xbf16>, vector<64x64xf32> -> vector<64x64xf32>
    %17 = vector.extract_strided_slice %16 {offsets = [0, 0], sizes = [64, 32], strides = [1, 1]} : vector<64x64xf32> to vector<64x32xf32>
    %18 = vector.broadcast %3 : vector<1x32xf32> to vector<64x32xf32>
    %19 = arith.addf %17, %18 : vector<64x32xf32>
    %cst_7 = arith.constant 0.353553385 : f32
    %20 = vector.broadcast %cst_7 : f32 to vector<64x32xf32>
    %21 = arith.mulf %19, %20 : vector<64x32xf32>
    %22 = vector.extract_strided_slice %16 {offsets = [0, 32], sizes = [64, 32], strides = [1, 1]} : vector<64x64xf32> to vector<64x32xf32>
    %23 = vector.broadcast %4 : vector<1x32xf32> to vector<64x32xf32>
    %24 = arith.addf %22, %23 : vector<64x32xf32>
    %c0_8 = arith.constant 0 : index
    %c0_9 = arith.constant 0 : index
    %25 = vector.load %arg4[%c0_8, %c0_9] : memref<32x32xbf16, #tpu.memory_space<vmem>>, vector<32x32xbf16>
    %cst_10 = arith.constant dense<0.000000e+00> : vector<64x32xf32>
    %26 = tpu.matmul %14, %25, %cst_10 {dimension_numbers = #tpu.dot_dimension_numbers<[1], [0], [0], [1], [0, 0, 1, 1], [], []>} : vector<64x32xbf16>, vector<32x32xbf16>, vector<64x32xf32> -> vector<64x32xf32>
    %27 = vector.broadcast %5 : vector<1x32xf32> to vector<64x32xf32>
    %28 = arith.addf %26, %27 : vector<64x32xf32>
    %29 = arith.truncf %21 : vector<64x32xf32> to vector<64x32xbf16>
    %30 = arith.truncf %24 : vector<64x32xf32> to vector<64x32xbf16>
    %31 = arith.truncf %28 : vector<64x32xf32> to vector<64x32xbf16>
    %cst_11 = arith.constant 0.000000e+00 : f32
    %32 = vector.broadcast %cst_11 : f32 to vector<64x32xf32>
    %33 = vector.extract_strided_slice %29 {offsets = [0, 0], sizes = [64, 8], strides = [1, 1]} : vector<64x32xbf16> to vector<64x8xbf16>
    %34 = vector.shape_cast %33 : vector<64x8xbf16> to vector<8x8x8xbf16>
    %35 = vector.extract_strided_slice %30 {offsets = [0, 0], sizes = [64, 8], strides = [1, 1]} : vector<64x32xbf16> to vector<64x8xbf16>
    %36 = vector.shape_cast %35 : vector<64x8xbf16> to vector<8x8x8xbf16>
    %37 = vector.extract_strided_slice %31 {offsets = [0, 0], sizes = [64, 8], strides = [1, 1]} : vector<64x32xbf16> to vector<64x8xbf16>
    %38 = vector.shape_cast %37 : vector<64x8xbf16> to vector<8x8x8xbf16>
    "tpu.trace_start"() <{level = 10 : i32, message = "bqd,bkd->bqk"}> : () -> ()
    %cst_12 = arith.constant dense<0.000000e+00> : vector<8x8x8xf32>
    %39 = tpu.matmul %34, %36, %cst_12 {dimension_numbers = #tpu.dot_dimension_numbers<[2], [2], [1], [1], [0, 0, 0, 1, 1, 1], [0], [0]>} : vector<8x8x8xbf16>, vector<8x8x8xbf16>, vector<8x8x8xf32> -> vector<8x8x8xf32>
    "tpu.trace_stop"() : () -> ()
    %cst_13 = arith.constant dense<0xFF800000> : vector<8x8xf32>
    %40 = vector.multi_reduction <maximumf>, %39, %cst_13 [2] : vector<8x8x8xf32> to vector<8x8xf32>
    %41 = vector.shape_cast %40 : vector<8x8xf32> to vector<8x8x1xf32>
    %42 = vector.broadcast %41 : vector<8x8x1xf32> to vector<8x8x8xf32>
    %43 = arith.subf %39, %42 : vector<8x8x8xf32>
    %44 = math.exp %43 : vector<8x8x8xf32>
    %cst_14 = arith.constant dense<0.000000e+00> : vector<8x8xf32>
    %45 = vector.multi_reduction <add>, %44, %cst_14 [2] : vector<8x8x8xf32> to vector<8x8xf32>
    %46 = vector.shape_cast %45 : vector<8x8xf32> to vector<8x8x1xf32>
    %47 = tpu.reciprocal %46 {approx = true} : vector<8x8x1xf32> -> vector<8x8x1xf32>
    %48 = vector.broadcast %47 : vector<8x8x1xf32> to vector<8x8x8xf32>
    %49 = arith.mulf %44, %48 : vector<8x8x8xf32>
    %50 = arith.truncf %49 : vector<8x8x8xf32> to vector<8x8x8xbf16>
    "tpu.trace_start"() <{level = 10 : i32, message = "bqk,bkd->bqd"}> : () -> ()
    %cst_15 = arith.constant dense<0.000000e+00> : vector<8x8x8xf32>
    %51 = tpu.matmul %50, %38, %cst_15 {dimension_numbers = #tpu.dot_dimension_numbers<[2], [1], [1], [2], [0, 0, 0, 1, 1, 2], [0], [0]>} : vector<8x8x8xbf16>, vector<8x8x8xbf16>, vector<8x8x8xf32> -> vector<8x8x8xf32>
    "tpu.trace_stop"() : () -> ()
    %52 = vector.shape_cast %51 : vector<8x8x8xf32> to vector<64x8xf32>
    %53 = arith.truncf %52 : vector<64x8xf32> to vector<64x8xbf16>
    %c0_16 = arith.constant 0 : index
    %c0_17 = arith.constant 0 : index
    %54 = vector.load %arg5[%c0_16, %c0_17] : memref<32x32xbf16, #tpu.memory_space<vmem>>, vector<8x32xbf16>
    %cst_18 = arith.constant dense<0.000000e+00> : vector<64x32xf32>
    %55 = tpu.matmul %53, %54, %cst_18 {dimension_numbers = #tpu.dot_dimension_numbers<[1], [0], [0], [1], [0, 0, 1, 1], [], []>} : vector<64x8xbf16>, vector<8x32xbf16>, vector<64x32xf32> -> vector<64x32xf32>
    %56 = arith.addf %32, %55 : vector<64x32xf32>
    %57 = vector.extract_strided_slice %29 {offsets = [0, 8], sizes = [64, 8], strides = [1, 1]} : vector<64x32xbf16> to vector<64x8xbf16>
    %58 = vector.shape_cast %57 : vector<64x8xbf16> to vector<8x8x8xbf16>
    %59 = vector.extract_strided_slice %30 {offsets = [0, 8], sizes = [64, 8], strides = [1, 1]} : vector<64x32xbf16> to vector<64x8xbf16>
    %60 = vector.shape_cast %59 : vector<64x8xbf16> to vector<8x8x8xbf16>
    %61 = vector.extract_strided_slice %31 {offsets = [0, 8], sizes = [64, 8], strides = [1, 1]} : vector<64x32xbf16> to vector<64x8xbf16>
    %62 = vector.shape_cast %61 : vector<64x8xbf16> to vector<8x8x8xbf16>
    "tpu.trace_start"() <{level = 10 : i32, message = "bqd,bkd->bqk"}> : () -> ()
    %cst_19 = arith.constant dense<0.000000e+00> : vector<8x8x8xf32>
    %63 = tpu.matmul %58, %60, %cst_19 {dimension_numbers = #tpu.dot_dimension_numbers<[2], [2], [1], [1], [0, 0, 0, 1, 1, 1], [0], [0]>} : vector<8x8x8xbf16>, vector<8x8x8xbf16>, vector<8x8x8xf32> -> vector<8x8x8xf32>
    "tpu.trace_stop"() : () -> ()
    %cst_20 = arith.constant dense<0xFF800000> : vector<8x8xf32>
    %64 = vector.multi_reduction <maximumf>, %63, %cst_20 [2] : vector<8x8x8xf32> to vector<8x8xf32>
    %65 = vector.shape_cast %64 : vector<8x8xf32> to vector<8x8x1xf32>
    %66 = vector.broadcast %65 : vector<8x8x1xf32> to vector<8x8x8xf32>
    %67 = arith.subf %63, %66 : vector<8x8x8xf32>
    %68 = math.exp %67 : vector<8x8x8xf32>
    %cst_21 = arith.constant dense<0.000000e+00> : vector<8x8xf32>
    %69 = vector.multi_reduction <add>, %68, %cst_21 [2] : vector<8x8x8xf32> to vector<8x8xf32>
    %70 = vector.shape_cast %69 : vector<8x8xf32> to vector<8x8x1xf32>
    %71 = tpu.reciprocal %70 {approx = true} : vector<8x8x1xf32> -> vector<8x8x1xf32>
    %72 = vector.broadcast %71 : vector<8x8x1xf32> to vector<8x8x8xf32>
    %73 = arith.mulf %68, %72 : vector<8x8x8xf32>
    %74 = arith.truncf %73 : vector<8x8x8xf32> to vector<8x8x8xbf16>
    "tpu.trace_start"() <{level = 10 : i32, message = "bqk,bkd->bqd"}> : () -> ()
    %cst_22 = arith.constant dense<0.000000e+00> : vector<8x8x8xf32>
    %75 = tpu.matmul %74, %62, %cst_22 {dimension_numbers = #tpu.dot_dimension_numbers<[2], [1], [1], [2], [0, 0, 0, 1, 1, 2], [0], [0]>} : vector<8x8x8xbf16>, vector<8x8x8xbf16>, vector<8x8x8xf32> -> vector<8x8x8xf32>
    "tpu.trace_stop"() : () -> ()
    %76 = vector.shape_cast %75 : vector<8x8x8xf32> to vector<64x8xf32>
    %77 = arith.truncf %76 : vector<64x8xf32> to vector<64x8xbf16>
    %c8 = arith.constant 8 : index
    %c0_23 = arith.constant 0 : index
    %78 = vector.load %arg5[%c8, %c0_23] : memref<32x32xbf16, #tpu.memory_space<vmem>>, vector<8x32xbf16>
    %cst_24 = arith.constant dense<0.000000e+00> : vector<64x32xf32>
    %79 = tpu.matmul %77, %78, %cst_24 {dimension_numbers = #tpu.dot_dimension_numbers<[1], [0], [0], [1], [0, 0, 1, 1], [], []>} : vector<64x8xbf16>, vector<8x32xbf16>, vector<64x32xf32> -> vector<64x32xf32>
    %80 = arith.addf %56, %79 : vector<64x32xf32>
    %81 = vector.extract_strided_slice %29 {offsets = [0, 16], sizes = [64, 8], strides = [1, 1]} : vector<64x32xbf16> to vector<64x8xbf16>
    %82 = vector.shape_cast %81 : vector<64x8xbf16> to vector<8x8x8xbf16>
    %83 = vector.extract_strided_slice %30 {offsets = [0, 16], sizes = [64, 8], strides = [1, 1]} : vector<64x32xbf16> to vector<64x8xbf16>
    %84 = vector.shape_cast %83 : vector<64x8xbf16> to vector<8x8x8xbf16>
    %85 = vector.extract_strided_slice %31 {offsets = [0, 16], sizes = [64, 8], strides = [1, 1]} : vector<64x32xbf16> to vector<64x8xbf16>
    %86 = vector.shape_cast %85 : vector<64x8xbf16> to vector<8x8x8xbf16>
    "tpu.trace_start"() <{level = 10 : i32, message = "bqd,bkd->bqk"}> : () -> ()
    %cst_25 = arith.constant dense<0.000000e+00> : vector<8x8x8xf32>
    %87 = tpu.matmul %82, %84, %cst_25 {dimension_numbers = #tpu.dot_dimension_numbers<[2], [2], [1], [1], [0, 0, 0, 1, 1, 1], [0], [0]>} : vector<8x8x8xbf16>, vector<8x8x8xbf16>, vector<8x8x8xf32> -> vector<8x8x8xf32>
    "tpu.trace_stop"() : () -> ()
    %cst_26 = arith.constant dense<0xFF800000> : vector<8x8xf32>
    %88 = vector.multi_reduction <maximumf>, %87, %cst_26 [2] : vector<8x8x8xf32> to vector<8x8xf32>
    %89 = vector.shape_cast %88 : vector<8x8xf32> to vector<8x8x1xf32>
    %90 = vector.broadcast %89 : vector<8x8x1xf32> to vector<8x8x8xf32>
    %91 = arith.subf %87, %90 : vector<8x8x8xf32>
    %92 = math.exp %91 : vector<8x8x8xf32>
    %cst_27 = arith.constant dense<0.000000e+00> : vector<8x8xf32>
    %93 = vector.multi_reduction <add>, %92, %cst_27 [2] : vector<8x8x8xf32> to vector<8x8xf32>
    %94 = vector.shape_cast %93 : vector<8x8xf32> to vector<8x8x1xf32>
    %95 = tpu.reciprocal %94 {approx = true} : vector<8x8x1xf32> -> vector<8x8x1xf32>
    %96 = vector.broadcast %95 : vector<8x8x1xf32> to vector<8x8x8xf32>
    %97 = arith.mulf %92, %96 : vector<8x8x8xf32>
    %98 = arith.truncf %97 : vector<8x8x8xf32> to vector<8x8x8xbf16>
    "tpu.trace_start"() <{level = 10 : i32, message = "bqk,bkd->bqd"}> : () -> ()
    %cst_28 = arith.constant dense<0.000000e+00> : vector<8x8x8xf32>
    %99 = tpu.matmul %98, %86, %cst_28 {dimension_numbers = #tpu.dot_dimension_numbers<[2], [1], [1], [2], [0, 0, 0, 1, 1, 2], [0], [0]>} : vector<8x8x8xbf16>, vector<8x8x8xbf16>, vector<8x8x8xf32> -> vector<8x8x8xf32>
    "tpu.trace_stop"() : () -> ()
    %100 = vector.shape_cast %99 : vector<8x8x8xf32> to vector<64x8xf32>
    %101 = arith.truncf %100 : vector<64x8xf32> to vector<64x8xbf16>
    %c16 = arith.constant 16 : index
    %c0_29 = arith.constant 0 : index
    %102 = vector.load %arg5[%c16, %c0_29] : memref<32x32xbf16, #tpu.memory_space<vmem>>, vector<8x32xbf16>
    %cst_30 = arith.constant dense<0.000000e+00> : vector<64x32xf32>
    %103 = tpu.matmul %101, %102, %cst_30 {dimension_numbers = #tpu.dot_dimension_numbers<[1], [0], [0], [1], [0, 0, 1, 1], [], []>} : vector<64x8xbf16>, vector<8x32xbf16>, vector<64x32xf32> -> vector<64x32xf32>
    %104 = arith.addf %80, %103 : vector<64x32xf32>
    %105 = vector.extract_strided_slice %29 {offsets = [0, 24], sizes = [64, 8], strides = [1, 1]} : vector<64x32xbf16> to vector<64x8xbf16>
    %106 = vector.shape_cast %105 : vector<64x8xbf16> to vector<8x8x8xbf16>
    %107 = vector.extract_strided_slice %30 {offsets = [0, 24], sizes = [64, 8], strides = [1, 1]} : vector<64x32xbf16> to vector<64x8xbf16>
    %108 = vector.shape_cast %107 : vector<64x8xbf16> to vector<8x8x8xbf16>
    %109 = vector.extract_strided_slice %31 {offsets = [0, 24], sizes = [64, 8], strides = [1, 1]} : vector<64x32xbf16> to vector<64x8xbf16>
    %110 = vector.shape_cast %109 : vector<64x8xbf16> to vector<8x8x8xbf16>
    "tpu.trace_start"() <{level = 10 : i32, message = "bqd,bkd->bqk"}> : () -> ()
    %cst_31 = arith.constant dense<0.000000e+00> : vector<8x8x8xf32>
    %111 = tpu.matmul %106, %108, %cst_31 {dimension_numbers = #tpu.dot_dimension_numbers<[2], [2], [1], [1], [0, 0, 0, 1, 1, 1], [0], [0]>} : vector<8x8x8xbf16>, vector<8x8x8xbf16>, vector<8x8x8xf32> -> vector<8x8x8xf32>
    "tpu.trace_stop"() : () -> ()
    %cst_32 = arith.constant dense<0xFF800000> : vector<8x8xf32>
    %112 = vector.multi_reduction <maximumf>, %111, %cst_32 [2] : vector<8x8x8xf32> to vector<8x8xf32>
    %113 = vector.shape_cast %112 : vector<8x8xf32> to vector<8x8x1xf32>
    %114 = vector.broadcast %113 : vector<8x8x1xf32> to vector<8x8x8xf32>
    %115 = arith.subf %111, %114 : vector<8x8x8xf32>
    %116 = math.exp %115 : vector<8x8x8xf32>
    %cst_33 = arith.constant dense<0.000000e+00> : vector<8x8xf32>
    %117 = vector.multi_reduction <add>, %116, %cst_33 [2] : vector<8x8x8xf32> to vector<8x8xf32>
    %118 = vector.shape_cast %117 : vector<8x8xf32> to vector<8x8x1xf32>
    %119 = tpu.reciprocal %118 {approx = true} : vector<8x8x1xf32> -> vector<8x8x1xf32>
    %120 = vector.broadcast %119 : vector<8x8x1xf32> to vector<8x8x8xf32>
    %121 = arith.mulf %116, %120 : vector<8x8x8xf32>
    %122 = arith.truncf %121 : vector<8x8x8xf32> to vector<8x8x8xbf16>
    "tpu.trace_start"() <{level = 10 : i32, message = "bqk,bkd->bqd"}> : () -> ()
    %cst_34 = arith.constant dense<0.000000e+00> : vector<8x8x8xf32>
    %123 = tpu.matmul %122, %110, %cst_34 {dimension_numbers = #tpu.dot_dimension_numbers<[2], [1], [1], [2], [0, 0, 0, 1, 1, 2], [0], [0]>} : vector<8x8x8xbf16>, vector<8x8x8xbf16>, vector<8x8x8xf32> -> vector<8x8x8xf32>
    "tpu.trace_stop"() : () -> ()
    %124 = vector.shape_cast %123 : vector<8x8x8xf32> to vector<64x8xf32>
    %125 = arith.truncf %124 : vector<64x8xf32> to vector<64x8xbf16>
    %c24 = arith.constant 24 : index
    %c0_35 = arith.constant 0 : index
    %126 = vector.load %arg5[%c24, %c0_35] : memref<32x32xbf16, #tpu.memory_space<vmem>>, vector<8x32xbf16>
    %cst_36 = arith.constant dense<0.000000e+00> : vector<64x32xf32>
    %127 = tpu.matmul %125, %126, %cst_36 {dimension_numbers = #tpu.dot_dimension_numbers<[1], [0], [0], [1], [0, 0, 1, 1], [], []>} : vector<64x8xbf16>, vector<8x32xbf16>, vector<64x32xf32> -> vector<64x32xf32>
    %128 = arith.addf %104, %127 : vector<64x32xf32>
    %129 = vector.broadcast %6 : vector<1x32xf32> to vector<64x32xf32>
    %130 = arith.addf %128, %129 : vector<64x32xf32>
    %131 = arith.addf %0, %130 : vector<64x32xf32>
    %cst_37 = arith.constant dense<0.000000e+00> : vector<64xf32>
    %132 = vector.multi_reduction <add>, %131, %cst_37 [1] : vector<64x32xf32> to vector<64xf32>
    %133 = vector.shape_cast %132 : vector<64xf32> to vector<64x1xf32>
    %cst_38 = arith.constant 3.200000e+01 : f32
    %134 = vector.broadcast %cst_38 : f32 to vector<64x1xf32>
    %135 = arith.divf %133, %134 : vector<64x1xf32>
    %136 = vector.broadcast %135 : vector<64x1xf32> to vector<64x32xf32>
    %137 = arith.subf %131, %136 : vector<64x32xf32>
    %138 = arith.mulf %137, %137 : vector<64x32xf32>
    %cst_39 = arith.constant dense<0.000000e+00> : vector<64xf32>
    %139 = vector.multi_reduction <add>, %138, %cst_39 [1] : vector<64x32xf32> to vector<64xf32>
    %140 = vector.shape_cast %139 : vector<64xf32> to vector<64x1xf32>
    %cst_40 = arith.constant 3.200000e+01 : f32
    %141 = vector.broadcast %cst_40 : f32 to vector<64x1xf32>
    %142 = arith.divf %140, %141 : vector<64x1xf32>
    %143 = vector.broadcast %135 : vector<64x1xf32> to vector<64x32xf32>
    %144 = arith.subf %131, %143 : vector<64x32xf32>
    %cst_41 = arith.constant 9.99999974E-6 : f32
    %145 = vector.broadcast %cst_41 : f32 to vector<64x1xf32>
    %146 = arith.addf %142, %145 : vector<64x1xf32>
    %147 = math.rsqrt %146 : vector<64x1xf32>
    %148 = vector.broadcast %147 : vector<64x1xf32> to vector<64x32xf32>
    %149 = arith.mulf %144, %148 : vector<64x32xf32>
    %150 = vector.broadcast %8 : vector<1x32xf32> to vector<64x32xf32>
    %151 = arith.mulf %149, %150 : vector<64x32xf32>
    %152 = vector.broadcast %9 : vector<1x32xf32> to vector<64x32xf32>
    %153 = arith.addf %151, %152 : vector<64x32xf32>
    %154 = arith.truncf %153 : vector<64x32xf32> to vector<64x32xbf16>
    %c0_42 = arith.constant 0 : index
    %c0_43 = arith.constant 0 : index
    %155 = vector.load %arg6[%c0_42, %c0_43] : memref<32x64xbf16, #tpu.memory_space<vmem>>, vector<32x64xbf16>
    %cst_44 = arith.constant dense<0.000000e+00> : vector<64x64xf32>
    %156 = tpu.matmul %154, %155, %cst_44 {dimension_numbers = #tpu.dot_dimension_numbers<[1], [0], [0], [1], [0, 0, 1, 1], [], []>} : vector<64x32xbf16>, vector<32x64xbf16>, vector<64x64xf32> -> vector<64x64xf32>
    %c0_45 = arith.constant 0 : index
    %c0_46 = arith.constant 0 : index
    %157 = vector.load %arg8[%c0_45, %c0_46] : memref<1x64xf32, #tpu.memory_space<vmem>>, vector<1x64xf32>
    %158 = vector.broadcast %157 : vector<1x64xf32> to vector<64x64xf32>
    %159 = arith.addf %156, %158 : vector<64x64xf32>
    %cst_47 = arith.constant 0.000000e+00 : f32
    %160 = vector.broadcast %cst_47 : f32 to vector<64x64xf32>
    %161 = arith.maximumf %159, %160 : vector<64x64xf32>
    %162 = arith.truncf %161 : vector<64x64xf32> to vector<64x64xbf16>
    %c0_48 = arith.constant 0 : index
    %c0_49 = arith.constant 0 : index
    %163 = vector.load %arg7[%c0_48, %c0_49] : memref<64x32xbf16, #tpu.memory_space<vmem>>, vector<64x32xbf16>
    %cst_50 = arith.constant dense<0.000000e+00> : vector<64x32xf32>
    %164 = tpu.matmul %162, %163, %cst_50 {dimension_numbers = #tpu.dot_dimension_numbers<[1], [0], [0], [1], [0, 0, 1, 1], [], []>} : vector<64x64xbf16>, vector<64x32xbf16>, vector<64x32xf32> -> vector<64x32xf32>
    %165 = vector.broadcast %7 : vector<1x32xf32> to vector<64x32xf32>
    %166 = arith.addf %164, %165 : vector<64x32xf32>
    %167 = arith.addf %153, %166 : vector<64x32xf32>
    %cst_51 = arith.constant dense<0.000000e+00> : vector<64xf32>
    %168 = vector.multi_reduction <add>, %167, %cst_51 [1] : vector<64x32xf32> to vector<64xf32>
    %169 = vector.shape_cast %168 : vector<64xf32> to vector<64x1xf32>
    %cst_52 = arith.constant 3.200000e+01 : f32
    %170 = vector.broadcast %cst_52 : f32 to vector<64x1xf32>
    %171 = arith.divf %169, %170 : vector<64x1xf32>
    %172 = vector.broadcast %171 : vector<64x1xf32> to vector<64x32xf32>
    %173 = arith.subf %167, %172 : vector<64x32xf32>
    %174 = arith.mulf %173, %173 : vector<64x32xf32>
    %cst_53 = arith.constant dense<0.000000e+00> : vector<64xf32>
    %175 = vector.multi_reduction <add>, %174, %cst_53 [1] : vector<64x32xf32> to vector<64xf32>
    %176 = vector.shape_cast %175 : vector<64xf32> to vector<64x1xf32>
    %cst_54 = arith.constant 3.200000e+01 : f32
    %177 = vector.broadcast %cst_54 : f32 to vector<64x1xf32>
    %178 = arith.divf %176, %177 : vector<64x1xf32>
    %179 = vector.broadcast %171 : vector<64x1xf32> to vector<64x32xf32>
    %180 = arith.subf %167, %179 : vector<64x32xf32>
    %cst_55 = arith.constant 9.99999974E-6 : f32
    %181 = vector.broadcast %cst_55 : f32 to vector<64x1xf32>
    %182 = arith.addf %178, %181 : vector<64x1xf32>
    %183 = math.rsqrt %182 : vector<64x1xf32>
    %184 = vector.broadcast %183 : vector<64x1xf32> to vector<64x32xf32>
    %185 = arith.mulf %180, %184 : vector<64x32xf32>
    %186 = vector.broadcast %10 : vector<1x32xf32> to vector<64x32xf32>
    %187 = arith.mulf %185, %186 : vector<64x32xf32>
    %188 = vector.broadcast %11 : vector<1x32xf32> to vector<64x32xf32>
    %189 = arith.addf %187, %188 : vector<64x32xf32>
    %c0_56 = arith.constant 0 : index
    %c0_57 = arith.constant 0 : index
    %190 = vector.load %arg10[%c0_56, %c0_57] : memref<64x32xf32, #tpu.memory_space<vmem>>, vector<64x32xf32>
    tpu.vector_store %arg10[%c0_56, %c0_57], %189 {strides = array<i32>} : memref<64x32xf32, #tpu.memory_space<vmem>>, vector<64x32xf32>,
    return
  }
  func.func @transform_0(%arg0: i32) -> (i32, i32) {
    %c0_i32 = arith.constant 0 : i32
    %c0_i32_0 = arith.constant 0 : i32
    return %arg0, %c0_i32 : i32, i32
  }
  func.func @transform_1(%arg0: i32) -> (i32, i32) {
    %c0_i32 = arith.constant 0 : i32
    %c0_i32_0 = arith.constant 0 : i32
    return %arg0, %c0_i32 : i32, i32
  }
  func.func @transform_2(%arg0: i32) -> (i32, i32) {
    %c0_i32 = arith.constant 0 : i32
    %c0_i32_0 = arith.constant 0 : i32
    %c0_i32_1 = arith.constant 0 : i32
    return %c0_i32, %c0_i32_0 : i32, i32
  }
  func.func @transform_3(%arg0: i32) -> (i32, i32) {
    %c0_i32 = arith.constant 0 : i32
    %c0_i32_0 = arith.constant 0 : i32
    %c0_i32_1 = arith.constant 0 : i32
    return %c0_i32, %c0_i32_0 : i32, i32
  }
  func.func @transform_4(%arg0: i32) -> (i32, i32) {
    %c0_i32 = arith.constant 0 : i32
    %c0_i32_0 = arith.constant 0 : i32
    %c0_i32_1 = arith.constant 0 : i32
    return %c0_i32, %c0_i32_0 : i32, i32
  }
  func.func @transform_5(%arg0: i32) -> (i32, i32) {
    %c0_i32 = arith.constant 0 : i32
    %c0_i32_0 = arith.constant 0 : i32
    %c0_i32_1 = arith.constant 0 : i32
    return %c0_i32, %c0_i32_0 : i32, i32
  }
  func.func @transform_6(%arg0: i32) -> (i32, i32) {
    %c0_i32 = arith.constant 0 : i32
    %c0_i32_0 = arith.constant 0 : i32
    %c0_i32_1 = arith.constant 0 : i32
    return %c0_i32, %c0_i32_0 : i32, i32
  }
  func.func @transform_7(%arg0: i32) -> (i32, i32) {
    %c0_i32 = arith.constant 0 : i32
    %c0_i32_0 = arith.constant 0 : i32
    %c0_i32_1 = arith.constant 0 : i32
    return %c0_i32, %c0_i32_0 : i32, i32
  }
  func.func @transform_8(%arg0: i32) -> (i32, i32) {
    %c0_i32 = arith.constant 0 : i32
    %c0_i32_0 = arith.constant 0 : i32
    %c0_i32_1 = arith.constant 0 : i32
    return %c0_i32, %c0_i32_0 : i32, i32
  }
  func.func @transform_9(%arg0: i32) -> (i32, i32) {
    %c0_i32 = arith.constant 0 : i32
    %c0_i32_0 = arith.constant 0 : i32
    return %arg0, %c0_i32 : i32, i32
  }
}

</mosaic_0001>

<llo_original>
// kernel: tpu_custom_call.1
$region0: #{tpu_custom_call.1}
  #allocation0 [shape = 'u32[]', space=smem, size = 0x4, offset = 0x4, fixed_abs, tag = 'smem constant byte address 0x4 - core index']
  #allocation1 [shape = 'u32[144,128]{1,0:T(1,128)}', space=vmem, size = 0x12000, scoped, tag = 'internal scratch']
  %s0 = inlined_call_operand.vmem [shape: f32[256,32], index: 0, kind: input, shape index: {}]
  %s1 = inlined_call_operand.vmem [shape: f32[256,32], index: 1, kind: input, shape index: {}]
  %s2 = inlined_call_operand.vmem [shape: bf16[32,64], index: 2, kind: input, shape index: {}]
  %s3 = inlined_call_operand.vmem [shape: bf16[32,32], index: 3, kind: input, shape index: {}]
  %s4 = inlined_call_operand.vmem [shape: bf16[32,32], index: 4, kind: input, shape index: {}]
  %s5 = inlined_call_operand.vmem [shape: bf16[32,64], index: 5, kind: input, shape index: {}]
  %s6 = inlined_call_operand.vmem [shape: bf16[64,32], index: 6, kind: input, shape index: {}]
  %s7 = inlined_call_operand.vmem [shape: f32[1,64], index: 7, kind: input, shape index: {}]
  %s8 = inlined_call_operand.vmem [shape: f32[16,32], index: 8, kind: input, shape index: {}]
  %s9 = inlined_call_operand.vmem [shape: f32[256,32], index: 9, kind: output, shape index: {}]
  %s10 = sld [smem:[#allocation0]]
  $region69: #{tpu_custom_call.1} parent=0
    _
  %s12 = ssub.s32 1, %s10
  %s13 = scalar_select 0, %s12, %s10
  loop: start=0, step=1, limit=6
  $region2: #{tpu_custom_call.1} parent=0 // loop_pre_header
    _
  $region3: #{tpu_custom_call.1} parent=0 // loop_header
    %s15 = sphi 0, %s19
    %p16 = scmp.ge.s32.totalorder %s15, 6
    %s25 = sphi 0, %s27
    %s28 = sphi 0, %s25
    %s29 = sphi 0, %s28
    %s45 = sphi 0, %s29
    %s51 = sphi 0, %s53
    %s54 = sphi 0, %s51
    %s55 = sphi 0, %s54
    %s71 = sphi 0, %s55
    %s75 = sphi 0, %s75
    %s77 = sphi 0, %s75
    %s78 = sphi 0, %s77
    %s92 = sphi 0, %s78
    %s96 = sphi 0, %s96
    %s98 = sphi 0, %s96
    %s99 = sphi 0, %s98
    %s113 = sphi 0, %s99
    %s117 = sphi 0, %s117
    %s119 = sphi 0, %s117
    %s120 = sphi 0, %s119
    %s134 = sphi 0, %s120
    %s138 = sphi 0, %s138
    %s140 = sphi 0, %s138
    %s141 = sphi 0, %s140
    %s155 = sphi 0, %s141
    %s159 = sphi 0, %s159
    %s161 = sphi 0, %s159
    %s162 = sphi 0, %s161
    %s176 = sphi 0, %s162
    %s180 = sphi 0, %s180
    %s182 = sphi 0, %s180
    %s183 = sphi 0, %s182
    %s197 = sphi 0, %s183
    %s201 = sphi 0, %s201
    %s203 = sphi 0, %s201
    %s204 = sphi 0, %s203
    %s218 = sphi 0, %s204
    %s224 = sphi 0, %s226
    %s227 = sphi 0, %s224
    %s228 = sphi 0, %s227
    %s244 = sphi 0, %s228
  $region4: #{tpu_custom_call.1} parent=0 // loop_header_branch
    %18 = sbr.rel (%p16) target = $region8
  $region5: #{tpu_custom_call.1} parent=0 // loop_body
    %s20 = ssub.s32 %s15, 1
    %s21 = ssub.s32 %s15, 2
    %s22 = sadd.s32 %s15, 1
    %s23 = ssub.s32 %s15, %s22
    %p24 = scmp.eq.s32.totalorder %s23, 0
    %s26 = sadd.s32 %s25, 1
    %s27 = scalar_select %p24, %s25, %s26
    %p30 = pneg %p24
    %p31 = scmp.eq.s32.totalorder %s15, 3
    %p32 = por %p30, %p31
    %p33 = scmp.ne.s32.totalorder %s25, %s28
    %p34 = scmp.eq.s32.totalorder %s15, 0
    %p35 = por %p33, %p34
    %p36 = scmp.ne.s32.totalorder %s25, %s28
    %p37 = scmp.eq.s32.totalorder %s20, 3
    %p38 = por %p36, %p37
    %p39 = scmp.ne.s32.totalorder %s28, %s29
    %p40 = scmp.eq.s32.totalorder %s20, 0
    %p41 = por %p39, %p40
    %p42 = scmp.ne.s32.totalorder %s28, %s29
    %p43 = scmp.eq.s32.totalorder %s21, 3
    %p44 = por %p42, %p43
    %p46 = scmp.ne.s32.totalorder %s29, %s45
    %p47 = scmp.eq.s32.totalorder %s21, 0
    %p48 = por %p46, %p47
    %s49 = ssub.s32 %s15, %s22
    %p50 = scmp.eq.s32.totalorder %s49, 0
    %s52 = sadd.s32 %s51, 1
    %s53 = scalar_select %p50, %s51, %s52
    %p56 = pneg %p50
    %p57 = scmp.eq.s32.totalorder %s15, 3
    %p58 = por %p56, %p57
    %p59 = scmp.ne.s32.totalorder %s51, %s54
    %p60 = scmp.eq.s32.totalorder %s15, 0
    %p61 = por %p59, %p60
    %p62 = scmp.ne.s32.totalorder %s51, %s54
    %p63 = scmp.eq.s32.totalorder %s20, 3
    %p64 = por %p62, %p63
    %p65 = scmp.ne.s32.totalorder %s54, %s55
    %p66 = scmp.eq.s32.totalorder %s20, 0
    %p67 = por %p65, %p66
    %p68 = scmp.ne.s32.totalorder %s54, %s55
    %p69 = scmp.eq.s32.totalorder %s21, 3
    %p70 = por %p68, %p69
    %p72 = scmp.ne.s32.totalorder %s55, %s71
    %p73 = scmp.eq.s32.totalorder %s21, 0
    %p74 = por %p72, %p73
    %s76 = sadd.s32 %s75, 1
    %p79 = scmp.eq.s32.totalorder %s15, 3
    %p80 = scmp.ne.s32.totalorder %s75, %s77
    %p81 = scmp.eq.s32.totalorder %s15, 0
    %p82 = por %p80, %p81
    %p83 = scmp.ne.s32.totalorder %s75, %s77
    %p84 = scmp.eq.s32.totalorder %s20, 3
    %p85 = por %p83, %p84
    %p86 = scmp.ne.s32.totalorder %s77, %s78
    %p87 = scmp.eq.s32.totalorder %s20, 0
    %p88 = por %p86, %p87
    %p89 = scmp.ne.s32.totalorder %s77, %s78
    %p90 = scmp.eq.s32.totalorder %s21, 3
    %p91 = por %p89, %p90
    %p93 = scmp.ne.s32.totalorder %s78, %s92
    %p94 = scmp.eq.s32.totalorder %s21, 0
    %p95 = por %p93, %p94
    %s97 = sadd.s32 %s96, 1
    %p100 = scmp.eq.s32.totalorder %s15, 3
    %p101 = scmp.ne.s32.totalorder %s96, %s98
    %p102 = scmp.eq.s32.totalorder %s15, 0
    %p103 = por %p101, %p102
    %p104 = scmp.ne.s32.totalorder %s96, %s98
    %p105 = scmp.eq.s32.totalorder %s20, 3
    %p106 = por %p104, %p105
    %p107 = scmp.ne.s32.totalorder %s98, %s99
    %p108 = scmp.eq.s32.totalorder %s20, 0
    %p109 = por %p107, %p108
    %p110 = scmp.ne.s32.totalorder %s98, %s99
    %p111 = scmp.eq.s32.totalorder %s21, 3
    %p112 = por %p110, %p111
    %p114 = scmp.ne.s32.totalorder %s99, %s113
    %p115 = scmp.eq.s32.totalorder %s21, 0
    %p116 = por %p114, %p115
    %s118 = sadd.s32 %s117, 1
    %p121 = scmp.eq.s32.totalorder %s15, 3
    %p122 = scmp.ne.s32.totalorder %s117, %s119
    %p123 = scmp.eq.s32.totalorder %s15, 0
    %p124 = por %p122, %p123
    %p125 = scmp.ne.s32.totalorder %s117, %s119
    %p126 = scmp.eq.s32.totalorder %s20, 3
    %p127 = por %p125, %p126
    %p128 = scmp.ne.s32.totalorder %s119, %s120
    %p129 = scmp.eq.s32.totalorder %s20, 0
    %p130 = por %p128, %p129
    %p131 = scmp.ne.s32.totalorder %s119, %s120
    %p132 = scmp.eq.s32.totalorder %s21, 3
    %p133 = por %p131, %p132
    %p135 = scmp.ne.s32.totalorder %s120, %s134
    %p136 = scmp.eq.s32.totalorder %s21, 0
    %p137 = por %p135, %p136
    %s139 = sadd.s32 %s138, 1
    %p142 = scmp.eq.s32.totalorder %s15, 3
    %p143 = scmp.ne.s32.totalorder %s138, %s140
    %p144 = scmp.eq.s32.totalorder %s15, 0
    %p145 = por %p143, %p144
    %p146 = scmp.ne.s32.totalorder %s138, %s140
    %p147 = scmp.eq.s32.totalorder %s20, 3
    %p148 = por %p146, %p147
    %p149 = scmp.ne.s32.totalorder %s140, %s141
    %p150 = scmp.eq.s32.totalorder %s20, 0
    %p151 = por %p149, %p150
    %p152 = scmp.ne.s32.totalorder %s140, %s141
    %p153 = scmp.eq.s32.totalorder %s21, 3
    %p154 = por %p152, %p153
    %p156 = scmp.ne.s32.totalorder %s141, %s155
    %p157 = scmp.eq.s32.totalorder %s21, 0
    %p158 = por %p156, %p157
    %s160 = sadd.s32 %s159, 1
    %p163 = scmp.eq.s32.totalorder %s15, 3
    %p164 = scmp.ne.s32.totalorder %s159, %s161
    %p165 = scmp.eq.s32.totalorder %s15, 0
    %p166 = por %p164, %p165
    %p167 = scmp.ne.s32.totalorder %s159, %s161
    %p168 = scmp.eq.s32.totalorder %s20, 3
    %p169 = por %p167, %p168
    %p170 = scmp.ne.s32.totalorder %s161, %s162
    %p171 = scmp.eq.s32.totalorder %s20, 0
    %p172 = por %p170, %p171
    %p173 = scmp.ne.s32.totalorder %s161, %s162
    %p174 = scmp.eq.s32.totalorder %s21, 3
    %p175 = por %p173, %p174
    %p177 = scmp.ne.s32.totalorder %s162, %s176
    %p178 = scmp.eq.s32.totalorder %s21, 0
    %p179 = por %p177, %p178
    %s181 = sadd.s32 %s180, 1
    %p184 = scmp.eq.s32.totalorder %s15, 3
    %p185 = scmp.ne.s32.totalorder %s180, %s182
    %p186 = scmp.eq.s32.totalorder %s15, 0
    %p187 = por %p185, %p186
    %p188 = scmp.ne.s32.totalorder %s180, %s182
    %p189 = scmp.eq.s32.totalorder %s20, 3
    %p190 = por %p188, %p189
    %p191 = scmp.ne.s32.totalorder %s182, %s183
    %p192 = scmp.eq.s32.totalorder %s20, 0
    %p193 = por %p191, %p192
    %p194 = scmp.ne.s32.totalorder %s182, %s183
    %p195 = scmp.eq.s32.totalorder %s21, 3
    %p196 = por %p194, %p195
    %p198 = scmp.ne.s32.totalorder %s183, %s197
    %p199 = scmp.eq.s32.totalorder %s21, 0
    %p200 = por %p198, %p199
    %s202 = sadd.s32 %s201, 1
    %p205 = scmp.eq.s32.totalorder %s15, 3
    %p206 = scmp.ne.s32.totalorder %s201, %s203
    %p207 = scmp.eq.s32.totalorder %s15, 0
    %p208 = por %p206, %p207
    %p209 = scmp.ne.s32.totalorder %s201, %s203
    %p210 = scmp.eq.s32.totalorder %s20, 3
    %p211 = por %p209, %p210
    %p212 = scmp.ne.s32.totalorder %s203, %s204
    %p213 = scmp.eq.s32.totalorder %s20, 0
    %p214 = por %p212, %p213
    %p215 = scmp.ne.s32.totalorder %s203, %s204
    %p216 = scmp.eq.s32.totalorder %s21, 3
    %p217 = por %p215, %p216
    %p219 = scmp.ne.s32.totalorder %s204, %s218
    %p220 = scmp.eq.s32.totalorder %s21, 0
    %p221 = por %p219, %p220
    %s222 = ssub.s32 %s15, %s22
    %p223 = scmp.eq.s32.totalorder %s222, 0
    %s225 = sadd.s32 %s224, 1
    %s226 = scalar_select %p223, %s224, %s225
    %p229 = pneg %p223
    %p230 = scmp.eq.s32.totalorder %s15, 3
    %p231 = por %p229, %p230
    %p232 = scmp.ne.s32.totalorder %s224, %s227
    %p233 = scmp.eq.s32.totalorder %s15, 0
    %p234 = por %p232, %p233
    %p235 = scmp.ne.s32.totalorder %s224, %s227
    %p236 = scmp.eq.s32.totalorder %s20, 3
    %p237 = por %p235, %p236
    %p238 = scmp.ne.s32.totalorder %s227, %s228
    %p239 = scmp.eq.s32.totalorder %s20, 0
    %p240 = por %p238, %p239
    %p241 = scmp.ne.s32.totalorder %s227, %s228
    %p242 = scmp.eq.s32.totalorder %s21, 3
    %p243 = por %p241, %p242
    %p245 = scmp.ne.s32.totalorder %s228, %s244
    %p246 = scmp.eq.s32.totalorder %s21, 0
    %p247 = por %p245, %p246
    %p248 = scmp.le.s32.totalorder 1, %s15
    %p249 = scmp.lt.s32.totalorder %s15, 5
    %p250 = pnand %p248, %p249
    %p251 = pneg %p250
    // Predicated region
    $region9: #{tpu_custom_call.1} parent=5 // pred_check
      _
    $region10: #{tpu_custom_call.1} parent=5 // pred_check_branch
      %253 = sbr.rel (%p250) target = $region12
    $region11: #{tpu_custom_call.1} parent=5 // pred_region
      %s254 = ssub.s32 %s15, 1
      // Predicated region
      $region13: #{tpu_custom_call.1} parent=11 // pred_check
        %p255 = pneg %p88
      $region14: #{tpu_custom_call.1} parent=11 // pred_check_branch
        %257 = sbr.rel (%p255) target = $region16
      $region15: #{tpu_custom_call.1} parent=11 // pred_region
        _
      $region16: #{tpu_custom_call.1} parent=11 // pred_fallthru
        _
      // Predicated region
      $region17: #{tpu_custom_call.1} parent=11 // pred_check
        %p258 = pneg %p109
      $region18: #{tpu_custom_call.1} parent=11 // pred_check_branch
        %260 = sbr.rel (%p258) target = $region20
      $region19: #{tpu_custom_call.1} parent=11 // pred_region
        _
      $region20: #{tpu_custom_call.1} parent=11 // pred_fallthru
        _
      // Predicated region
      $region21: #{tpu_custom_call.1} parent=11 // pred_check
        %p261 = pneg %p130
      $region22: #{tpu_custom_call.1} parent=11 // pred_check_branch
        %263 = sbr.rel (%p261) target = $region24
      $region23: #{tpu_custom_call.1} parent=11 // pred_region
        _
      $region24: #{tpu_custom_call.1} parent=11 // pred_fallthru
        _
      // Predicated region
      $region25: #{tpu_custom_call.1} parent=11 // pred_check
        %p264 = pneg %p151
      $region26: #{tpu_custom_call.1} parent=11 // pred_check_branch
        %266 = sbr.rel (%p264) target = $region28
      $region27: #{tpu_custom_call.1} parent=11 // pred_region
        _
      $region28: #{tpu_custom_call.1} parent=11 // pred_fallthru
        _
      // Predicated region
      $region29: #{tpu_custom_call.1} parent=11 // pred_check
        %p267 = pneg %p172
      $region30: #{tpu_custom_call.1} parent=11 // pred_check_branch
        %269 = sbr.rel (%p267) target = $region32
      $region31: #{tpu_custom_call.1} parent=11 // pred_region
        _
      $region32: #{tpu_custom_call.1} parent=11 // pred_fallthru
        _
      // Predicated region
      $region33: #{tpu_custom_call.1} parent=11 // pred_check
        %p270 = pneg %p193
      $region34: #{tpu_custom_call.1} parent=11 // pred_check_branch
        %272 = sbr.rel (%p270) target = $region36
      $region35: #{tpu_custom_call.1} parent=11 // pred_region
        _
      $region36: #{tpu_custom_call.1} parent=11 // pred_fallthru
        _
      // Predicated region
      $region37: #{tpu_custom_call.1} parent=11 // pred_check
        %p273 = pneg %p214
      $region38: #{tpu_custom_call.1} parent=11 // pred_check_branch
        %275 = sbr.rel (%p273) target = $region40
      $region39: #{tpu_custom_call.1} parent=11 // pred_region
        _
      $region40: #{tpu_custom_call.1} parent=11 // pred_fallthru
        _
    $region12: #{tpu_custom_call.1} parent=5 // pred_fallthru
      _
    %p276 = scmp.lt.s32.totalorder %s15, 4
    // Predicated region
    $region41: #{tpu_custom_call.1} parent=5 // pred_check
      %p277 = pneg %p276
    $region42: #{tpu_custom_call.1} parent=5 // pred_check_branch
      %279 = sbr.rel (%p277) target = $region44
    $region43: #{tpu_custom_call.1} parent=5 // pred_region
      // Predicated region
      $region45: #{tpu_custom_call.1} parent=43 // pred_check
        %p280 = pneg %p35
      $region46: #{tpu_custom_call.1} parent=43 // pred_check_branch
        %282 = sbr.rel (%p280) target = $region48
      $region47: #{tpu_custom_call.1} parent=43 // pred_region
        %s283 = smul.u32 8, %s15
        %p284 = scmp.lt.s32.totalorder %s283, 31
        %s285 = scalar_select %p284, %s283, 31
        %s286 = smul.addr %s285, 8
        %s287 = scalar_lea.vmem %s0, %s286
        %s288 = smul.u32 8, %s15
      $region48: #{tpu_custom_call.1} parent=43 // pred_fallthru
        _
      // Predicated region
      $region49: #{tpu_custom_call.1} parent=43 // pred_check
        %p289 = pneg %p61
      $region50: #{tpu_custom_call.1} parent=43 // pred_check_branch
        %291 = sbr.rel (%p289) target = $region52
      $region51: #{tpu_custom_call.1} parent=43 // pred_region
        %s292 = smul.u32 8, %s15
        %p293 = scmp.lt.s32.totalorder %s292, 31
        %s294 = scalar_select %p293, %s292, 31
        %s295 = smul.addr %s294, 8
        %s296 = scalar_lea.vmem %s1, %s295
        %s297 = smul.u32 8, %s15
      $region52: #{tpu_custom_call.1} parent=43 // pred_fallthru
        _
    $region44: #{tpu_custom_call.1} parent=5 // pred_fallthru
      _
    %p298 = scmp.le.s32.totalorder 1, %s15
    %p299 = scmp.lt.s32.totalorder %s15, 5
    %p300 = pnand %p298, %p299
    %p301 = pneg %p300
    // Predicated region
    $region53: #{tpu_custom_call.1} parent=5 // pred_check
      _
    $region54: #{tpu_custom_call.1} parent=5 // pred_check_branch
      %303 = sbr.rel (%p300) target = $region56
    $region55: #{tpu_custom_call.1} parent=5 // pred_region
      %s304 = ssub.s32 %s15, 1
      %s305 = smul.u32 8, %s20
      %p306 = scmp.lt.s32.totalorder %s305, 31
      %s307 = scalar_select %p306, %s305, 31
      %s308 = smul.addr %s307, 8
      %s309 = scalar_lea.vmem %s0, %s308
      %p310 = pneg %p41
      %p311 = pneg %p38
      %s312 = smul.u32 8, %s20
      %p313 = scmp.lt.s32.totalorder %s312, 31
      %s314 = scalar_select %p313, %s312, 31
      %s315 = smul.addr %s314, 8
      %s316 = scalar_lea.vmem %s1, %s315
      %p317 = pneg %p67
      %p318 = pneg %p64
      %p319 = pneg %p88
      %p320 = pneg %p85
      %p321 = pneg %p109
      %p322 = pneg %p106
      %p323 = pneg %p130
      %p324 = pneg %p127
      %p325 = pneg %p151
      %p326 = pneg %p148
      %p327 = pneg %p172
      %p328 = pneg %p169
      %p329 = pneg %p193
      %p330 = pneg %p190
      %p331 = pneg %p214
      %p332 = pneg %p211
      %p333 = pneg %p240
      %p334 = pneg %p237
      %s335 = smul.u32 8, %s20
      %p336 = scmp.lt.s32.totalorder %s335, 31
      %s337 = scalar_select %p336, %s335, 31
      %s338 = smul.addr %s337, 8
      %s339 = scalar_lea.vmem %s9, %s338
      %s340 = smul.u32 8, %s20
      %p341 = scmp.lt.s32.totalorder %s340, 31
      %s342 = scalar_select %p341, %s340, 31
      %s343 = smul.addr %s342, 8
      %s344 = scalar_lea.vmem %s0, %s343
      %s345 = smul.u32 8, %s20
      %s346 = smul.u32 8, %s20
      %p347 = scmp.lt.s32.totalorder %s346, 31
      %s348 = scalar_select %p347, %s346, 31
      %s349 = smul.addr %s348, 8
      %s350 = scalar_lea.vmem %s1, %s349
      %s351 = smul.u32 8, %s20
      %s352 = smul.u32 8, %s20
      %p353 = scmp.lt.s32.totalorder %s352, 31
      %s354 = scalar_select %p353, %s352, 31
      %s355 = smul.addr %s354, 8
      %s356 = scalar_lea.vmem %s9, %s355
      %s357 = smul.u32 8, %s20
      %v359 = vld [vmem:[%s344] sm:$0xff]
      %v360 = vld [vmem:[%s344 + $0x8] sm:$0xff]
      %v361 = vld [vmem:[%s344 + $0x10] sm:$0xff]
      %v362 = vld [vmem:[%s344 + $0x18] sm:$0xff]
      %v363 = vld [vmem:[%s344 + $0x20] sm:$0xff]
      %v364 = vld [vmem:[%s344 + $0x28] sm:$0xff]
      %v365 = vld [vmem:[%s344 + $0x30] sm:$0xff]
      %v366 = vld [vmem:[%s344 + $0x38] sm:$0xff]
      %v367 = vld [vmem:[%s350] sm:$0xff]
      %v368 = vld [vmem:[%s350 + $0x8] sm:$0xff]
      %v369 = vld [vmem:[%s350 + $0x10] sm:$0xff]
      %v370 = vld [vmem:[%s350 + $0x18] sm:$0xff]
      %v371 = vld [vmem:[%s350 + $0x20] sm:$0xff]
      %v372 = vld [vmem:[%s350 + $0x28] sm:$0xff]
      %v373 = vld [vmem:[%s350 + $0x30] sm:$0xff]
      %v374 = vld [vmem:[%s350 + $0x38] sm:$0xff]
      %v375 = vld [vmem:[%s8] sm:$0xff]
      %v376 = vld [vmem:[%s8 + $0x8] sm:$0xff]
      %v377 = vadd.f32 %v359, %v367
      %v378 = vadd.f32 %v360, %v368
      %v379 = vadd.f32 %v361, %v369
      %v380 = vadd.f32 %v362, %v370
      %v381 = vadd.f32 %v363, %v371
      %v382 = vadd.f32 %v364, %v372
      %v383 = vadd.f32 %v365, %v373
      %v384 = vadd.f32 %v366, %v374
      %v385 = vpack.c.bf16 %v378, %v377
      %v386 = vpack.c.bf16 %v380, %v379
      %v387 = vpack.c.bf16 %v382, %v381
      %v388 = vpack.c.bf16 %v384, %v383
      %v389 = vpack.c.bf16 %v360, %v359
      %v390 = vpack.c.bf16 %v362, %v361
      %v391 = vpack.c.bf16 %v364, %v363
      %v392 = vpack.c.bf16 %v366, %v365
      %v393 = vld [vmem:[%s2] sm:$0xf]
      %v394 = vld [vmem:[%s2 + $0x4] sm:$0xf]
      %v395 = vld [vmem:[%s2 + $0x8] sm:$0xf]
      %v396 = vld [vmem:[%s2 + $0xc] sm:$0xf]
      %v401 = vunpack.c.l.b16 %v393
      %v402 = vunpack.c.l.b16 %v394
      %v403 = vunpack.c.l.b16 %v395
      %v404 = vunpack.c.l.b16 %v396
      %v405 = vpack.c.b16 %v402, %v401
      %v406 = vpack.c.b16 %v404, %v403
      %vm409 = vcmask 261120
      %v411 = vsel %vm409, %v385, 0
      %v414 = vsel %vm409, %v386, 0
      %v417 = vsel %vm409, %v387, 0
      %v420 = vsel %vm409, %v388, 0
      %422 = vmatprep.subr.bf16.mxu0 0
      %423 = vmatpush1.bf16.msra.mxu0 %v405
      %424 = vmatprep.subr.bf16.mxu0 0
      %425 = vmatpush1.bf16.msra.mxu0 %v406
      %426 = vmatprep.subr.bf16.mxu0 0
      %427 = vmatpush1.bf16.msra.mxu0 0
      %428 = vmatprep.subr.bf16.mxu0 0
      %429 = vmatpush1.bf16.msra.mxu0 0
      %430 = vmatprep.subr.bf16.mxu0 0
      %431 = vmatpush1.bf16.msra.mxu0 0
      %432 = vmatprep.subr.bf16.mxu0 0
      %433 = vmatpush1.bf16.msra.mxu0 0
      %434 = vmatprep.subr.bf16.mxu0 0
      %435 = vmatpush1.bf16.msra.mxu0 0
      %436 = vmatprep.subr.bf16.mxu0 0
      %437 = vmatpush1.bf16.msra.mxu0 0
      %438 = vmatprep.subr.bf16.mxu0 0
      %439 = vmatpush1.bf16.msra.mxu0 0
      %440 = vmatprep.subr.bf16.mxu0 0
      %441 = vmatpush1.bf16.msra.mxu0 0
      %442 = vmatprep.subr.bf16.mxu0 0
      %443 = vmatpush1.bf16.msra.mxu0 0
      %444 = vmatprep.subr.bf16.mxu0 0
      %445 = vmatpush1.bf16.msra.mxu0 0
      %446 = vmatprep.subr.bf16.mxu0 0
      %447 = vmatpush1.bf16.msra.mxu0 0
      %448 = vmatprep.subr.bf16.mxu0 0
      %449 = vmatpush1.bf16.msra.mxu0 0
      %450 = vmatprep.subr.bf16.mxu0 0
      %451 = vmatpush1.bf16.msra.mxu0 0
      %452 = vmatprep.subr.bf16.mxu0 0
      %453 = vmatpush1.bf16.msra.mxu0 0
      %454 = vmatprep.mubr.bf16.mxu0 0
      %455 = vmatmul.mubr.bf16.gmra.mrb[0].mxu0 %v411
      %v456 = vpop.f32.mrb[0].mxu0
      %v457 = vadd.f32 0.0, %v456
      %v458 = vpop.f32.mrb[0].mxu0
      %v459 = vpop.f32.mrb[0].mxu0
      %v460 = vadd.f32 0.0, %v459
      %v461 = vpop.f32.mrb[0].mxu0
      %462 = vmatprep.mubr.bf16.mxu0 0
      %463 = vmatmul.mubr.bf16.gmra.mrb[0].mxu0 %v414
      %v464 = vpop.f32.mrb[0].mxu0
      %v465 = vadd.f32 0.0, %v464
      %v466 = vpop.f32.mrb[0].mxu0
      %v467 = vpop.f32.mrb[0].mxu0
      %v468 = vadd.f32 0.0, %v467
      %v469 = vpop.f32.mrb[0].mxu0
      %470 = vmatprep.mubr.bf16.mxu0 0
      %471 = vmatmul.mubr.bf16.gmra.mrb[0].mxu0 %v417
      %v472 = vpop.f32.mrb[0].mxu0
      %v473 = vadd.f32 0.0, %v472
      %v474 = vpop.f32.mrb[0].mxu0
      %v475 = vpop.f32.mrb[0].mxu0
      %v476 = vadd.f32 0.0, %v475
      %v477 = vpop.f32.mrb[0].mxu0
      %478 = vmatprep.mubr.bf16.mxu0 0
      %479 = vmatmul.mubr.bf16.gmra.mrb[0].mxu0 %v420
      %v480 = vpop.f32.mrb[0].mxu0
      %v481 = vadd.f32 0.0, %v480
      %v482 = vpop.f32.mrb[0].mxu0
      %v483 = vpop.f32.mrb[0].mxu0
      %v484 = vadd.f32 0.0, %v483
      %v485 = vpop.f32.mrb[0].mxu0
      %486 = vdwg.mxu0
      %v487 = vlaneseq
      %v488 = vshrl.u32 %v487, 7
      %v489 = vsub.s32 0, %v488
      %v490 = vrot.slane %v375, %v489
      %v491 = vadd.f32 %v457, %v490
      %v492 = vadd.f32 %v460, %v490
      %v493 = vadd.f32 %v465, %v490
      %v494 = vadd.f32 %v468, %v490
      %v495 = vadd.f32 %v473, %v490
      %v496 = vadd.f32 %v476, %v490
      %v497 = vadd.f32 %v481, %v490
      %v498 = vadd.f32 %v484, %v490
      %v499 = vmul.f32 %v491, 0.35355338
      %v500 = vmul.f32 %v492, 0.35355338
      %v501 = vmul.f32 %v493, 0.35355338
      %v502 = vmul.f32 %v494, 0.35355338
      %v503 = vmul.f32 %v495, 0.35355338
      %v504 = vmul.f32 %v496, 0.35355338
      %v505 = vmul.f32 %v497, 0.35355338
      %v506 = vmul.f32 %v498, 0.35355338
      %v507 = vlaneseq
      %v508 = vshrl.u32 %v507, 7
      %v509 = vsub.s32 1, %v508
      %v510 = vrot.slane %v375, %v509
      %512 = vrot.lane.b32.xlu0 %v510, 32
      %v513 = vpop.permute.xlu0 %512
      %v515 = vadd.f32 %v457, %v513
      %v516 = vadd.f32 %v460, %v513
      %v517 = vadd.f32 %v465, %v513
      %v518 = vadd.f32 %v468, %v513
      %v519 = vadd.f32 %v473, %v513
      %v520 = vadd.f32 %v476, %v513
      %v521 = vadd.f32 %v481, %v513
      %v522 = vadd.f32 %v484, %v513
      %v523 = vld [vmem:[%s3] sm:$0xf]
      %v524 = vld [vmem:[%s3 + $0x4] sm:$0xf]
      %v525 = vld [vmem:[%s3 + $0x8] sm:$0xf]
      %v526 = vld [vmem:[%s3 + $0xc] sm:$0xf]
      %v527 = vlaneseq
      %v528 = vshrl.u32 %v527, 7
      %v529 = vsub.s32 2, %v528
      %v530 = vrot.slane %v375, %v529
      %v535 = vunpack.c.l.b16 %v523
      %v536 = vunpack.c.l.b16 %v524
      %v537 = vunpack.c.l.b16 %v525
      %v538 = vunpack.c.l.b16 %v526
      %v539 = vpack.c.b16 %v536, %v535
      %v540 = vpack.c.b16 %v538, %v537
      %v544 = vsel %vm409, %v389, 0
      %v547 = vsel %vm409, %v390, 0
      %v550 = vsel %vm409, %v391, 0
      %v553 = vsel %vm409, %v392, 0
      %555 = vmatprep.subr.bf16.mxu0 0
      %556 = vmatpush1.bf16.msra.mxu0 %v539
      %557 = vmatprep.subr.bf16.mxu0 0
      %558 = vmatpush1.bf16.msra.mxu0 %v540
      %559 = vmatprep.subr.bf16.mxu0 0
      %560 = vmatpush1.bf16.msra.mxu0 0
      %561 = vmatprep.subr.bf16.mxu0 0
      %562 = vmatpush1.bf16.msra.mxu0 0
      %563 = vmatprep.subr.bf16.mxu0 0
      %564 = vmatpush1.bf16.msra.mxu0 0
      %565 = vmatprep.subr.bf16.mxu0 0
      %566 = vmatpush1.bf16.msra.mxu0 0
      %567 = vmatprep.subr.bf16.mxu0 0
      %568 = vmatpush1.bf16.msra.mxu0 0
      %569 = vmatprep.subr.bf16.mxu0 0
      %570 = vmatpush1.bf16.msra.mxu0 0
      %571 = vmatprep.subr.bf16.mxu0 0
      %572 = vmatpush1.bf16.msra.mxu0 0
      %573 = vmatprep.subr.bf16.mxu0 0
      %574 = vmatpush1.bf16.msra.mxu0 0
      %575 = vmatprep.subr.bf16.mxu0 0
      %576 = vmatpush1.bf16.msra.mxu0 0
      %577 = vmatprep.subr.bf16.mxu0 0
      %578 = vmatpush1.bf16.msra.mxu0 0
      %579 = vmatprep.subr.bf16.mxu0 0
      %580 = vmatpush1.bf16.msra.mxu0 0
      %581 = vmatprep.subr.bf16.mxu0 0
      %582 = vmatpush1.bf16.msra.mxu0 0
      %583 = vmatprep.subr.bf16.mxu0 0
      %584 = vmatpush1.bf16.msra.mxu0 0
      %585 = vmatprep.subr.bf16.mxu0 0
      %586 = vmatpush1.bf16.msra.mxu0 0
      %587 = vmatprep.mubr.bf16.mxu0 0
      %588 = vmatmul.mubr.bf16.gmra.mrb[0].mxu0 %v544
      %v589 = vpop.f32.mrb[0].mxu0
      %v590 = vadd.f32 %v530, %v589
      %v591 = vpop.f32.mrb[0].mxu0
      %v592 = vpop.f32.mrb[0].mxu0
      %v593 = vadd.f32 %v530, %v592
      %v594 = vpop.f32.mrb[0].mxu0
      %595 = vmatprep.mubr.bf16.mxu0 0
      %596 = vmatmul.mubr.bf16.gmra.mrb[0].mxu0 %v547
      %v597 = vpop.f32.mrb[0].mxu0
      %v598 = vadd.f32 %v530, %v597
      %v599 = vpop.f32.mrb[0].mxu0
      %v600 = vpop.f32.mrb[0].mxu0
      %v601 = vadd.f32 %v530, %v600
      %v602 = vpop.f32.mrb[0].mxu0
      %603 = vmatprep.mubr.bf16.mxu0 0
      %604 = vmatmul.mubr.bf16.gmra.mrb[0].mxu0 %v550
      %v605 = vpop.f32.mrb[0].mxu0
      %v606 = vadd.f32 %v530, %v605
      %v607 = vpop.f32.mrb[0].mxu0
      %v608 = vpop.f32.mrb[0].mxu0
      %v609 = vadd.f32 %v530, %v608
      %v610 = vpop.f32.mrb[0].mxu0
      %611 = vmatprep.mubr.bf16.mxu0 0
      %612 = vmatmul.mubr.bf16.gmra.mrb[0].mxu0 %v553
      %v613 = vpop.f32.mrb[0].mxu0
      %v614 = vadd.f32 %v530, %v613
      %v615 = vpop.f32.mrb[0].mxu0
      %v616 = vpop.f32.mrb[0].mxu0
      %v617 = vadd.f32 %v530, %v616
      %v618 = vpop.f32.mrb[0].mxu0
      %619 = vdwg.mxu0
      %v620 = vpack.c.bf16 %v500, %v499
      %v621 = vpack.c.bf16 %v502, %v501
      %v622 = vpack.c.bf16 %v504, %v503
      %v623 = vpack.c.bf16 %v506, %v505
      %v624 = vpack.c.bf16 %v516, %v515
      %v625 = vpack.c.bf16 %v518, %v517
      %v626 = vpack.c.bf16 %v520, %v519
      %v627 = vpack.c.bf16 %v522, %v521
      %v628 = vpack.c.bf16 %v593, %v590
      %v629 = vpack.c.bf16 %v601, %v598
      %v630 = vpack.c.bf16 %v609, %v606
      %v631 = vpack.c.bf16 %v617, %v614
      %v636 = vunpack.c.l.b16 %v620
      %v637 = vunpack.c.h.b16 %v620
      %v638 = vunpack.c.l.b16 %v621
      %v639 = vunpack.c.h.b16 %v621
      %v640 = vunpack.c.l.b16 %v622
      %v641 = vunpack.c.h.b16 %v622
      %v642 = vunpack.c.l.b16 %v623
      %v643 = vunpack.c.h.b16 %v623
      %v644 = vpack.c.b16 %v636, %v636
      %v645 = vpack.c.b16 %v637, %v637
      %v646 = vpack.c.b16 %v638, %v638
      %v647 = vpack.c.b16 %v639, %v639
      %v648 = vpack.c.b16 %v640, %v640
      %v649 = vpack.c.b16 %v641, %v641
      %v650 = vpack.c.b16 %v642, %v642
      %v651 = vpack.c.b16 %v643, %v643
      %v656 = vunpack.c.l.b16 %v624
      %v657 = vunpack.c.h.b16 %v624
      %v658 = vunpack.c.l.b16 %v625
      %v659 = vunpack.c.h.b16 %v625
      %v660 = vunpack.c.l.b16 %v626
      %v661 = vunpack.c.h.b16 %v626
      %v662 = vunpack.c.l.b16 %v627
      %v663 = vunpack.c.h.b16 %v627
      %v668 = vunpack.c.l.b16 %v628
      %v669 = vunpack.c.h.b16 %v628
      %v670 = vunpack.c.l.b16 %v629
      %v671 = vunpack.c.h.b16 %v629
      %v672 = vunpack.c.l.b16 %v630
      %v673 = vunpack.c.h.b16 %v630
      %v674 = vunpack.c.l.b16 %v631
      %v675 = vunpack.c.h.b16 %v631
      %v676 = vpack.c.b16 %v668, %v668
      %v677 = vpack.c.b16 %v669, %v669
      %v678 = vpack.c.b16 %v670, %v670
      %v679 = vpack.c.b16 %v671, %v671
      %v680 = vpack.c.b16 %v672, %v672
      %v681 = vpack.c.b16 %v673, %v673
      %v682 = vpack.c.b16 %v674, %v674
      %v683 = vpack.c.b16 %v675, %v675
      %v684 = vpack.c.b16 %v656, %v656
      %685 = vrot.lane.b32.xlu0 %v684, 96
      %v686 = vpop.permute.xlu0 %685
      %vm687 = vcmask 64512
      %v689 = vsel %vm687, %v644, 0
      %v692 = vsel %vm687, %v686, 0
      %694 = vmatprep.subr.bf16.mxu0 0
      %695 = vmatpush1.bf16.xpose.msra.mxu0 %v692
      %696 = vmatprep.subr.bf16.mxu0 0
      %697 = vmatpush1.bf16.xpose.msra.mxu0 0
      %698 = vmatprep.subr.bf16.mxu0 0
      %699 = vmatpush1.bf16.xpose.msra.mxu0 0
      %700 = vmatprep.subr.bf16.mxu0 0
      %701 = vmatpush1.bf16.xpose.msra.mxu0 0
      %702 = vmatprep.subr.bf16.mxu0 0
      %703 = vmatpush1.bf16.xpose.msra.mxu0 0
      %704 = vmatprep.subr.bf16.mxu0 0
      %705 = vmatpush1.bf16.xpose.msra.mxu0 0
      %706 = vmatprep.subr.bf16.mxu0 0
      %707 = vmatpush1.bf16.xpose.msra.mxu0 0
      %708 = vmatprep.subr.bf16.mxu0 0
      %709 = vmatpush1.bf16.xpose.msra.mxu0 0
      %710 = vmatprep.subr.bf16.mxu0 0
      %711 = vmatpush1.bf16.xpose.msra.mxu0 0
      %712 = vmatprep.subr.bf16.mxu0 0
      %713 = vmatpush1.bf16.xpose.msra.mxu0 0
      %714 = vmatprep.subr.bf16.mxu0 0
      %715 = vmatpush1.bf16.xpose.msra.mxu0 0
      %716 = vmatprep.subr.bf16.mxu0 0
      %717 = vmatpush1.bf16.xpose.msra.mxu0 0
      %718 = vmatprep.subr.bf16.mxu0 0
      %719 = vmatpush1.bf16.xpose.msra.mxu0 0
      %720 = vmatprep.subr.bf16.mxu0 0
      %721 = vmatpush1.bf16.xpose.msra.mxu0 0
      %722 = vmatprep.subr.bf16.mxu0 0
      %723 = vmatpush1.bf16.xpose.msra.mxu0 0
      %724 = vmatprep.subr.bf16.mxu0 0
      %725 = vmatpush1.bf16.xpose.msra.mxu0 0
      %726 = vmatprep.mubr.bf16.mxu0 0
      %727 = vmatmul.mubr.bf16.gmra.mrb[0].mxu0 %v689
      %v728 = vpop.f32.mrb[0].mxu0
      %v729 = vadd.f32 0.0, %v728
      %v730 = vpop.f32.mrb[0].mxu0
      %v731 = vpop.f32.mrb[0].mxu0
      %v732 = vpop.f32.mrb[0].mxu0
      %733 = vdwg.mxu0
      %v734 = vpack.c.b16 %v657, %v657
      %735 = vrot.lane.b32.xlu0 %v734, 96
      %v736 = vpop.permute.xlu0 %735
      %v738 = vsel %vm687, %v645, 0
      %v741 = vsel %vm687, %v736, 0
      %743 = vmatprep.subr.bf16.mxu0 0
      %744 = vmatpush1.bf16.xpose.msra.mxu0 %v741
      %745 = vmatprep.subr.bf16.mxu0 0
      %746 = vmatpush1.bf16.xpose.msra.mxu0 0
      %747 = vmatprep.subr.bf16.mxu0 0
      %748 = vmatpush1.bf16.xpose.msra.mxu0 0
      %749 = vmatprep.subr.bf16.mxu0 0
      %750 = vmatpush1.bf16.xpose.msra.mxu0 0
      %751 = vmatprep.subr.bf16.mxu0 0
      %752 = vmatpush1.bf16.xpose.msra.mxu0 0
      %753 = vmatprep.subr.bf16.mxu0 0
      %754 = vmatpush1.bf16.xpose.msra.mxu0 0
      %755 = vmatprep.subr.bf16.mxu0 0
      %756 = vmatpush1.bf16.xpose.msra.mxu0 0
      %757 = vmatprep.subr.bf16.mxu0 0
      %758 = vmatpush1.bf16.xpose.msra.mxu0 0
      %759 = vmatprep.subr.bf16.mxu0 0
      %760 = vmatpush1.bf16.xpose.msra.mxu0 0
      %761 = vmatprep.subr.bf16.mxu0 0
      %762 = vmatpush1.bf16.xpose.msra.mxu0 0
      %763 = vmatprep.subr.bf16.mxu0 0
      %764 = vmatpush1.bf16.xpose.msra.mxu0 0
      %765 = vmatprep.subr.bf16.mxu0 0
      %766 = vmatpush1.bf16.xpose.msra.mxu0 0
      %767 = vmatprep.subr.bf16.mxu0 0
      %768 = vmatpush1.bf16.xpose.msra.mxu0 0
      %769 = vmatprep.subr.bf16.mxu0 0
      %770 = vmatpush1.bf16.xpose.msra.mxu0 0
      %771 = vmatprep.subr.bf16.mxu0 0
      %772 = vmatpush1.bf16.xpose.msra.mxu0 0
      %773 = vmatprep.subr.bf16.mxu0 0
      %774 = vmatpush1.bf16.xpose.msra.mxu0 0
      %775 = vmatprep.mubr.bf16.mxu0 0
      %776 = vmatmul.mubr.bf16.gmra.mrb[0].mxu0 %v738
      %v777 = vpop.f32.mrb[0].mxu0
      %v778 = vadd.f32 0.0, %v777
      %v779 = vpop.f32.mrb[0].mxu0
      %v780 = vpop.f32.mrb[0].mxu0
      %v781 = vpop.f32.mrb[0].mxu0
      %782 = vdwg.mxu0
      %v783 = vpack.c.b16 %v658, %v658
      %784 = vrot.lane.b32.xlu0 %v783, 96
      %v785 = vpop.permute.xlu0 %784
      %v787 = vsel %vm687, %v646, 0
      %v790 = vsel %vm687, %v785, 0
      %792 = vmatprep.subr.bf16.mxu0 0
      %793 = vmatpush1.bf16.xpose.msra.mxu0 %v790
      %794 = vmatprep.subr.bf16.mxu0 0
      %795 = vmatpush1.bf16.xpose.msra.mxu0 0
      %796 = vmatprep.subr.bf16.mxu0 0
      %797 = vmatpush1.bf16.xpose.msra.mxu0 0
      %798 = vmatprep.subr.bf16.mxu0 0
      %799 = vmatpush1.bf16.xpose.msra.mxu0 0
      %800 = vmatprep.subr.bf16.mxu0 0
      %801 = vmatpush1.bf16.xpose.msra.mxu0 0
      %802 = vmatprep.subr.bf16.mxu0 0
      %803 = vmatpush1.bf16.xpose.msra.mxu0 0
      %804 = vmatprep.subr.bf16.mxu0 0
      %805 = vmatpush1.bf16.xpose.msra.mxu0 0
      %806 = vmatprep.subr.bf16.mxu0 0
      %807 = vmatpush1.bf16.xpose.msra.mxu0 0
      %808 = vmatprep.subr.bf16.mxu0 0
      %809 = vmatpush1.bf16.xpose.msra.mxu0 0
      %810 = vmatprep.subr.bf16.mxu0 0
      %811 = vmatpush1.bf16.xpose.msra.mxu0 0
      %812 = vmatprep.subr.bf16.mxu0 0
      %813 = vmatpush1.bf16.xpose.msra.mxu0 0
      %814 = vmatprep.subr.bf16.mxu0 0
      %815 = vmatpush1.bf16.xpose.msra.mxu0 0
      %816 = vmatprep.subr.bf16.mxu0 0
      %817 = vmatpush1.bf16.xpose.msra.mxu0 0
      %818 = vmatprep.subr.bf16.mxu0 0
      %819 = vmatpush1.bf16.xpose.msra.mxu0 0
      %820 = vmatprep.subr.bf16.mxu0 0
      %821 = vmatpush1.bf16.xpose.msra.mxu0 0
      %822 = vmatprep.subr.bf16.mxu0 0
      %823 = vmatpush1.bf16.xpose.msra.mxu0 0
      %824 = vmatprep.mubr.bf16.mxu0 0
      %825 = vmatmul.mubr.bf16.gmra.mrb[0].mxu0 %v787
      %v826 = vpop.f32.mrb[0].mxu0
      %v827 = vadd.f32 0.0, %v826
      %v828 = vpop.f32.mrb[0].mxu0
      %v829 = vpop.f32.mrb[0].mxu0
      %v830 = vpop.f32.mrb[0].mxu0
      %831 = vdwg.mxu0
      %v832 = vpack.c.b16 %v659, %v659
      %833 = vrot.lane.b32.xlu0 %v832, 96
      %v834 = vpop.permute.xlu0 %833
      %v836 = vsel %vm687, %v647, 0
      %v839 = vsel %vm687, %v834, 0
      %841 = vmatprep.subr.bf16.mxu0 0
      %842 = vmatpush1.bf16.xpose.msra.mxu0 %v839
      %843 = vmatprep.subr.bf16.mxu0 0
      %844 = vmatpush1.bf16.xpose.msra.mxu0 0
      %845 = vmatprep.subr.bf16.mxu0 0
      %846 = vmatpush1.bf16.xpose.msra.mxu0 0
      %847 = vmatprep.subr.bf16.mxu0 0
      %848 = vmatpush1.bf16.xpose.msra.mxu0 0
      %849 = vmatprep.subr.bf16.mxu0 0
      %850 = vmatpush1.bf16.xpose.msra.mxu0 0
      %851 = vmatprep.subr.bf16.mxu0 0
      %852 = vmatpush1.bf16.xpose.msra.mxu0 0
      %853 = vmatprep.subr.bf16.mxu0 0
      %854 = vmatpush1.bf16.xpose.msra.mxu0 0
      %855 = vmatprep.subr.bf16.mxu0 0
      %856 = vmatpush1.bf16.xpose.msra.mxu0 0
      %857 = vmatprep.subr.bf16.mxu0 0
      %858 = vmatpush1.bf16.xpose.msra.mxu0 0
      %859 = vmatprep.subr.bf16.mxu0 0
      %860 = vmatpush1.bf16.xpose.msra.mxu0 0
      %861 = vmatprep.subr.bf16.mxu0 0
      %862 = vmatpush1.bf16.xpose.msra.mxu0 0
      %863 = vmatprep.subr.bf16.mxu0 0
      %864 = vmatpush1.bf16.xpose.msra.mxu0 0
      %865 = vmatprep.subr.bf16.mxu0 0
      %866 = vmatpush1.bf16.xpose.msra.mxu0 0
      %867 = vmatprep.subr.bf16.mxu0 0
      %868 = vmatpush1.bf16.xpose.msra.mxu0 0
      %869 = vmatprep.subr.bf16.mxu0 0
      %870 = vmatpush1.bf16.xpose.msra.mxu0 0
      %871 = vmatprep.subr.bf16.mxu0 0
      %872 = vmatpush1.bf16.xpose.msra.mxu0 0
      %873 = vmatprep.mubr.bf16.mxu0 0
      %874 = vmatmul.mubr.bf16.gmra.mrb[0].mxu0 %v836
      %v875 = vpop.f32.mrb[0].mxu0
      %v876 = vadd.f32 0.0, %v875
      %v877 = vpop.f32.mrb[0].mxu0
      %v878 = vpop.f32.mrb[0].mxu0
      %v879 = vpop.f32.mrb[0].mxu0
      %880 = vdwg.mxu0
      %v881 = vpack.c.b16 %v660, %v660
      %882 = vrot.lane.b32.xlu0 %v881, 96
      %v883 = vpop.permute.xlu0 %882
      %v885 = vsel %vm687, %v648, 0
      %v888 = vsel %vm687, %v883, 0
      %890 = vmatprep.subr.bf16.mxu0 0
      %891 = vmatpush1.bf16.xpose.msra.mxu0 %v888
      %892 = vmatprep.subr.bf16.mxu0 0
      %893 = vmatpush1.bf16.xpose.msra.mxu0 0
      %894 = vmatprep.subr.bf16.mxu0 0
      %895 = vmatpush1.bf16.xpose.msra.mxu0 0
      %896 = vmatprep.subr.bf16.mxu0 0
      %897 = vmatpush1.bf16.xpose.msra.mxu0 0
      %898 = vmatprep.subr.bf16.mxu0 0
      %899 = vmatpush1.bf16.xpose.msra.mxu0 0
      %900 = vmatprep.subr.bf16.mxu0 0
      %901 = vmatpush1.bf16.xpose.msra.mxu0 0
      %902 = vmatprep.subr.bf16.mxu0 0
      %903 = vmatpush1.bf16.xpose.msra.mxu0 0
      %904 = vmatprep.subr.bf16.mxu0 0
      %905 = vmatpush1.bf16.xpose.msra.mxu0 0
      %906 = vmatprep.subr.bf16.mxu0 0
      %907 = vmatpush1.bf16.xpose.msra.mxu0 0
      %908 = vmatprep.subr.bf16.mxu0 0
      %909 = vmatpush1.bf16.xpose.msra.mxu0 0
      %910 = vmatprep.subr.bf16.mxu0 0
      %911 = vmatpush1.bf16.xpose.msra.mxu0 0
      %912 = vmatprep.subr.bf16.mxu0 0
      %913 = vmatpush1.bf16.xpose.msra.mxu0 0
      %914 = vmatprep.subr.bf16.mxu0 0
      %915 = vmatpush1.bf16.xpose.msra.mxu0 0
      %916 = vmatprep.subr.bf16.mxu0 0
      %917 = vmatpush1.bf16.xpose.msra.mxu0 0
      %918 = vmatprep.subr.bf16.mxu0 0
      %919 = vmatpush1.bf16.xpose.msra.mxu0 0
      %920 = vmatprep.subr.bf16.mxu0 0
      %921 = vmatpush1.bf16.xpose.msra.mxu0 0
      %922 = vmatprep.mubr.bf16.mxu0 0
      %923 = vmatmul.mubr.bf16.gmra.mrb[0].mxu0 %v885
      %v924 = vpop.f32.mrb[0].mxu0
      %v925 = vadd.f32 0.0, %v924
      %v926 = vpop.f32.mrb[0].mxu0
      %v927 = vpop.f32.mrb[0].mxu0
      %v928 = vpop.f32.mrb[0].mxu0
      %929 = vdwg.mxu0
      %v930 = vpack.c.b16 %v661, %v661
      %931 = vrot.lane.b32.xlu0 %v930, 96
      %v932 = vpop.permute.xlu0 %931
      %v934 = vsel %vm687, %v649, 0
      %v937 = vsel %vm687, %v932, 0
      %939 = vmatprep.subr.bf16.mxu0 0
      %940 = vmatpush1.bf16.xpose.msra.mxu0 %v937
      %941 = vmatprep.subr.bf16.mxu0 0
      %942 = vmatpush1.bf16.xpose.msra.mxu0 0
      %943 = vmatprep.subr.bf16.mxu0 0
      %944 = vmatpush1.bf16.xpose.msra.mxu0 0
      %945 = vmatprep.subr.bf16.mxu0 0
      %946 = vmatpush1.bf16.xpose.msra.mxu0 0
      %947 = vmatprep.subr.bf16.mxu0 0
      %948 = vmatpush1.bf16.xpose.msra.mxu0 0
      %949 = vmatprep.subr.bf16.mxu0 0
      %950 = vmatpush1.bf16.xpose.msra.mxu0 0
      %951 = vmatprep.subr.bf16.mxu0 0
      %952 = vmatpush1.bf16.xpose.msra.mxu0 0
      %953 = vmatprep.subr.bf16.mxu0 0
      %954 = vmatpush1.bf16.xpose.msra.mxu0 0
      %955 = vmatprep.subr.bf16.mxu0 0
      %956 = vmatpush1.bf16.xpose.msra.mxu0 0
      %957 = vmatprep.subr.bf16.mxu0 0
      %958 = vmatpush1.bf16.xpose.msra.mxu0 0
      %959 = vmatprep.subr.bf16.mxu0 0
      %960 = vmatpush1.bf16.xpose.msra.mxu0 0
      %961 = vmatprep.subr.bf16.mxu0 0
      %962 = vmatpush1.bf16.xpose.msra.mxu0 0
      %963 = vmatprep.subr.bf16.mxu0 0
      %964 = vmatpush1.bf16.xpose.msra.mxu0 0
      %965 = vmatprep.subr.bf16.mxu0 0
      %966 = vmatpush1.bf16.xpose.msra.mxu0 0
      %967 = vmatprep.subr.bf16.mxu0 0
      %968 = vmatpush1.bf16.xpose.msra.mxu0 0
      %969 = vmatprep.subr.bf16.mxu0 0
      %970 = vmatpush1.bf16.xpose.msra.mxu0 0
      %971 = vmatprep.mubr.bf16.mxu0 0
      %972 = vmatmul.mubr.bf16.gmra.mrb[0].mxu0 %v934
      %v973 = vpop.f32.mrb[0].mxu0
      %v974 = vadd.f32 0.0, %v973
      %v975 = vpop.f32.mrb[0].mxu0
      %v976 = vpop.f32.mrb[0].mxu0
      %v977 = vpop.f32.mrb[0].mxu0
      %978 = vdwg.mxu0
      %v979 = vpack.c.b16 %v662, %v662
      %980 = vrot.lane.b32.xlu0 %v979, 96
      %v981 = vpop.permute.xlu0 %980
      %v983 = vsel %vm687, %v650, 0
      %v986 = vsel %vm687, %v981, 0
      %988 = vmatprep.subr.bf16.mxu0 0
      %989 = vmatpush1.bf16.xpose.msra.mxu0 %v986
      %990 = vmatprep.subr.bf16.mxu0 0
      %991 = vmatpush1.bf16.xpose.msra.mxu0 0
      %992 = vmatprep.subr.bf16.mxu0 0
      %993 = vmatpush1.bf16.xpose.msra.mxu0 0
      %994 = vmatprep.subr.bf16.mxu0 0
      %995 = vmatpush1.bf16.xpose.msra.mxu0 0
      %996 = vmatprep.subr.bf16.mxu0 0
      %997 = vmatpush1.bf16.xpose.msra.mxu0 0
      %998 = vmatprep.subr.bf16.mxu0 0
      %999 = vmatpush1.bf16.xpose.msra.mxu0 0
      %1000 = vmatprep.subr.bf16.mxu0 0
      %1001 = vmatpush1.bf16.xpose.msra.mxu0 0
      %1002 = vmatprep.subr.bf16.mxu0 0
      %1003 = vmatpush1.bf16.xpose.msra.mxu0 0
      %1004 = vmatprep.subr.bf16.mxu0 0
      %1005 = vmatpush1.bf16.xpose.msra.mxu0 0
      %1006 = vmatprep.subr.bf16.mxu0 0
      %1007 = vmatpush1.bf16.xpose.msra.mxu0 0
      %1008 = vmatprep.subr.bf16.mxu0 0
      %1009 = vmatpush1.bf16.xpose.msra.mxu0 0
      %1010 = vmatprep.subr.bf16.mxu0 0
      %1011 = vmatpush1.bf16.xpose.msra.mxu0 0
      %1012 = vmatprep.subr.bf16.mxu0 0
      %1013 = vmatpush1.bf16.xpose.msra.mxu0 0
      %1014 = vmatprep.subr.bf16.mxu0 0
      %1015 = vmatpush1.bf16.xpose.msra.mxu0 0
      %1016 = vmatprep.subr.bf16.mxu0 0
      %1017 = vmatpush1.bf16.xpose.msra.mxu0 0
      %1018 = vmatprep.subr.bf16.mxu0 0
      %1019 = vmatpush1.bf16.xpose.msra.mxu0 0
      %1020 = vmatprep.mubr.bf16.mxu0 0
      %1021 = vmatmul.mubr.bf16.gmra.mrb[0].mxu0 %v983
      %v1022 = vpop.f32.mrb[0].mxu0
      %v1023 = vadd.f32 0.0, %v1022
      %v1024 = vpop.f32.mrb[0].mxu0
      %v1025 = vpop.f32.mrb[0].mxu0
      %v1026 = vpop.f32.mrb[0].mxu0
      %1027 = vdwg.mxu0
      %v1028 = vpack.c.b16 %v663, %v663
      %1029 = vrot.lane.b32.xlu0 %v1028, 96
      %v1030 = vpop.permute.xlu0 %1029
      %v1032 = vsel %vm687, %v651, 0
      %v1035 = vsel %vm687, %v1030, 0
      %1037 = vmatprep.subr.bf16.mxu0 0
      %1038 = vmatpush1.bf16.xpose.msra.mxu0 %v1035
      %1039 = vmatprep.subr.bf16.mxu0 0
      %1040 = vmatpush1.bf16.xpose.msra.mxu0 0
      %1041 = vmatprep.subr.bf16.mxu0 0
      %1042 = vmatpush1.bf16.xpose.msra.mxu0 0
      %1043 = vmatprep.subr.bf16.mxu0 0
      %1044 = vmatpush1.bf16.xpose.msra.mxu0 0
      %1045 = vmatprep.subr.bf16.mxu0 0
      %1046 = vmatpush1.bf16.xpose.msra.mxu0 0
      %1047 = vmatprep.subr.bf16.mxu0 0
      %1048 = vmatpush1.bf16.xpose.msra.mxu0 0
      %1049 = vmatprep.subr.bf16.mxu0 0
      %1050 = vmatpush1.bf16.xpose.msra.mxu0 0
      %1051 = vmatprep.subr.bf16.mxu0 0
      %1052 = vmatpush1.bf16.xpose.msra.mxu0 0
      %1053 = vmatprep.subr.bf16.mxu0 0
      %1054 = vmatpush1.bf16.xpose.msra.mxu0 0
      %1055 = vmatprep.subr.bf16.mxu0 0
      %1056 = vmatpush1.bf16.xpose.msra.mxu0 0
      %1057 = vmatprep.subr.bf16.mxu0 0
      %1058 = vmatpush1.bf16.xpose.msra.mxu0 0
      %1059 = vmatprep.subr.bf16.mxu0 0
      %1060 = vmatpush1.bf16.xpose.msra.mxu0 0
      %1061 = vmatprep.subr.bf16.mxu0 0
      %1062 = vmatpush1.bf16.xpose.msra.mxu0 0
      %1063 = vmatprep.subr.bf16.mxu0 0
      %1064 = vmatpush1.bf16.xpose.msra.mxu0 0
      %1065 = vmatprep.subr.bf16.mxu0 0
      %1066 = vmatpush1.bf16.xpose.msra.mxu0 0
      %1067 = vmatprep.subr.bf16.mxu0 0
      %1068 = vmatpush1.bf16.xpose.msra.mxu0 0
      %1069 = vmatprep.mubr.bf16.mxu0 0
      %1070 = vmatmul.mubr.bf16.gmra.mrb[0].mxu0 %v1032
      %v1071 = vpop.f32.mrb[0].mxu0
      %v1072 = vadd.f32 0.0, %v1071
      %v1073 = vpop.f32.mrb[0].mxu0
      %v1074 = vpop.f32.mrb[0].mxu0
      %v1075 = vpop.f32.mrb[0].mxu0
      %1076 = vdwg.mxu0
      %v1077 = vsel %vm687, %v729, -inf
      %1078 = vmax.xlane.f32.xlu0 %v1077
      %v1079 = vpop.xlane.xlu0 %1078
      %v1080 = vsel %vm687, %v778, -inf
      %1081 = vmax.xlane.f32.xlu0 %v1080
      %v1082 = vpop.xlane.xlu0 %1081
      %v1083 = vsel %vm687, %v827, -inf
      %1084 = vmax.xlane.f32.xlu0 %v1083
      %v1085 = vpop.xlane.xlu0 %1084
      %v1086 = vsel %vm687, %v876, -inf
      %1087 = vmax.xlane.f32.xlu0 %v1086
      %v1088 = vpop.xlane.xlu0 %1087
      %v1089 = vsel %vm687, %v925, -inf
      %1090 = vmax.xlane.f32.xlu0 %v1089
      %v1091 = vpop.xlane.xlu0 %1090
      %v1092 = vsel %vm687, %v974, -inf
      %1093 = vmax.xlane.f32.xlu0 %v1092
      %v1094 = vpop.xlane.xlu0 %1093
      %v1095 = vsel %vm687, %v1023, -inf
      %1096 = vmax.xlane.f32.xlu0 %v1095
      %v1097 = vpop.xlane.xlu0 %1096
      %v1098 = vsel %vm687, %v1072, -inf
      %1099 = vmax.xlane.f32.xlu0 %v1098
      %v1100 = vpop.xlane.xlu0 %1099
      %v1101 = vsub.f32 %v729, %v1079
      %v1102 = vsub.f32 %v778, %v1082
      %v1103 = vsub.f32 %v827, %v1085
      %v1104 = vsub.f32 %v876, %v1088
      %v1105 = vsub.f32 %v925, %v1091
      %v1106 = vsub.f32 %v974, %v1094
      %v1107 = vsub.f32 %v1023, %v1097
      %v1108 = vsub.f32 %v1072, %v1100
      %v1109 = vmul.f32 %v1101, 1.442695
      %v1110 = vpow.pop %v1109
      %v1111 = vmul.f32 %v1102, 1.442695
      %v1112 = vpow.pop %v1111
      %v1113 = vmul.f32 %v1103, 1.442695
      %v1114 = vpow.pop %v1113
      %v1115 = vmul.f32 %v1104, 1.442695
      %v1116 = vpow.pop %v1115
      %v1117 = vmul.f32 %v1105, 1.442695
      %v1118 = vpow.pop %v1117
      %v1119 = vmul.f32 %v1106, 1.442695
      %v1120 = vpow.pop %v1119
      %v1121 = vmul.f32 %v1107, 1.442695
      %v1122 = vpow.pop %v1121
      %v1123 = vmul.f32 %v1108, 1.442695
      %v1124 = vpow.pop %v1123
      %v1125 = vsel %vm687, %v1110, 0.0
      %1126 = vadd.xlane.f32.xlu0 %v1125
      %v1127 = vpop.xlane.xlu0 %1126
      %v1128 = vsel %vm687, %v1112, 0.0
      %1129 = vadd.xlane.f32.xlu0 %v1128
      %v1130 = vpop.xlane.xlu0 %1129
      %v1131 = vsel %vm687, %v1114, 0.0
      %1132 = vadd.xlane.f32.xlu0 %v1131
      %v1133 = vpop.xlane.xlu0 %1132
      %v1134 = vsel %vm687, %v1116, 0.0
      %1135 = vadd.xlane.f32.xlu0 %v1134
      %v1136 = vpop.xlane.xlu0 %1135
      %v1137 = vsel %vm687, %v1118, 0.0
      %1138 = vadd.xlane.f32.xlu0 %v1137
      %v1139 = vpop.xlane.xlu0 %1138
      %v1140 = vsel %vm687, %v1120, 0.0
      %1141 = vadd.xlane.f32.xlu0 %v1140
      %v1142 = vpop.xlane.xlu0 %1141
      %v1143 = vsel %vm687, %v1122, 0.0
      %1144 = vadd.xlane.f32.xlu0 %v1143
      %v1145 = vpop.xlane.xlu0 %1144
      %v1146 = vsel %vm687, %v1124, 0.0
      %1147 = vadd.xlane.f32.xlu0 %v1146
      %v1148 = vpop.xlane.xlu0 %1147
      %v1149 = vrcp.pop %v1127
      %v1150 = vrcp.pop %v1130
      %v1151 = vrcp.pop %v1133
      %v1152 = vrcp.pop %v1136
      %v1153 = vrcp.pop %v1139
      %v1154 = vrcp.pop %v1142
      %v1155 = vrcp.pop %v1145
      %v1156 = vrcp.pop %v1148
      %v1157 = vmul.f32 %v1110, %v1149
      %v1158 = vmul.f32 %v1112, %v1150
      %v1159 = vmul.f32 %v1114, %v1151
      %v1160 = vmul.f32 %v1116, %v1152
      %v1161 = vmul.f32 %v1118, %v1153
      %v1162 = vmul.f32 %v1120, %v1154
      %v1163 = vmul.f32 %v1122, %v1155
      %v1164 = vmul.f32 %v1124, %v1156
      %v1165 = vpack.c.bf16 %v1157, %v1157
      %v1166 = vpack.c.bf16 %v1158, %v1158
      %v1167 = vpack.c.bf16 %v1159, %v1159
      %v1168 = vpack.c.bf16 %v1160, %v1160
      %v1169 = vpack.c.bf16 %v1161, %v1161
      %v1170 = vpack.c.bf16 %v1162, %v1162
      %v1171 = vpack.c.bf16 %v1163, %v1163
      %v1172 = vpack.c.bf16 %v1164, %v1164
      %v1174 = vsel %vm687, %v1165, 0
      %vm1176 = vcmask 1043456
      %v1178 = vsel %vm1176, %v676, 0
      %1180 = vmatprep.subr.bf16.mxu0 0
      %1181 = vmatpush1.bf16.msra.mxu0 %v1178
      %1182 = vmatprep.subr.bf16.mxu0 0
      %1183 = vmatpush1.bf16.msra.mxu0 0
      %1184 = vmatprep.subr.bf16.mxu0 0
      %1185 = vmatpush1.bf16.msra.mxu0 0
      %1186 = vmatprep.subr.bf16.mxu0 0
      %1187 = vmatpush1.bf16.msra.mxu0 0
      %1188 = vmatprep.subr.bf16.mxu0 0
      %1189 = vmatpush1.bf16.msra.mxu0 0
      %1190 = vmatprep.subr.bf16.mxu0 0
      %1191 = vmatpush1.bf16.msra.mxu0 0
      %1192 = vmatprep.subr.bf16.mxu0 0
      %1193 = vmatpush1.bf16.msra.mxu0 0
      %1194 = vmatprep.subr.bf16.mxu0 0
      %1195 = vmatpush1.bf16.msra.mxu0 0
      %1196 = vmatprep.subr.bf16.mxu0 0
      %1197 = vmatpush1.bf16.msra.mxu0 0
      %1198 = vmatprep.subr.bf16.mxu0 0
      %1199 = vmatpush1.bf16.msra.mxu0 0
      %1200 = vmatprep.subr.bf16.mxu0 0
      %1201 = vmatpush1.bf16.msra.mxu0 0
      %1202 = vmatprep.subr.bf16.mxu0 0
      %1203 = vmatpush1.bf16.msra.mxu0 0
      %1204 = vmatprep.subr.bf16.mxu0 0
      %1205 = vmatpush1.bf16.msra.mxu0 0
      %1206 = vmatprep.subr.bf16.mxu0 0
      %1207 = vmatpush1.bf16.msra.mxu0 0
      %1208 = vmatprep.subr.bf16.mxu0 0
      %1209 = vmatpush1.bf16.msra.mxu0 0
      %1210 = vmatprep.subr.bf16.mxu0 0
      %1211 = vmatpush1.bf16.msra.mxu0 0
      %1212 = vmatprep.mubr.bf16.mxu0 0
      %1213 = vmatmul.mubr.bf16.gmra.mrb[0].mxu0 %v1174
      %v1214 = vpop.f32.mrb[0].mxu0
      %v1215 = vadd.f32 0.0, %v1214
      %v1216 = vpop.f32.mrb[0].mxu0
      %v1217 = vpop.f32.mrb[0].mxu0
      %v1218 = vpop.f32.mrb[0].mxu0
      %1219 = vdwg.mxu0
      %v1221 = vsel %vm687, %v1166, 0
      %v1224 = vsel %vm1176, %v677, 0
      %1226 = vmatprep.subr.bf16.mxu0 0
      %1227 = vmatpush1.bf16.msra.mxu0 %v1224
      %1228 = vmatprep.subr.bf16.mxu0 0
      %1229 = vmatpush1.bf16.msra.mxu0 0
      %1230 = vmatprep.subr.bf16.mxu0 0
      %1231 = vmatpush1.bf16.msra.mxu0 0
      %1232 = vmatprep.subr.bf16.mxu0 0
      %1233 = vmatpush1.bf16.msra.mxu0 0
      %1234 = vmatprep.subr.bf16.mxu0 0
      %1235 = vmatpush1.bf16.msra.mxu0 0
      %1236 = vmatprep.subr.bf16.mxu0 0
      %1237 = vmatpush1.bf16.msra.mxu0 0
      %1238 = vmatprep.subr.bf16.mxu0 0
      %1239 = vmatpush1.bf16.msra.mxu0 0
      %1240 = vmatprep.subr.bf16.mxu0 0
      %1241 = vmatpush1.bf16.msra.mxu0 0
      %1242 = vmatprep.subr.bf16.mxu0 0
      %1243 = vmatpush1.bf16.msra.mxu0 0
      %1244 = vmatprep.subr.bf16.mxu0 0
      %1245 = vmatpush1.bf16.msra.mxu0 0
      %1246 = vmatprep.subr.bf16.mxu0 0
      %1247 = vmatpush1.bf16.msra.mxu0 0
      %1248 = vmatprep.subr.bf16.mxu0 0
      %1249 = vmatpush1.bf16.msra.mxu0 0
      %1250 = vmatprep.subr.bf16.mxu0 0
      %1251 = vmatpush1.bf16.msra.mxu0 0
      %1252 = vmatprep.subr.bf16.mxu0 0
      %1253 = vmatpush1.bf16.msra.mxu0 0
      %1254 = vmatprep.subr.bf16.mxu0 0
      %1255 = vmatpush1.bf16.msra.mxu0 0
      %1256 = vmatprep.subr.bf16.mxu0 0
      %1257 = vmatpush1.bf16.msra.mxu0 0
      %1258 = vmatprep.mubr.bf16.mxu0 0
      %1259 = vmatmul.mubr.bf16.gmra.mrb[0].mxu0 %v1221
      %v1260 = vpop.f32.mrb[0].mxu0
      %v1261 = vadd.f32 0.0, %v1260
      %v1262 = vpop.f32.mrb[0].mxu0
      %v1263 = vpop.f32.mrb[0].mxu0
      %v1264 = vpop.f32.mrb[0].mxu0
      %1265 = vdwg.mxu0
      %v1267 = vsel %vm687, %v1167, 0
      %v1270 = vsel %vm1176, %v678, 0
      %1272 = vmatprep.subr.bf16.mxu0 0
      %1273 = vmatpush1.bf16.msra.mxu0 %v1270
      %1274 = vmatprep.subr.bf16.mxu0 0
      %1275 = vmatpush1.bf16.msra.mxu0 0
      %1276 = vmatprep.subr.bf16.mxu0 0
      %1277 = vmatpush1.bf16.msra.mxu0 0
      %1278 = vmatprep.subr.bf16.mxu0 0
      %1279 = vmatpush1.bf16.msra.mxu0 0
      %1280 = vmatprep.subr.bf16.mxu0 0
      %1281 = vmatpush1.bf16.msra.mxu0 0
      %1282 = vmatprep.subr.bf16.mxu0 0
      %1283 = vmatpush1.bf16.msra.mxu0 0
      %1284 = vmatprep.subr.bf16.mxu0 0
      %1285 = vmatpush1.bf16.msra.mxu0 0
      %1286 = vmatprep.subr.bf16.mxu0 0
      %1287 = vmatpush1.bf16.msra.mxu0 0
      %1288 = vmatprep.subr.bf16.mxu0 0
      %1289 = vmatpush1.bf16.msra.mxu0 0
      %1290 = vmatprep.subr.bf16.mxu0 0
      %1291 = vmatpush1.bf16.msra.mxu0 0
      %1292 = vmatprep.subr.bf16.mxu0 0
      %1293 = vmatpush1.bf16.msra.mxu0 0
      %1294 = vmatprep.subr.bf16.mxu0 0
      %1295 = vmatpush1.bf16.msra.mxu0 0
      %1296 = vmatprep.subr.bf16.mxu0 0
      %1297 = vmatpush1.bf16.msra.mxu0 0
      %1298 = vmatprep.subr.bf16.mxu0 0
      %1299 = vmatpush1.bf16.msra.mxu0 0
      %1300 = vmatprep.subr.bf16.mxu0 0
      %1301 = vmatpush1.bf16.msra.mxu0 0
      %1302 = vmatprep.subr.bf16.mxu0 0
      %1303 = vmatpush1.bf16.msra.mxu0 0
      %1304 = vmatprep.mubr.bf16.mxu0 0
      %1305 = vmatmul.mubr.bf16.gmra.mrb[0].mxu0 %v1267
      %v1306 = vpop.f32.mrb[0].mxu0
      %v1307 = vadd.f32 0.0, %v1306
      %v1308 = vpop.f32.mrb[0].mxu0
      %v1309 = vpop.f32.mrb[0].mxu0
      %v1310 = vpop.f32.mrb[0].mxu0
      %1311 = vdwg.mxu0
      %v1313 = vsel %vm687, %v1168, 0
      %v1316 = vsel %vm1176, %v679, 0
      %1318 = vmatprep.subr.bf16.mxu0 0
      %1319 = vmatpush1.bf16.msra.mxu0 %v1316
      %1320 = vmatprep.subr.bf16.mxu0 0
      %1321 = vmatpush1.bf16.msra.mxu0 0
      %1322 = vmatprep.subr.bf16.mxu0 0
      %1323 = vmatpush1.bf16.msra.mxu0 0
      %1324 = vmatprep.subr.bf16.mxu0 0
      %1325 = vmatpush1.bf16.msra.mxu0 0
      %1326 = vmatprep.subr.bf16.mxu0 0
      %1327 = vmatpush1.bf16.msra.mxu0 0
      %1328 = vmatprep.subr.bf16.mxu0 0
      %1329 = vmatpush1.bf16.msra.mxu0 0
      %1330 = vmatprep.subr.bf16.mxu0 0
      %1331 = vmatpush1.bf16.msra.mxu0 0
      %1332 = vmatprep.subr.bf16.mxu0 0
      %1333 = vmatpush1.bf16.msra.mxu0 0
      %1334 = vmatprep.subr.bf16.mxu0 0
      %1335 = vmatpush1.bf16.msra.mxu0 0
      %1336 = vmatprep.subr.bf16.mxu0 0
      %1337 = vmatpush1.bf16.msra.mxu0 0
      %1338 = vmatprep.subr.bf16.mxu0 0
      %1339 = vmatpush1.bf16.msra.mxu0 0
      %1340 = vmatprep.subr.bf16.mxu0 0
      %1341 = vmatpush1.bf16.msra.mxu0 0
      %1342 = vmatprep.subr.bf16.mxu0 0
      %1343 = vmatpush1.bf16.msra.mxu0 0
      %1344 = vmatprep.subr.bf16.mxu0 0
      %1345 = vmatpush1.bf16.msra.mxu0 0
      %1346 = vmatprep.subr.bf16.mxu0 0
      %1347 = vmatpush1.bf16.msra.mxu0 0
      %1348 = vmatprep.subr.bf16.mxu0 0
      %1349 = vmatpush1.bf16.msra.mxu0 0
      %1350 = vmatprep.mubr.bf16.mxu0 0
      %1351 = vmatmul.mubr.bf16.gmra.mrb[0].mxu0 %v1313
      %v1352 = vpop.f32.mrb[0].mxu0
      %v1353 = vadd.f32 0.0, %v1352
      %v1354 = vpop.f32.mrb[0].mxu0
      %v1355 = vpop.f32.mrb[0].mxu0
      %v1356 = vpop.f32.mrb[0].mxu0
      %1357 = vdwg.mxu0
      %v1359 = vsel %vm687, %v1169, 0
      %v1362 = vsel %vm1176, %v680, 0
      %1364 = vmatprep.subr.bf16.mxu0 0
      %1365 = vmatpush1.bf16.msra.mxu0 %v1362
      %1366 = vmatprep.subr.bf16.mxu0 0
      %1367 = vmatpush1.bf16.msra.mxu0 0
      %1368 = vmatprep.subr.bf16.mxu0 0
      %1369 = vmatpush1.bf16.msra.mxu0 0
      %1370 = vmatprep.subr.bf16.mxu0 0
      %1371 = vmatpush1.bf16.msra.mxu0 0
      %1372 = vmatprep.subr.bf16.mxu0 0
      %1373 = vmatpush1.bf16.msra.mxu0 0
      %1374 = vmatprep.subr.bf16.mxu0 0
      %1375 = vmatpush1.bf16.msra.mxu0 0
      %1376 = vmatprep.subr.bf16.mxu0 0
      %1377 = vmatpush1.bf16.msra.mxu0 0
      %1378 = vmatprep.subr.bf16.mxu0 0
      %1379 = vmatpush1.bf16.msra.mxu0 0
      %1380 = vmatprep.subr.bf16.mxu0 0
      %1381 = vmatpush1.bf16.msra.mxu0 0
      %1382 = vmatprep.subr.bf16.mxu0 0
      %1383 = vmatpush1.bf16.msra.mxu0 0
      %1384 = vmatprep.subr.bf16.mxu0 0
      %1385 = vmatpush1.bf16.msra.mxu0 0
      %1386 = vmatprep.subr.bf16.mxu0 0
      %1387 = vmatpush1.bf16.msra.mxu0 0
      %1388 = vmatprep.subr.bf16.mxu0 0
      %1389 = vmatpush1.bf16.msra.mxu0 0
      %1390 = vmatprep.subr.bf16.mxu0 0
      %1391 = vmatpush1.bf16.msra.mxu0 0
      %1392 = vmatprep.subr.bf16.mxu0 0
      %1393 = vmatpush1.bf16.msra.mxu0 0
      %1394 = vmatprep.subr.bf16.mxu0 0
      %1395 = vmatpush1.bf16.msra.mxu0 0
      %1396 = vmatprep.mubr.bf16.mxu0 0
      %1397 = vmatmul.mubr.bf16.gmra.mrb[0].mxu0 %v1359
      %v1398 = vpop.f32.mrb[0].mxu0
      %v1399 = vadd.f32 0.0, %v1398
      %v1400 = vpop.f32.mrb[0].mxu0
      %v1401 = vpop.f32.mrb[0].mxu0
      %v1402 = vpop.f32.mrb[0].mxu0
      %1403 = vdwg.mxu0
      %v1405 = vsel %vm687, %v1170, 0
      %v1408 = vsel %vm1176, %v681, 0
      %1410 = vmatprep.subr.bf16.mxu0 0
      %1411 = vmatpush1.bf16.msra.mxu0 %v1408
      %1412 = vmatprep.subr.bf16.mxu0 0
      %1413 = vmatpush1.bf16.msra.mxu0 0
      %1414 = vmatprep.subr.bf16.mxu0 0
      %1415 = vmatpush1.bf16.msra.mxu0 0
      %1416 = vmatprep.subr.bf16.mxu0 0
      %1417 = vmatpush1.bf16.msra.mxu0 0
      %1418 = vmatprep.subr.bf16.mxu0 0
      %1419 = vmatpush1.bf16.msra.mxu0 0
      %1420 = vmatprep.subr.bf16.mxu0 0
      %1421 = vmatpush1.bf16.msra.mxu0 0
      %1422 = vmatprep.subr.bf16.mxu0 0
      %1423 = vmatpush1.bf16.msra.mxu0 0
      %1424 = vmatprep.subr.bf16.mxu0 0
      %1425 = vmatpush1.bf16.msra.mxu0 0
      %1426 = vmatprep.subr.bf16.mxu0 0
      %1427 = vmatpush1.bf16.msra.mxu0 0
      %1428 = vmatprep.subr.bf16.mxu0 0
      %1429 = vmatpush1.bf16.msra.mxu0 0
      %1430 = vmatprep.subr.bf16.mxu0 0
      %1431 = vmatpush1.bf16.msra.mxu0 0
      %1432 = vmatprep.subr.bf16.mxu0 0
      %1433 = vmatpush1.bf16.msra.mxu0 0
      %1434 = vmatprep.subr.bf16.mxu0 0
      %1435 = vmatpush1.bf16.msra.mxu0 0
      %1436 = vmatprep.subr.bf16.mxu0 0
      %1437 = vmatpush1.bf16.msra.mxu0 0
      %1438 = vmatprep.subr.bf16.mxu0 0
      %1439 = vmatpush1.bf16.msra.mxu0 0
      %1440 = vmatprep.subr.bf16.mxu0 0
      %1441 = vmatpush1.bf16.msra.mxu0 0
      %1442 = vmatprep.mubr.bf16.mxu0 0
      %1443 = vmatmul.mubr.bf16.gmra.mrb[0].mxu0 %v1405
      %v1444 = vpop.f32.mrb[0].mxu0
      %v1445 = vadd.f32 0.0, %v1444
      %v1446 = vpop.f32.mrb[0].mxu0
      %v1447 = vpop.f32.mrb[0].mxu0
      %v1448 = vpop.f32.mrb[0].mxu0
      %1449 = vdwg.mxu0
      %v1451 = vsel %vm687, %v1171, 0
      %v1454 = vsel %vm1176, %v682, 0
      %1456 = vmatprep.subr.bf16.mxu0 0
      %1457 = vmatpush1.bf16.msra.mxu0 %v1454
      %1458 = vmatprep.subr.bf16.mxu0 0
      %1459 = vmatpush1.bf16.msra.mxu0 0
      %1460 = vmatprep.subr.bf16.mxu0 0
      %1461 = vmatpush1.bf16.msra.mxu0 0
      %1462 = vmatprep.subr.bf16.mxu0 0
      %1463 = vmatpush1.bf16.msra.mxu0 0
      %1464 = vmatprep.subr.bf16.mxu0 0
      %1465 = vmatpush1.bf16.msra.mxu0 0
      %1466 = vmatprep.subr.bf16.mxu0 0
      %1467 = vmatpush1.bf16.msra.mxu0 0
      %1468 = vmatprep.subr.bf16.mxu0 0
      %1469 = vmatpush1.bf16.msra.mxu0 0
      %1470 = vmatprep.subr.bf16.mxu0 0
      %1471 = vmatpush1.bf16.msra.mxu0 0
      %1472 = vmatprep.subr.bf16.mxu0 0
      %1473 = vmatpush1.bf16.msra.mxu0 0
      %1474 = vmatprep.subr.bf16.mxu0 0
      %1475 = vmatpush1.bf16.msra.mxu0 0
      %1476 = vmatprep.subr.bf16.mxu0 0
      %1477 = vmatpush1.bf16.msra.mxu0 0
      %1478 = vmatprep.subr.bf16.mxu0 0
      %1479 = vmatpush1.bf16.msra.mxu0 0
      %1480 = vmatprep.subr.bf16.mxu0 0
      %1481 = vmatpush1.bf16.msra.mxu0 0
      %1482 = vmatprep.subr.bf16.mxu0 0
      %1483 = vmatpush1.bf16.msra.mxu0 0
      %1484 = vmatprep.subr.bf16.mxu0 0
      %1485 = vmatpush1.bf16.msra.mxu0 0
      %1486 = vmatprep.subr.bf16.mxu0 0
      %1487 = vmatpush1.bf16.msra.mxu0 0
      %1488 = vmatprep.mubr.bf16.mxu0 0
      %1489 = vmatmul.mubr.bf16.gmra.mrb[0].mxu0 %v1451
      %v1490 = vpop.f32.mrb[0].mxu0
      %v1491 = vadd.f32 0.0, %v1490
      %v1492 = vpop.f32.mrb[0].mxu0
      %v1493 = vpop.f32.mrb[0].mxu0
      %v1494 = vpop.f32.mrb[0].mxu0
      %1495 = vdwg.mxu0
      %v1497 = vsel %vm687, %v1172, 0
      %v1500 = vsel %vm1176, %v683, 0
      %1502 = vmatprep.subr.bf16.mxu0 0
      %1503 = vmatpush1.bf16.msra.mxu0 %v1500
      %1504 = vmatprep.subr.bf16.mxu0 0
      %1505 = vmatpush1.bf16.msra.mxu0 0
      %1506 = vmatprep.subr.bf16.mxu0 0
      %1507 = vmatpush1.bf16.msra.mxu0 0
      %1508 = vmatprep.subr.bf16.mxu0 0
      %1509 = vmatpush1.bf16.msra.mxu0 0
      %1510 = vmatprep.subr.bf16.mxu0 0
      %1511 = vmatpush1.bf16.msra.mxu0 0
      %1512 = vmatprep.subr.bf16.mxu0 0
      %1513 = vmatpush1.bf16.msra.mxu0 0
      %1514 = vmatprep.subr.bf16.mxu0 0
      %1515 = vmatpush1.bf16.msra.mxu0 0
      %1516 = vmatprep.subr.bf16.mxu0 0
      %1517 = vmatpush1.bf16.msra.mxu0 0
      %1518 = vmatprep.subr.bf16.mxu0 0
      %1519 = vmatpush1.bf16.msra.mxu0 0
      %1520 = vmatprep.subr.bf16.mxu0 0
      %1521 = vmatpush1.bf16.msra.mxu0 0
      %1522 = vmatprep.subr.bf16.mxu0 0
      %1523 = vmatpush1.bf16.msra.mxu0 0
      %1524 = vmatprep.subr.bf16.mxu0 0
      %1525 = vmatpush1.bf16.msra.mxu0 0
      %1526 = vmatprep.subr.bf16.mxu0 0
      %1527 = vmatpush1.bf16.msra.mxu0 0
      %1528 = vmatprep.subr.bf16.mxu0 0
      %1529 = vmatpush1.bf16.msra.mxu0 0
      %1530 = vmatprep.subr.bf16.mxu0 0
      %1531 = vmatpush1.bf16.msra.mxu0 0
      %1532 = vmatprep.subr.bf16.mxu0 0
      %1533 = vmatpush1.bf16.msra.mxu0 0
      %1534 = vmatprep.mubr.bf16.mxu0 0
      %1535 = vmatmul.mubr.bf16.gmra.mrb[0].mxu0 %v1497
      %v1536 = vpop.f32.mrb[0].mxu0
      %v1537 = vadd.f32 0.0, %v1536
      %v1538 = vpop.f32.mrb[0].mxu0
      %v1539 = vpop.f32.mrb[0].mxu0
      %v1540 = vpop.f32.mrb[0].mxu0
      %1541 = vdwg.mxu0
      %v1542 = vpack.c.bf16 %v1261, %v1215
      %v1543 = vpack.c.bf16 %v1353, %v1307
      %v1544 = vpack.c.bf16 %v1445, %v1399
      %v1545 = vpack.c.bf16 %v1537, %v1491
      %v1546 = vld [vmem:[%s4] sm:$0xf]
      %1547 = vrot.lane.b32.xlu0 %v644, 120
      %v1548 = vpop.permute.xlu0 %1547
      %1549 = vrot.lane.b32.xlu0 %v684, 88
      %v1550 = vpop.permute.xlu0 %1549
      %v1552 = vsel %vm687, %v1548, 0
      %v1555 = vsel %vm687, %v1550, 0
      %1557 = vmatprep.subr.bf16.mxu0 0
      %1558 = vmatpush1.bf16.xpose.msra.mxu0 %v1555
      %1559 = vmatprep.subr.bf16.mxu0 0
      %1560 = vmatpush1.bf16.xpose.msra.mxu0 0
      %1561 = vmatprep.subr.bf16.mxu0 0
      %1562 = vmatpush1.bf16.xpose.msra.mxu0 0
      %1563 = vmatprep.subr.bf16.mxu0 0
      %1564 = vmatpush1.bf16.xpose.msra.mxu0 0
      %1565 = vmatprep.subr.bf16.mxu0 0
      %1566 = vmatpush1.bf16.xpose.msra.mxu0 0
      %1567 = vmatprep.subr.bf16.mxu0 0
      %1568 = vmatpush1.bf16.xpose.msra.mxu0 0
      %1569 = vmatprep.subr.bf16.mxu0 0
      %1570 = vmatpush1.bf16.xpose.msra.mxu0 0
      %1571 = vmatprep.subr.bf16.mxu0 0
      %1572 = vmatpush1.bf16.xpose.msra.mxu0 0
      %1573 = vmatprep.subr.bf16.mxu0 0
      %1574 = vmatpush1.bf16.xpose.msra.mxu0 0
      %1575 = vmatprep.subr.bf16.mxu0 0
      %1576 = vmatpush1.bf16.xpose.msra.mxu0 0
      %1577 = vmatprep.subr.bf16.mxu0 0
      %1578 = vmatpush1.bf16.xpose.msra.mxu0 0
      %1579 = vmatprep.subr.bf16.mxu0 0
      %1580 = vmatpush1.bf16.xpose.msra.mxu0 0
      %1581 = vmatprep.subr.bf16.mxu0 0
      %1582 = vmatpush1.bf16.xpose.msra.mxu0 0
      %1583 = vmatprep.subr.bf16.mxu0 0
      %1584 = vmatpush1.bf16.xpose.msra.mxu0 0
      %1585 = vmatprep.subr.bf16.mxu0 0
      %1586 = vmatpush1.bf16.xpose.msra.mxu0 0
      %1587 = vmatprep.subr.bf16.mxu0 0
      %1588 = vmatpush1.bf16.xpose.msra.mxu0 0
      %1589 = vmatprep.mubr.bf16.mxu0 0
      %1590 = vmatmul.mubr.bf16.gmra.mrb[0].mxu0 %v1552
      %v1591 = vpop.f32.mrb[0].mxu0
      %v1592 = vadd.f32 0.0, %v1591
      %v1593 = vpop.f32.mrb[0].mxu0
      %v1594 = vpop.f32.mrb[0].mxu0
      %v1595 = vpop.f32.mrb[0].mxu0
      %1596 = vdwg.mxu0
      %1597 = vrot.lane.b32.xlu0 %v645, 120
      %v1598 = vpop.permute.xlu0 %1597
      %1599 = vrot.lane.b32.xlu0 %v734, 88
      %v1600 = vpop.permute.xlu0 %1599
      %v1602 = vsel %vm687, %v1598, 0
      %v1605 = vsel %vm687, %v1600, 0
      %1607 = vmatprep.subr.bf16.mxu0 0
      %1608 = vmatpush1.bf16.xpose.msra.mxu0 %v1605
      %1609 = vmatprep.subr.bf16.mxu0 0
      %1610 = vmatpush1.bf16.xpose.msra.mxu0 0
      %1611 = vmatprep.subr.bf16.mxu0 0
      %1612 = vmatpush1.bf16.xpose.msra.mxu0 0
      %1613 = vmatprep.subr.bf16.mxu0 0
      %1614 = vmatpush1.bf16.xpose.msra.mxu0 0
      %1615 = vmatprep.subr.bf16.mxu0 0
      %1616 = vmatpush1.bf16.xpose.msra.mxu0 0
      %1617 = vmatprep.subr.bf16.mxu0 0
      %1618 = vmatpush1.bf16.xpose.msra.mxu0 0
      %1619 = vmatprep.subr.bf16.mxu0 0
      %1620 = vmatpush1.bf16.xpose.msra.mxu0 0
      %1621 = vmatprep.subr.bf16.mxu0 0
      %1622 = vmatpush1.bf16.xpose.msra.mxu0 0
      %1623 = vmatprep.subr.bf16.mxu0 0
      %1624 = vmatpush1.bf16.xpose.msra.mxu0 0
      %1625 = vmatprep.subr.bf16.mxu0 0
      %1626 = vmatpush1.bf16.xpose.msra.mxu0 0
      %1627 = vmatprep.subr.bf16.mxu0 0
      %1628 = vmatpush1.bf16.xpose.msra.mxu0 0
      %1629 = vmatprep.subr.bf16.mxu0 0
      %1630 = vmatpush1.bf16.xpose.msra.mxu0 0
      %1631 = vmatprep.subr.bf16.mxu0 0
      %1632 = vmatpush1.bf16.xpose.msra.mxu0 0
      %1633 = vmatprep.subr.bf16.mxu0 0
      %1634 = vmatpush1.bf16.xpose.msra.mxu0 0
      %1635 = vmatprep.subr.bf16.mxu0 0
      %1636 = vmatpush1.bf16.xpose.msra.mxu0 0
      %1637 = vmatprep.subr.bf16.mxu0 0
      %1638 = vmatpush1.bf16.xpose.msra.mxu0 0
      %1639 = vmatprep.mubr.bf16.mxu0 0
      %1640 = vmatmul.mubr.bf16.gmra.mrb[0].mxu0 %v1602
      %v1641 = vpop.f32.mrb[0].mxu0
      %v1642 = vadd.f32 0.0, %v1641
      %v1643 = vpop.f32.mrb[0].mxu0
      %v1644 = vpop.f32.mrb[0].mxu0
      %v1645 = vpop.f32.mrb[0].mxu0
      %1646 = vdwg.mxu0
      %1647 = vrot.lane.b32.xlu0 %v646, 120
      %v1648 = vpop.permute.xlu0 %1647
      %1649 = vrot.lane.b32.xlu0 %v783, 88
      %v1650 = vpop.permute.xlu0 %1649
      %v1652 = vsel %vm687, %v1648, 0
      %v1655 = vsel %vm687, %v1650, 0
      %1657 = vmatprep.subr.bf16.mxu0 0
      %1658 = vmatpush1.bf16.xpose.msra.mxu0 %v1655
      %1659 = vmatprep.subr.bf16.mxu0 0
      %1660 = vmatpush1.bf16.xpose.msra.mxu0 0
      %1661 = vmatprep.subr.bf16.mxu0 0
      %1662 = vmatpush1.bf16.xpose.msra.mxu0 0
      %1663 = vmatprep.subr.bf16.mxu0 0
      %1664 = vmatpush1.bf16.xpose.msra.mxu0 0
      %1665 = vmatprep.subr.bf16.mxu0 0
      %1666 = vmatpush1.bf16.xpose.msra.mxu0 0
      %1667 = vmatprep.subr.bf16.mxu0 0
      %1668 = vmatpush1.bf16.xpose.msra.mxu0 0
      %1669 = vmatprep.subr.bf16.mxu0 0
      %1670 = vmatpush1.bf16.xpose.msra.mxu0 0
      %1671 = vmatprep.subr.bf16.mxu0 0
      %1672 = vmatpush1.bf16.xpose.msra.mxu0 0
      %1673 = vmatprep.subr.bf16.mxu0 0
      %1674 = vmatpush1.bf16.xpose.msra.mxu0 0
      %1675 = vmatprep.subr.bf16.mxu0 0
      %1676 = vmatpush1.bf16.xpose.msra.mxu0 0
      %1677 = vmatprep.subr.bf16.mxu0 0
      %1678 = vmatpush1.bf16.xpose.msra.mxu0 0
      %1679 = vmatprep.subr.bf16.mxu0 0
      %1680 = vmatpush1.bf16.xpose.msra.mxu0 0
      %1681 = vmatprep.subr.bf16.mxu0 0
      %1682 = vmatpush1.bf16.xpose.msra.mxu0 0
      %1683 = vmatprep.subr.bf16.mxu0 0
      %1684 = vmatpush1.bf16.xpose.msra.mxu0 0
      %1685 = vmatprep.subr.bf16.mxu0 0
      %1686 = vmatpush1.bf16.xpose.msra.mxu0 0
      %1687 = vmatprep.subr.bf16.mxu0 0
      %1688 = vmatpush1.bf16.xpose.msra.mxu0 0
      %1689 = vmatprep.mubr.bf16.mxu0 0
      %1690 = vmatmul.mubr.bf16.gmra.mrb[0].mxu0 %v1652
      %v1691 = vpop.f32.mrb[0].mxu0
      %v1692 = vadd.f32 0.0, %v1691
      %v1693 = vpop.f32.mrb[0].mxu0
      %v1694 = vpop.f32.mrb[0].mxu0
      %v1695 = vpop.f32.mrb[0].mxu0
      %1696 = vdwg.mxu0
      %1697 = vrot.lane.b32.xlu0 %v647, 120
      %v1698 = vpop.permute.xlu0 %1697
      %1699 = vrot.lane.b32.xlu0 %v832, 88
      %v1700 = vpop.permute.xlu0 %1699
      %v1702 = vsel %vm687, %v1698, 0
      %v1705 = vsel %vm687, %v1700, 0
      %1707 = vmatprep.subr.bf16.mxu0 0
      %1708 = vmatpush1.bf16.xpose.msra.mxu0 %v1705
      %1709 = vmatprep.subr.bf16.mxu0 0
      %1710 = vmatpush1.bf16.xpose.msra.mxu0 0
      %1711 = vmatprep.subr.bf16.mxu0 0
      %1712 = vmatpush1.bf16.xpose.msra.mxu0 0
      %1713 = vmatprep.subr.bf16.mxu0 0
      %1714 = vmatpush1.bf16.xpose.msra.mxu0 0
      %1715 = vmatprep.subr.bf16.mxu0 0
      %1716 = vmatpush1.bf16.xpose.msra.mxu0 0
      %1717 = vmatprep.subr.bf16.mxu0 0
      %1718 = vmatpush1.bf16.xpose.msra.mxu0 0
      %1719 = vmatprep.subr.bf16.mxu0 0
      %1720 = vmatpush1.bf16.xpose.msra.mxu0 0
      %1721 = vmatprep.subr.bf16.mxu0 0
      %1722 = vmatpush1.bf16.xpose.msra.mxu0 0
      %1723 = vmatprep.subr.bf16.mxu0 0
      %1724 = vmatpush1.bf16.xpose.msra.mxu0 0
      %1725 = vmatprep.subr.bf16.mxu0 0
      %1726 = vmatpush1.bf16.xpose.msra.mxu0 0
      %1727 = vmatprep.subr.bf16.mxu0 0
      %1728 = vmatpush1.bf16.xpose.msra.mxu0 0
      %1729 = vmatprep.subr.bf16.mxu0 0
      %1730 = vmatpush1.bf16.xpose.msra.mxu0 0
      %1731 = vmatprep.subr.bf16.mxu0 0
      %1732 = vmatpush1.bf16.xpose.msra.mxu0 0
      %1733 = vmatprep.subr.bf16.mxu0 0
      %1734 = vmatpush1.bf16.xpose.msra.mxu0 0
      %1735 = vmatprep.subr.bf16.mxu0 0
      %1736 = vmatpush1.bf16.xpose.msra.mxu0 0
      %1737 = vmatprep.subr.bf16.mxu0 0
      %1738 = vmatpush1.bf16.xpose.msra.mxu0 0
      %1739 = vmatprep.mubr.bf16.mxu0 0
      %1740 = vmatmul.mubr.bf16.gmra.mrb[0].mxu0 %v1702
      %v1741 = vpop.f32.mrb[0].mxu0
      %v1742 = vadd.f32 0.0, %v1741
      %v1743 = vpop.f32.mrb[0].mxu0
      %v1744 = vpop.f32.mrb[0].mxu0
      %v1745 = vpop.f32.mrb[0].mxu0
      %1746 = vdwg.mxu0
      %1747 = vrot.lane.b32.xlu0 %v648, 120
      %v1748 = vpop.permute.xlu0 %1747
      %1749 = vrot.lane.b32.xlu0 %v881, 88
      %v1750 = vpop.permute.xlu0 %1749
      %v1752 = vsel %vm687, %v1748, 0
      %v1755 = vsel %vm687, %v1750, 0
      %1757 = vmatprep.subr.bf16.mxu0 0
      %1758 = vmatpush1.bf16.xpose.msra.mxu0 %v1755
      %1759 = vmatprep.subr.bf16.mxu0 0
      %1760 = vmatpush1.bf16.xpose.msra.mxu0 0
      %1761 = vmatprep.subr.bf16.mxu0 0
      %1762 = vmatpush1.bf16.xpose.msra.mxu0 0
      %1763 = vmatprep.subr.bf16.mxu0 0
      %1764 = vmatpush1.bf16.xpose.msra.mxu0 0
      %1765 = vmatprep.subr.bf16.mxu0 0
      %1766 = vmatpush1.bf16.xpose.msra.mxu0 0
      %1767 = vmatprep.subr.bf16.mxu0 0
      %1768 = vmatpush1.bf16.xpose.msra.mxu0 0
      %1769 = vmatprep.subr.bf16.mxu0 0
      %1770 = vmatpush1.bf16.xpose.msra.mxu0 0
      %1771 = vmatprep.subr.bf16.mxu0 0
      %1772 = vmatpush1.bf16.xpose.msra.mxu0 0
      %1773 = vmatprep.subr.bf16.mxu0 0
      %1774 = vmatpush1.bf16.xpose.msra.mxu0 0
      %1775 = vmatprep.subr.bf16.mxu0 0
      %1776 = vmatpush1.bf16.xpose.msra.mxu0 0
      %1777 = vmatprep.subr.bf16.mxu0 0
      %1778 = vmatpush1.bf16.xpose.msra.mxu0 0
      %1779 = vmatprep.subr.bf16.mxu0 0
      %1780 = vmatpush1.bf16.xpose.msra.mxu0 0
      %1781 = vmatprep.subr.bf16.mxu0 0
      %1782 = vmatpush1.bf16.xpose.msra.mxu0 0
      %1783 = vmatprep.subr.bf16.mxu0 0
      %1784 = vmatpush1.bf16.xpose.msra.mxu0 0
      %1785 = vmatprep.subr.bf16.mxu0 0
      %1786 = vmatpush1.bf16.xpose.msra.mxu0 0
      %1787 = vmatprep.subr.bf16.mxu0 0
      %1788 = vmatpush1.bf16.xpose.msra.mxu0 0
      %1789 = vmatprep.mubr.bf16.mxu0 0
      %1790 = vmatmul.mubr.bf16.gmra.mrb[0].mxu0 %v1752
      %v1791 = vpop.f32.mrb[0].mxu0
      %v1792 = vadd.f32 0.0, %v1791
      %v1793 = vpop.f32.mrb[0].mxu0
      %v1794 = vpop.f32.mrb[0].mxu0
      %v1795 = vpop.f32.mrb[0].mxu0
      %1796 = vdwg.mxu0
      %1797 = vrot.lane.b32.xlu0 %v649, 120
      %v1798 = vpop.permute.xlu0 %1797
      %1799 = vrot.lane.b32.xlu0 %v930, 88
      %v1800 = vpop.permute.xlu0 %1799
      %v1802 = vsel %vm687, %v1798, 0
      %v1805 = vsel %vm687, %v1800, 0
      %1807 = vmatprep.subr.bf16.mxu0 0
      %1808 = vmatpush1.bf16.xpose.msra.mxu0 %v1805
      %1809 = vmatprep.subr.bf16.mxu0 0
      %1810 = vmatpush1.bf16.xpose.msra.mxu0 0
      %1811 = vmatprep.subr.bf16.mxu0 0
      %1812 = vmatpush1.bf16.xpose.msra.mxu0 0
      %1813 = vmatprep.subr.bf16.mxu0 0
      %1814 = vmatpush1.bf16.xpose.msra.mxu0 0
      %1815 = vmatprep.subr.bf16.mxu0 0
      %1816 = vmatpush1.bf16.xpose.msra.mxu0 0
      %1817 = vmatprep.subr.bf16.mxu0 0
      %1818 = vmatpush1.bf16.xpose.msra.mxu0 0
      %1819 = vmatprep.subr.bf16.mxu0 0
      %1820 = vmatpush1.bf16.xpose.msra.mxu0 0
      %1821 = vmatprep.subr.bf16.mxu0 0
      %1822 = vmatpush1.bf16.xpose.msra.mxu0 0
      %1823 = vmatprep.subr.bf16.mxu0 0
      %1824 = vmatpush1.bf16.xpose.msra.mxu0 0
      %1825 = vmatprep.subr.bf16.mxu0 0
      %1826 = vmatpush1.bf16.xpose.msra.mxu0 0
      %1827 = vmatprep.subr.bf16.mxu0 0
      %1828 = vmatpush1.bf16.xpose.msra.mxu0 0
      %1829 = vmatprep.subr.bf16.mxu0 0
      %1830 = vmatpush1.bf16.xpose.msra.mxu0 0
      %1831 = vmatprep.subr.bf16.mxu0 0
      %1832 = vmatpush1.bf16.xpose.msra.mxu0 0
      %1833 = vmatprep.subr.bf16.mxu0 0
      %1834 = vmatpush1.bf16.xpose.msra.mxu0 0
      %1835 = vmatprep.subr.bf16.mxu0 0
      %1836 = vmatpush1.bf16.xpose.msra.mxu0 0
      %1837 = vmatprep.subr.bf16.mxu0 0
      %1838 = vmatpush1.bf16.xpose.msra.mxu0 0
      %1839 = vmatprep.mubr.bf16.mxu0 0
      %1840 = vmatmul.mubr.bf16.gmra.mrb[0].mxu0 %v1802
      %v1841 = vpop.f32.mrb[0].mxu0
      %v1842 = vadd.f32 0.0, %v1841
      %v1843 = vpop.f32.mrb[0].mxu0
      %v1844 = vpop.f32.mrb[0].mxu0
      %v1845 = vpop.f32.mrb[0].mxu0
      %1846 = vdwg.mxu0
      %1847 = vrot.lane.b32.xlu0 %v650, 120
      %v1848 = vpop.permute.xlu0 %1847
      %1849 = vrot.lane.b32.xlu0 %v979, 88
      %v1850 = vpop.permute.xlu0 %1849
      %v1852 = vsel %vm687, %v1848, 0
      %v1855 = vsel %vm687, %v1850, 0
      %1857 = vmatprep.subr.bf16.mxu0 0
      %1858 = vmatpush1.bf16.xpose.msra.mxu0 %v1855
      %1859 = vmatprep.subr.bf16.mxu0 0
      %1860 = vmatpush1.bf16.xpose.msra.mxu0 0
      %1861 = vmatprep.subr.bf16.mxu0 0
      %1862 = vmatpush1.bf16.xpose.msra.mxu0 0
      %1863 = vmatprep.subr.bf16.mxu0 0
      %1864 = vmatpush1.bf16.xpose.msra.mxu0 0
      %1865 = vmatprep.subr.bf16.mxu0 0
      %1866 = vmatpush1.bf16.xpose.msra.mxu0 0
      %1867 = vmatprep.subr.bf16.mxu0 0
      %1868 = vmatpush1.bf16.xpose.msra.mxu0 0
      %1869 = vmatprep.subr.bf16.mxu0 0
      %1870 = vmatpush1.bf16.xpose.msra.mxu0 0
      %1871 = vmatprep.subr.bf16.mxu0 0
      %1872 = vmatpush1.bf16.xpose.msra.mxu0 0
      %1873 = vmatprep.subr.bf16.mxu0 0
      %1874 = vmatpush1.bf16.xpose.msra.mxu0 0
      %1875 = vmatprep.subr.bf16.mxu0 0
      %1876 = vmatpush1.bf16.xpose.msra.mxu0 0
      %1877 = vmatprep.subr.bf16.mxu0 0
      %1878 = vmatpush1.bf16.xpose.msra.mxu0 0
      %1879 = vmatprep.subr.bf16.mxu0 0
      %1880 = vmatpush1.bf16.xpose.msra.mxu0 0
      %1881 = vmatprep.subr.bf16.mxu0 0
      %1882 = vmatpush1.bf16.xpose.msra.mxu0 0
      %1883 = vmatprep.subr.bf16.mxu0 0
      %1884 = vmatpush1.bf16.xpose.msra.mxu0 0
      %1885 = vmatprep.subr.bf16.mxu0 0
      %1886 = vmatpush1.bf16.xpose.msra.mxu0 0
      %1887 = vmatprep.subr.bf16.mxu0 0
      %1888 = vmatpush1.bf16.xpose.msra.mxu0 0
      %1889 = vmatprep.mubr.bf16.mxu0 0
      %1890 = vmatmul.mubr.bf16.gmra.mrb[0].mxu0 %v1852
      %v1891 = vpop.f32.mrb[0].mxu0
      %v1892 = vadd.f32 0.0, %v1891
      %v1893 = vpop.f32.mrb[0].mxu0
      %v1894 = vpop.f32.mrb[0].mxu0
      %v1895 = vpop.f32.mrb[0].mxu0
      %1896 = vdwg.mxu0
      %1897 = vrot.lane.b32.xlu0 %v651, 120
      %v1898 = vpop.permute.xlu0 %1897
      %1899 = vrot.lane.b32.xlu0 %v1028, 88
      %v1900 = vpop.permute.xlu0 %1899
      %v1902 = vsel %vm687, %v1898, 0
      %v1905 = vsel %vm687, %v1900, 0
      %1907 = vmatprep.subr.bf16.mxu0 0
      %1908 = vmatpush1.bf16.xpose.msra.mxu0 %v1905
      %1909 = vmatprep.subr.bf16.mxu0 0
      %1910 = vmatpush1.bf16.xpose.msra.mxu0 0
      %1911 = vmatprep.subr.bf16.mxu0 0
      %1912 = vmatpush1.bf16.xpose.msra.mxu0 0
      %1913 = vmatprep.subr.bf16.mxu0 0
      %1914 = vmatpush1.bf16.xpose.msra.mxu0 0
      %1915 = vmatprep.subr.bf16.mxu0 0
      %1916 = vmatpush1.bf16.xpose.msra.mxu0 0
      %1917 = vmatprep.subr.bf16.mxu0 0
      %1918 = vmatpush1.bf16.xpose.msra.mxu0 0
      %1919 = vmatprep.subr.bf16.mxu0 0
      %1920 = vmatpush1.bf16.xpose.msra.mxu0 0
      %1921 = vmatprep.subr.bf16.mxu0 0
      %1922 = vmatpush1.bf16.xpose.msra.mxu0 0
      %1923 = vmatprep.subr.bf16.mxu0 0
      %1924 = vmatpush1.bf16.xpose.msra.mxu0 0
      %1925 = vmatprep.subr.bf16.mxu0 0
      %1926 = vmatpush1.bf16.xpose.msra.mxu0 0
      %1927 = vmatprep.subr.bf16.mxu0 0
      %1928 = vmatpush1.bf16.xpose.msra.mxu0 0
      %1929 = vmatprep.subr.bf16.mxu0 0
      %1930 = vmatpush1.bf16.xpose.msra.mxu0 0
      %1931 = vmatprep.subr.bf16.mxu0 0
      %1932 = vmatpush1.bf16.xpose.msra.mxu0 0
      %1933 = vmatprep.subr.bf16.mxu0 0
      %1934 = vmatpush1.bf16.xpose.msra.mxu0 0
      %1935 = vmatprep.subr.bf16.mxu0 0
      %1936 = vmatpush1.bf16.xpose.msra.mxu0 0
      %1937 = vmatprep.subr.bf16.mxu0 0
      %1938 = vmatpush1.bf16.xpose.msra.mxu0 0
      %1939 = vmatprep.mubr.bf16.mxu0 0
      %1940 = vmatmul.mubr.bf16.gmra.mrb[0].mxu0 %v1902
      %v1941 = vpop.f32.mrb[0].mxu0
      %v1942 = vadd.f32 0.0, %v1941
      %v1943 = vpop.f32.mrb[0].mxu0
      %v1944 = vpop.f32.mrb[0].mxu0
      %v1945 = vpop.f32.mrb[0].mxu0
      %1946 = vdwg.mxu0
      %v1947 = vsel %vm687, %v1592, -inf
      %1948 = vmax.xlane.f32.xlu0 %v1947
      %v1949 = vpop.xlane.xlu0 %1948
      %v1950 = vsel %vm687, %v1642, -inf
      %1951 = vmax.xlane.f32.xlu0 %v1950
      %v1952 = vpop.xlane.xlu0 %1951
      %v1953 = vsel %vm687, %v1692, -inf
      %1954 = vmax.xlane.f32.xlu0 %v1953
      %v1955 = vpop.xlane.xlu0 %1954
      %v1956 = vsel %vm687, %v1742, -inf
      %1957 = vmax.xlane.f32.xlu0 %v1956
      %v1958 = vpop.xlane.xlu0 %1957
      %v1959 = vsel %vm687, %v1792, -inf
      %1960 = vmax.xlane.f32.xlu0 %v1959
      %v1961 = vpop.xlane.xlu0 %1960
      %v1962 = vsel %vm687, %v1842, -inf
      %1963 = vmax.xlane.f32.xlu0 %v1962
      %v1964 = vpop.xlane.xlu0 %1963
      %v1965 = vsel %vm687, %v1892, -inf
      %1966 = vmax.xlane.f32.xlu0 %v1965
      %v1967 = vpop.xlane.xlu0 %1966
      %v1968 = vsel %vm687, %v1942, -inf
      %1969 = vmax.xlane.f32.xlu0 %v1968
      %v1970 = vpop.xlane.xlu0 %1969
      %v1971 = vsub.f32 %v1592, %v1949
      %v1972 = vsub.f32 %v1642, %v1952
      %v1973 = vsub.f32 %v1692, %v1955
      %v1974 = vsub.f32 %v1742, %v1958
      %v1975 = vsub.f32 %v1792, %v1961
      %v1976 = vsub.f32 %v1842, %v1964
      %v1977 = vsub.f32 %v1892, %v1967
      %v1978 = vsub.f32 %v1942, %v1970
      %v1979 = vmul.f32 %v1971, 1.442695
      %v1980 = vpow.pop %v1979
      %v1981 = vmul.f32 %v1972, 1.442695
      %v1982 = vpow.pop %v1981
      %v1983 = vmul.f32 %v1973, 1.442695
      %v1984 = vpow.pop %v1983
      %v1985 = vmul.f32 %v1974, 1.442695
      %v1986 = vpow.pop %v1985
      %v1987 = vmul.f32 %v1975, 1.442695
      %v1988 = vpow.pop %v1987
      %v1989 = vmul.f32 %v1976, 1.442695
      %v1990 = vpow.pop %v1989
      %v1991 = vmul.f32 %v1977, 1.442695
      %v1992 = vpow.pop %v1991
      %v1993 = vmul.f32 %v1978, 1.442695
      %v1994 = vpow.pop %v1993
      %v1995 = vsel %vm687, %v1980, 0.0
      %1996 = vadd.xlane.f32.xlu0 %v1995
      %v1997 = vpop.xlane.xlu0 %1996
      %v1998 = vsel %vm687, %v1982, 0.0
      %1999 = vadd.xlane.f32.xlu0 %v1998
      %v2000 = vpop.xlane.xlu0 %1999
      %v2001 = vsel %vm687, %v1984, 0.0
      %2002 = vadd.xlane.f32.xlu0 %v2001
      %v2003 = vpop.xlane.xlu0 %2002
      %v2004 = vsel %vm687, %v1986, 0.0
      %2005 = vadd.xlane.f32.xlu0 %v2004
      %v2006 = vpop.xlane.xlu0 %2005
      %v2007 = vsel %vm687, %v1988, 0.0
      %2008 = vadd.xlane.f32.xlu0 %v2007
      %v2009 = vpop.xlane.xlu0 %2008
      %v2010 = vsel %vm687, %v1990, 0.0
      %2011 = vadd.xlane.f32.xlu0 %v2010
      %v2012 = vpop.xlane.xlu0 %2011
      %v2013 = vsel %vm687, %v1992, 0.0
      %2014 = vadd.xlane.f32.xlu0 %v2013
      %v2015 = vpop.xlane.xlu0 %2014
      %v2016 = vsel %vm687, %v1994, 0.0
      %2017 = vadd.xlane.f32.xlu0 %v2016
      %v2018 = vpop.xlane.xlu0 %2017
      %v2019 = vrcp.pop %v1997
      %v2020 = vrcp.pop %v2000
      %v2021 = vrcp.pop %v2003
      %v2022 = vrcp.pop %v2006
      %v2023 = vrcp.pop %v2009
      %v2024 = vrcp.pop %v2012
      %v2025 = vrcp.pop %v2015
      %v2026 = vrcp.pop %v2018
      %v2027 = vmul.f32 %v1980, %v2019
      %v2028 = vmul.f32 %v1982, %v2020
      %v2029 = vmul.f32 %v1984, %v2021
      %v2030 = vmul.f32 %v1986, %v2022
      %v2031 = vmul.f32 %v1988, %v2023
      %v2032 = vmul.f32 %v1990, %v2024
      %v2033 = vmul.f32 %v1992, %v2025
      %v2034 = vmul.f32 %v1994, %v2026
      %v2035 = vpack.c.bf16 %v2027, %v2027
      %v2036 = vpack.c.bf16 %v2028, %v2028
      %v2037 = vpack.c.bf16 %v2029, %v2029
      %v2038 = vpack.c.bf16 %v2030, %v2030
      %v2039 = vpack.c.bf16 %v2031, %v2031
      %v2040 = vpack.c.bf16 %v2032, %v2032
      %v2041 = vpack.c.bf16 %v2033, %v2033
      %v2042 = vpack.c.bf16 %v2034, %v2034
      %2043 = vrot.lane.b32.xlu0 %v676, 120
      %v2044 = vpop.permute.xlu0 %2043
      %v2046 = vsel %vm687, %v2035, 0
      %v2049 = vsel %vm1176, %v2044, 0
      %2051 = vmatprep.subr.bf16.mxu0 0
      %2052 = vmatpush1.bf16.msra.mxu0 %v2049
      %2053 = vmatprep.subr.bf16.mxu0 0
      %2054 = vmatpush1.bf16.msra.mxu0 0
      %2055 = vmatprep.subr.bf16.mxu0 0
      %2056 = vmatpush1.bf16.msra.mxu0 0
      %2057 = vmatprep.subr.bf16.mxu0 0
      %2058 = vmatpush1.bf16.msra.mxu0 0
      %2059 = vmatprep.subr.bf16.mxu0 0
      %2060 = vmatpush1.bf16.msra.mxu0 0
      %2061 = vmatprep.subr.bf16.mxu0 0
      %2062 = vmatpush1.bf16.msra.mxu0 0
      %2063 = vmatprep.subr.bf16.mxu0 0
      %2064 = vmatpush1.bf16.msra.mxu0 0
      %2065 = vmatprep.subr.bf16.mxu0 0
      %2066 = vmatpush1.bf16.msra.mxu0 0
      %2067 = vmatprep.subr.bf16.mxu0 0
      %2068 = vmatpush1.bf16.msra.mxu0 0
      %2069 = vmatprep.subr.bf16.mxu0 0
      %2070 = vmatpush1.bf16.msra.mxu0 0
      %2071 = vmatprep.subr.bf16.mxu0 0
      %2072 = vmatpush1.bf16.msra.mxu0 0
      %2073 = vmatprep.subr.bf16.mxu0 0
      %2074 = vmatpush1.bf16.msra.mxu0 0
      %2075 = vmatprep.subr.bf16.mxu0 0
      %2076 = vmatpush1.bf16.msra.mxu0 0
      %2077 = vmatprep.subr.bf16.mxu0 0
      %2078 = vmatpush1.bf16.msra.mxu0 0
      %2079 = vmatprep.subr.bf16.mxu0 0
      %2080 = vmatpush1.bf16.msra.mxu0 0
      %2081 = vmatprep.subr.bf16.mxu0 0
      %2082 = vmatpush1.bf16.msra.mxu0 0
      %2083 = vmatprep.mubr.bf16.mxu0 0
      %2084 = vmatmul.mubr.bf16.gmra.mrb[0].mxu0 %v2046
      %v2085 = vpop.f32.mrb[0].mxu0
      %v2086 = vadd.f32 0.0, %v2085
      %v2087 = vpop.f32.mrb[0].mxu0
      %v2088 = vpop.f32.mrb[0].mxu0
      %v2089 = vpop.f32.mrb[0].mxu0
      %2090 = vdwg.mxu0
      %2091 = vrot.lane.b32.xlu0 %v677, 120
      %v2092 = vpop.permute.xlu0 %2091
      %v2094 = vsel %vm687, %v2036, 0
      %v2097 = vsel %vm1176, %v2092, 0
      %2099 = vmatprep.subr.bf16.mxu0 0
      %2100 = vmatpush1.bf16.msra.mxu0 %v2097
      %2101 = vmatprep.subr.bf16.mxu0 0
      %2102 = vmatpush1.bf16.msra.mxu0 0
      %2103 = vmatprep.subr.bf16.mxu0 0
      %2104 = vmatpush1.bf16.msra.mxu0 0
      %2105 = vmatprep.subr.bf16.mxu0 0
      %2106 = vmatpush1.bf16.msra.mxu0 0
      %2107 = vmatprep.subr.bf16.mxu0 0
      %2108 = vmatpush1.bf16.msra.mxu0 0
      %2109 = vmatprep.subr.bf16.mxu0 0
      %2110 = vmatpush1.bf16.msra.mxu0 0
      %2111 = vmatprep.subr.bf16.mxu0 0
      %2112 = vmatpush1.bf16.msra.mxu0 0
      %2113 = vmatprep.subr.bf16.mxu0 0
      %2114 = vmatpush1.bf16.msra.mxu0 0
      %2115 = vmatprep.subr.bf16.mxu0 0
      %2116 = vmatpush1.bf16.msra.mxu0 0
      %2117 = vmatprep.subr.bf16.mxu0 0
      %2118 = vmatpush1.bf16.msra.mxu0 0
      %2119 = vmatprep.subr.bf16.mxu0 0
      %2120 = vmatpush1.bf16.msra.mxu0 0
      %2121 = vmatprep.subr.bf16.mxu0 0
      %2122 = vmatpush1.bf16.msra.mxu0 0
      %2123 = vmatprep.subr.bf16.mxu0 0
      %2124 = vmatpush1.bf16.msra.mxu0 0
      %2125 = vmatprep.subr.bf16.mxu0 0
      %2126 = vmatpush1.bf16.msra.mxu0 0
      %2127 = vmatprep.subr.bf16.mxu0 0
      %2128 = vmatpush1.bf16.msra.mxu0 0
      %2129 = vmatprep.subr.bf16.mxu0 0
      %2130 = vmatpush1.bf16.msra.mxu0 0
      %2131 = vmatprep.mubr.bf16.mxu0 0
      %2132 = vmatmul.mubr.bf16.gmra.mrb[0].mxu0 %v2094
      %v2133 = vpop.f32.mrb[0].mxu0
      %v2134 = vadd.f32 0.0, %v2133
      %v2135 = vpop.f32.mrb[0].mxu0
      %v2136 = vpop.f32.mrb[0].mxu0
      %v2137 = vpop.f32.mrb[0].mxu0
      %2138 = vdwg.mxu0
      %2139 = vrot.lane.b32.xlu0 %v678, 120
      %v2140 = vpop.permute.xlu0 %2139
      %v2142 = vsel %vm687, %v2037, 0
      %v2145 = vsel %vm1176, %v2140, 0
      %2147 = vmatprep.subr.bf16.mxu0 0
      %2148 = vmatpush1.bf16.msra.mxu0 %v2145
      %2149 = vmatprep.subr.bf16.mxu0 0
      %2150 = vmatpush1.bf16.msra.mxu0 0
      %2151 = vmatprep.subr.bf16.mxu0 0
      %2152 = vmatpush1.bf16.msra.mxu0 0
      %2153 = vmatprep.subr.bf16.mxu0 0
      %2154 = vmatpush1.bf16.msra.mxu0 0
      %2155 = vmatprep.subr.bf16.mxu0 0
      %2156 = vmatpush1.bf16.msra.mxu0 0
      %2157 = vmatprep.subr.bf16.mxu0 0
      %2158 = vmatpush1.bf16.msra.mxu0 0
      %2159 = vmatprep.subr.bf16.mxu0 0
      %2160 = vmatpush1.bf16.msra.mxu0 0
      %2161 = vmatprep.subr.bf16.mxu0 0
      %2162 = vmatpush1.bf16.msra.mxu0 0
      %2163 = vmatprep.subr.bf16.mxu0 0
      %2164 = vmatpush1.bf16.msra.mxu0 0
      %2165 = vmatprep.subr.bf16.mxu0 0
      %2166 = vmatpush1.bf16.msra.mxu0 0
      %2167 = vmatprep.subr.bf16.mxu0 0
      %2168 = vmatpush1.bf16.msra.mxu0 0
      %2169 = vmatprep.subr.bf16.mxu0 0
      %2170 = vmatpush1.bf16.msra.mxu0 0
      %2171 = vmatprep.subr.bf16.mxu0 0
      %2172 = vmatpush1.bf16.msra.mxu0 0
      %2173 = vmatprep.subr.bf16.mxu0 0
      %2174 = vmatpush1.bf16.msra.mxu0 0
      %2175 = vmatprep.subr.bf16.mxu0 0
      %2176 = vmatpush1.bf16.msra.mxu0 0
      %2177 = vmatprep.subr.bf16.mxu0 0
      %2178 = vmatpush1.bf16.msra.mxu0 0
      %2179 = vmatprep.mubr.bf16.mxu0 0
      %2180 = vmatmul.mubr.bf16.gmra.mrb[0].mxu0 %v2142
      %v2181 = vpop.f32.mrb[0].mxu0
      %v2182 = vadd.f32 0.0, %v2181
      %v2183 = vpop.f32.mrb[0].mxu0
      %v2184 = vpop.f32.mrb[0].mxu0
      %v2185 = vpop.f32.mrb[0].mxu0
      %2186 = vdwg.mxu0
      %2187 = vrot.lane.b32.xlu0 %v679, 120
      %v2188 = vpop.permute.xlu0 %2187
      %v2190 = vsel %vm687, %v2038, 0
      %v2193 = vsel %vm1176, %v2188, 0
      %2195 = vmatprep.subr.bf16.mxu0 0
      %2196 = vmatpush1.bf16.msra.mxu0 %v2193
      %2197 = vmatprep.subr.bf16.mxu0 0
      %2198 = vmatpush1.bf16.msra.mxu0 0
      %2199 = vmatprep.subr.bf16.mxu0 0
      %2200 = vmatpush1.bf16.msra.mxu0 0
      %2201 = vmatprep.subr.bf16.mxu0 0
      %2202 = vmatpush1.bf16.msra.mxu0 0
      %2203 = vmatprep.subr.bf16.mxu0 0
      %2204 = vmatpush1.bf16.msra.mxu0 0
      %2205 = vmatprep.subr.bf16.mxu0 0
      %2206 = vmatpush1.bf16.msra.mxu0 0
      %2207 = vmatprep.subr.bf16.mxu0 0
      %2208 = vmatpush1.bf16.msra.mxu0 0
      %2209 = vmatprep.subr.bf16.mxu0 0
      %2210 = vmatpush1.bf16.msra.mxu0 0
      %2211 = vmatprep.subr.bf16.mxu0 0
      %2212 = vmatpush1.bf16.msra.mxu0 0
      %2213 = vmatprep.subr.bf16.mxu0 0
      %2214 = vmatpush1.bf16.msra.mxu0 0
      %2215 = vmatprep.subr.bf16.mxu0 0
      %2216 = vmatpush1.bf16.msra.mxu0 0
      %2217 = vmatprep.subr.bf16.mxu0 0
      %2218 = vmatpush1.bf16.msra.mxu0 0
      %2219 = vmatprep.subr.bf16.mxu0 0
      %2220 = vmatpush1.bf16.msra.mxu0 0
      %2221 = vmatprep.subr.bf16.mxu0 0
      %2222 = vmatpush1.bf16.msra.mxu0 0
      %2223 = vmatprep.subr.bf16.mxu0 0
      %2224 = vmatpush1.bf16.msra.mxu0 0
      %2225 = vmatprep.subr.bf16.mxu0 0
      %2226 = vmatpush1.bf16.msra.mxu0 0
      %2227 = vmatprep.mubr.bf16.mxu0 0
      %2228 = vmatmul.mubr.bf16.gmra.mrb[0].mxu0 %v2190
      %v2229 = vpop.f32.mrb[0].mxu0
      %v2230 = vadd.f32 0.0, %v2229
      %v2231 = vpop.f32.mrb[0].mxu0
      %v2232 = vpop.f32.mrb[0].mxu0
      %v2233 = vpop.f32.mrb[0].mxu0
      %2234 = vdwg.mxu0
      %2235 = vrot.lane.b32.xlu0 %v680, 120
      %v2236 = vpop.permute.xlu0 %2235
      %v2238 = vsel %vm687, %v2039, 0
      %v2241 = vsel %vm1176, %v2236, 0
      %2243 = vmatprep.subr.bf16.mxu0 0
      %2244 = vmatpush1.bf16.msra.mxu0 %v2241
      %2245 = vmatprep.subr.bf16.mxu0 0
      %2246 = vmatpush1.bf16.msra.mxu0 0
      %2247 = vmatprep.subr.bf16.mxu0 0
      %2248 = vmatpush1.bf16.msra.mxu0 0
      %2249 = vmatprep.subr.bf16.mxu0 0
      %2250 = vmatpush1.bf16.msra.mxu0 0
      %2251 = vmatprep.subr.bf16.mxu0 0
      %2252 = vmatpush1.bf16.msra.mxu0 0
      %2253 = vmatprep.subr.bf16.mxu0 0
      %2254 = vmatpush1.bf16.msra.mxu0 0
      %2255 = vmatprep.subr.bf16.mxu0 0
      %2256 = vmatpush1.bf16.msra.mxu0 0
      %2257 = vmatprep.subr.bf16.mxu0 0
      %2258 = vmatpush1.bf16.msra.mxu0 0
      %2259 = vmatprep.subr.bf16.mxu0 0
      %2260 = vmatpush1.bf16.msra.mxu0 0
      %2261 = vmatprep.subr.bf16.mxu0 0
      %2262 = vmatpush1.bf16.msra.mxu0 0
      %2263 = vmatprep.subr.bf16.mxu0 0
      %2264 = vmatpush1.bf16.msra.mxu0 0
      %2265 = vmatprep.subr.bf16.mxu0 0
      %2266 = vmatpush1.bf16.msra.mxu0 0
      %2267 = vmatprep.subr.bf16.mxu0 0
      %2268 = vmatpush1.bf16.msra.mxu0 0
      %2269 = vmatprep.subr.bf16.mxu0 0
      %2270 = vmatpush1.bf16.msra.mxu0 0
      %2271 = vmatprep.subr.bf16.mxu0 0
      %2272 = vmatpush1.bf16.msra.mxu0 0
      %2273 = vmatprep.subr.bf16.mxu0 0
      %2274 = vmatpush1.bf16.msra.mxu0 0
      %2275 = vmatprep.mubr.bf16.mxu0 0
      %2276 = vmatmul.mubr.bf16.gmra.mrb[0].mxu0 %v2238
      %v2277 = vpop.f32.mrb[0].mxu0
      %v2278 = vadd.f32 0.0, %v2277
      %v2279 = vpop.f32.mrb[0].mxu0
      %v2280 = vpop.f32.mrb[0].mxu0
      %v2281 = vpop.f32.mrb[0].mxu0
      %2282 = vdwg.mxu0
      %2283 = vrot.lane.b32.xlu0 %v681, 120
      %v2284 = vpop.permute.xlu0 %2283
      %v2286 = vsel %vm687, %v2040, 0
      %v2289 = vsel %vm1176, %v2284, 0
      %2291 = vmatprep.subr.bf16.mxu0 0
      %2292 = vmatpush1.bf16.msra.mxu0 %v2289
      %2293 = vmatprep.subr.bf16.mxu0 0
      %2294 = vmatpush1.bf16.msra.mxu0 0
      %2295 = vmatprep.subr.bf16.mxu0 0
      %2296 = vmatpush1.bf16.msra.mxu0 0
      %2297 = vmatprep.subr.bf16.mxu0 0
      %2298 = vmatpush1.bf16.msra.mxu0 0
      %2299 = vmatprep.subr.bf16.mxu0 0
      %2300 = vmatpush1.bf16.msra.mxu0 0
      %2301 = vmatprep.subr.bf16.mxu0 0
      %2302 = vmatpush1.bf16.msra.mxu0 0
      %2303 = vmatprep.subr.bf16.mxu0 0
      %2304 = vmatpush1.bf16.msra.mxu0 0
      %2305 = vmatprep.subr.bf16.mxu0 0
      %2306 = vmatpush1.bf16.msra.mxu0 0
      %2307 = vmatprep.subr.bf16.mxu0 0
      %2308 = vmatpush1.bf16.msra.mxu0 0
      %2309 = vmatprep.subr.bf16.mxu0 0
      %2310 = vmatpush1.bf16.msra.mxu0 0
      %2311 = vmatprep.subr.bf16.mxu0 0
      %2312 = vmatpush1.bf16.msra.mxu0 0
      %2313 = vmatprep.subr.bf16.mxu0 0
      %2314 = vmatpush1.bf16.msra.mxu0 0
      %2315 = vmatprep.subr.bf16.mxu0 0
      %2316 = vmatpush1.bf16.msra.mxu0 0
      %2317 = vmatprep.subr.bf16.mxu0 0
      %2318 = vmatpush1.bf16.msra.mxu0 0
      %2319 = vmatprep.subr.bf16.mxu0 0
      %2320 = vmatpush1.bf16.msra.mxu0 0
      %2321 = vmatprep.subr.bf16.mxu0 0
      %2322 = vmatpush1.bf16.msra.mxu0 0
      %2323 = vmatprep.mubr.bf16.mxu0 0
      %2324 = vmatmul.mubr.bf16.gmra.mrb[0].mxu0 %v2286
      %v2325 = vpop.f32.mrb[0].mxu0
      %v2326 = vadd.f32 0.0, %v2325
      %v2327 = vpop.f32.mrb[0].mxu0
      %v2328 = vpop.f32.mrb[0].mxu0
      %v2329 = vpop.f32.mrb[0].mxu0
      %2330 = vdwg.mxu0
      %2331 = vrot.lane.b32.xlu0 %v682, 120
      %v2332 = vpop.permute.xlu0 %2331
      %v2334 = vsel %vm687, %v2041, 0
      %v2337 = vsel %vm1176, %v2332, 0
      %2339 = vmatprep.subr.bf16.mxu0 0
      %2340 = vmatpush1.bf16.msra.mxu0 %v2337
      %2341 = vmatprep.subr.bf16.mxu0 0
      %2342 = vmatpush1.bf16.msra.mxu0 0
      %2343 = vmatprep.subr.bf16.mxu0 0
      %2344 = vmatpush1.bf16.msra.mxu0 0
      %2345 = vmatprep.subr.bf16.mxu0 0
      %2346 = vmatpush1.bf16.msra.mxu0 0
      %2347 = vmatprep.subr.bf16.mxu0 0
      %2348 = vmatpush1.bf16.msra.mxu0 0
      %2349 = vmatprep.subr.bf16.mxu0 0
      %2350 = vmatpush1.bf16.msra.mxu0 0
      %2351 = vmatprep.subr.bf16.mxu0 0
      %2352 = vmatpush1.bf16.msra.mxu0 0
      %2353 = vmatprep.subr.bf16.mxu0 0
      %2354 = vmatpush1.bf16.msra.mxu0 0
      %2355 = vmatprep.subr.bf16.mxu0 0
      %2356 = vmatpush1.bf16.msra.mxu0 0
      %2357 = vmatprep.subr.bf16.mxu0 0
      %2358 = vmatpush1.bf16.msra.mxu0 0
      %2359 = vmatprep.subr.bf16.mxu0 0
      %2360 = vmatpush1.bf16.msra.mxu0 0
      %2361 = vmatprep.subr.bf16.mxu0 0
      %2362 = vmatpush1.bf16.msra.mxu0 0
      %2363 = vmatprep.subr.bf16.mxu0 0
      %2364 = vmatpush1.bf16.msra.mxu0 0
      %2365 = vmatprep.subr.bf16.mxu0 0
      %2366 = vmatpush1.bf16.msra.mxu0 0
      %2367 = vmatprep.subr.bf16.mxu0 0
      %2368 = vmatpush1.bf16.msra.mxu0 0
      %2369 = vmatprep.subr.bf16.mxu0 0
      %2370 = vmatpush1.bf16.msra.mxu0 0
      %2371 = vmatprep.mubr.bf16.mxu0 0
      %2372 = vmatmul.mubr.bf16.gmra.mrb[0].mxu0 %v2334
      %v2373 = vpop.f32.mrb[0].mxu0
      %v2374 = vadd.f32 0.0, %v2373
      %v2375 = vpop.f32.mrb[0].mxu0
      %v2376 = vpop.f32.mrb[0].mxu0
      %v2377 = vpop.f32.mrb[0].mxu0
      %2378 = vdwg.mxu0
      %2379 = vrot.lane.b32.xlu0 %v683, 120
      %v2380 = vpop.permute.xlu0 %2379
      %v2382 = vsel %vm687, %v2042, 0
      %v2385 = vsel %vm1176, %v2380, 0
      %2387 = vmatprep.subr.bf16.mxu0 0
      %2388 = vmatpush1.bf16.msra.mxu0 %v2385
      %2389 = vmatprep.subr.bf16.mxu0 0
      %2390 = vmatpush1.bf16.msra.mxu0 0
      %2391 = vmatprep.subr.bf16.mxu0 0
      %2392 = vmatpush1.bf16.msra.mxu0 0
      %2393 = vmatprep.subr.bf16.mxu0 0
      %2394 = vmatpush1.bf16.msra.mxu0 0
      %2395 = vmatprep.subr.bf16.mxu0 0
      %2396 = vmatpush1.bf16.msra.mxu0 0
      %2397 = vmatprep.subr.bf16.mxu0 0
      %2398 = vmatpush1.bf16.msra.mxu0 0
      %2399 = vmatprep.subr.bf16.mxu0 0
      %2400 = vmatpush1.bf16.msra.mxu0 0
      %2401 = vmatprep.subr.bf16.mxu0 0
      %2402 = vmatpush1.bf16.msra.mxu0 0
      %2403 = vmatprep.subr.bf16.mxu0 0
      %2404 = vmatpush1.bf16.msra.mxu0 0
      %2405 = vmatprep.subr.bf16.mxu0 0
      %2406 = vmatpush1.bf16.msra.mxu0 0
      %2407 = vmatprep.subr.bf16.mxu0 0
      %2408 = vmatpush1.bf16.msra.mxu0 0
      %2409 = vmatprep.subr.bf16.mxu0 0
      %2410 = vmatpush1.bf16.msra.mxu0 0
      %2411 = vmatprep.subr.bf16.mxu0 0
      %2412 = vmatpush1.bf16.msra.mxu0 0
      %2413 = vmatprep.subr.bf16.mxu0 0
      %2414 = vmatpush1.bf16.msra.mxu0 0
      %2415 = vmatprep.subr.bf16.mxu0 0
      %2416 = vmatpush1.bf16.msra.mxu0 0
      %2417 = vmatprep.subr.bf16.mxu0 0
      %2418 = vmatpush1.bf16.msra.mxu0 0
      %2419 = vmatprep.mubr.bf16.mxu0 0
      %2420 = vmatmul.mubr.bf16.gmra.mrb[0].mxu0 %v2382
      %v2421 = vpop.f32.mrb[0].mxu0
      %v2422 = vadd.f32 0.0, %v2421
      %v2423 = vpop.f32.mrb[0].mxu0
      %v2424 = vpop.f32.mrb[0].mxu0
      %v2425 = vpop.f32.mrb[0].mxu0
      %2426 = vdwg.mxu0
      %v2427 = vpack.c.bf16 %v2134, %v2086
      %v2428 = vpack.c.bf16 %v2230, %v2182
      %v2429 = vpack.c.bf16 %v2326, %v2278
      %v2430 = vpack.c.bf16 %v2422, %v2374
      %v2431 = vld [vmem:[%s4 + $0x4] sm:$0xf]
      %v2433 = vsel %vm687, %v2427, 0
      %v2436 = vsel %vm687, %v2428, 0
      %v2439 = vsel %vm687, %v2429, 0
      %v2442 = vsel %vm687, %v2430, 0
      %v2445 = vsel %vm1176, %v2431, 0
      %2447 = vmatprep.subr.bf16.mxu0 0
      %2448 = vmatpush1.bf16.msra.mxu0 %v2445
      %2449 = vmatprep.subr.bf16.mxu0 0
      %2450 = vmatpush1.bf16.msra.mxu0 0
      %2451 = vmatprep.subr.bf16.mxu0 0
      %2452 = vmatpush1.bf16.msra.mxu0 0
      %2453 = vmatprep.subr.bf16.mxu0 0
      %2454 = vmatpush1.bf16.msra.mxu0 0
      %2455 = vmatprep.subr.bf16.mxu0 0
      %2456 = vmatpush1.bf16.msra.mxu0 0
      %2457 = vmatprep.subr.bf16.mxu0 0
      %2458 = vmatpush1.bf16.msra.mxu0 0
      %2459 = vmatprep.subr.bf16.mxu0 0
      %2460 = vmatpush1.bf16.msra.mxu0 0
      %2461 = vmatprep.subr.bf16.mxu0 0
      %2462 = vmatpush1.bf16.msra.mxu0 0
      %2463 = vmatprep.subr.bf16.mxu0 0
      %2464 = vmatpush1.bf16.msra.mxu0 0
      %2465 = vmatprep.subr.bf16.mxu0 0
      %2466 = vmatpush1.bf16.msra.mxu0 0
      %2467 = vmatprep.subr.bf16.mxu0 0
      %2468 = vmatpush1.bf16.msra.mxu0 0
      %2469 = vmatprep.subr.bf16.mxu0 0
      %2470 = vmatpush1.bf16.msra.mxu0 0
      %2471 = vmatprep.subr.bf16.mxu0 0
      %2472 = vmatpush1.bf16.msra.mxu0 0
      %2473 = vmatprep.subr.bf16.mxu0 0
      %2474 = vmatpush1.bf16.msra.mxu0 0
      %2475 = vmatprep.subr.bf16.mxu0 0
      %2476 = vmatpush1.bf16.msra.mxu0 0
      %2477 = vmatprep.subr.bf16.mxu0 0
      %2478 = vmatpush1.bf16.msra.mxu0 0
      %2479 = vmatprep.mubr.bf16.mxu0 0
      %2480 = vmatmul.mubr.bf16.gmra.mrb[0].mxu0 %v2433
      %v2481 = vpop.f32.mrb[0].mxu0
      %v2482 = vadd.f32 0.0, %v2481
      %v2483 = vpop.f32.mrb[0].mxu0
      %v2484 = vpop.f32.mrb[0].mxu0
      %v2485 = vadd.f32 0.0, %v2484
      %v2486 = vpop.f32.mrb[0].mxu0
      %2487 = vmatprep.mubr.bf16.mxu0 0
      %2488 = vmatmul.mubr.bf16.gmra.mrb[0].mxu0 %v2436
      %v2489 = vpop.f32.mrb[0].mxu0
      %v2490 = vadd.f32 0.0, %v2489
      %v2491 = vpop.f32.mrb[0].mxu0
      %v2492 = vpop.f32.mrb[0].mxu0
      %v2493 = vadd.f32 0.0, %v2492
      %v2494 = vpop.f32.mrb[0].mxu0
      %2495 = vmatprep.mubr.bf16.mxu0 0
      %2496 = vmatmul.mubr.bf16.gmra.mrb[0].mxu0 %v2439
      %v2497 = vpop.f32.mrb[0].mxu0
      %v2498 = vadd.f32 0.0, %v2497
      %v2499 = vpop.f32.mrb[0].mxu0
      %v2500 = vpop.f32.mrb[0].mxu0
      %v2501 = vadd.f32 0.0, %v2500
      %v2502 = vpop.f32.mrb[0].mxu0
      %2503 = vmatprep.mubr.bf16.mxu0 0
      %2504 = vmatmul.mubr.bf16.gmra.mrb[0].mxu0 %v2442
      %v2505 = vpop.f32.mrb[0].mxu0
      %v2506 = vadd.f32 0.0, %v2505
      %v2507 = vpop.f32.mrb[0].mxu0
      %v2508 = vpop.f32.mrb[0].mxu0
      %v2509 = vadd.f32 0.0, %v2508
      %v2510 = vpop.f32.mrb[0].mxu0
      %2511 = vdwg.mxu0
      %v2513 = vsel %vm687, %v1542, 0
      %v2516 = vsel %vm687, %v1543, 0
      %v2519 = vsel %vm687, %v1544, 0
      %v2522 = vsel %vm687, %v1545, 0
      %v2525 = vsel %vm1176, %v1546, 0
      %2527 = vmatprep.subr.bf16.mxu0 0
      %2528 = vmatpush1.bf16.msra.mxu0 %v2525
      %2529 = vmatprep.subr.bf16.mxu0 0
      %2530 = vmatpush1.bf16.msra.mxu0 0
      %2531 = vmatprep.subr.bf16.mxu0 0
      %2532 = vmatpush1.bf16.msra.mxu0 0
      %2533 = vmatprep.subr.bf16.mxu0 0
      %2534 = vmatpush1.bf16.msra.mxu0 0
      %2535 = vmatprep.subr.bf16.mxu0 0
      %2536 = vmatpush1.bf16.msra.mxu0 0
      %2537 = vmatprep.subr.bf16.mxu0 0
      %2538 = vmatpush1.bf16.msra.mxu0 0
      %2539 = vmatprep.subr.bf16.mxu0 0
      %2540 = vmatpush1.bf16.msra.mxu0 0
      %2541 = vmatprep.subr.bf16.mxu0 0
      %2542 = vmatpush1.bf16.msra.mxu0 0
      %2543 = vmatprep.subr.bf16.mxu0 0
      %2544 = vmatpush1.bf16.msra.mxu0 0
      %2545 = vmatprep.subr.bf16.mxu0 0
      %2546 = vmatpush1.bf16.msra.mxu0 0
      %2547 = vmatprep.subr.bf16.mxu0 0
      %2548 = vmatpush1.bf16.msra.mxu0 0
      %2549 = vmatprep.subr.bf16.mxu0 0
      %2550 = vmatpush1.bf16.msra.mxu0 0
      %2551 = vmatprep.subr.bf16.mxu0 0
      %2552 = vmatpush1.bf16.msra.mxu0 0
      %2553 = vmatprep.subr.bf16.mxu0 0
      %2554 = vmatpush1.bf16.msra.mxu0 0
      %2555 = vmatprep.subr.bf16.mxu0 0
      %2556 = vmatpush1.bf16.msra.mxu0 0
      %2557 = vmatprep.subr.bf16.mxu0 0
      %2558 = vmatpush1.bf16.msra.mxu0 0
      %2559 = vmatprep.mubr.bf16.mxu0 0
      %2560 = vmatmul.mubr.bf16.gmra.mrb[0].mxu0 %v2513
      %v2561 = vpop.f32.mrb[0].mxu0
      %v2562 = vadd.f32 %v2482, %v2561
      %v2563 = vpop.f32.mrb[0].mxu0
      %v2564 = vpop.f32.mrb[0].mxu0
      %v2565 = vadd.f32 %v2485, %v2564
      %v2566 = vpop.f32.mrb[0].mxu0
      %2567 = vmatprep.mubr.bf16.mxu0 0
      %2568 = vmatmul.mubr.bf16.gmra.mrb[0].mxu0 %v2516
      %v2569 = vpop.f32.mrb[0].mxu0
      %v2570 = vadd.f32 %v2490, %v2569
      %v2571 = vpop.f32.mrb[0].mxu0
      %v2572 = vpop.f32.mrb[0].mxu0
      %v2573 = vadd.f32 %v2493, %v2572
      %v2574 = vpop.f32.mrb[0].mxu0
      %2575 = vmatprep.mubr.bf16.mxu0 0
      %2576 = vmatmul.mubr.bf16.gmra.mrb[0].mxu0 %v2519
      %v2577 = vpop.f32.mrb[0].mxu0
      %v2578 = vadd.f32 %v2498, %v2577
      %v2579 = vpop.f32.mrb[0].mxu0
      %v2580 = vpop.f32.mrb[0].mxu0
      %v2581 = vadd.f32 %v2501, %v2580
      %v2582 = vpop.f32.mrb[0].mxu0
      %2583 = vmatprep.mubr.bf16.mxu0 0
      %2584 = vmatmul.mubr.bf16.gmra.mrb[0].mxu0 %v2522
      %v2585 = vpop.f32.mrb[0].mxu0
      %v2586 = vadd.f32 %v2506, %v2585
      %v2587 = vpop.f32.mrb[0].mxu0
      %v2588 = vpop.f32.mrb[0].mxu0
      %v2589 = vadd.f32 %v2509, %v2588
      %v2590 = vpop.f32.mrb[0].mxu0
      %2591 = vdwg.mxu0
      %2592 = vrot.lane.b32.xlu0 %v644, 112
      %v2593 = vpop.permute.xlu0 %2592
      %2594 = vrot.lane.b32.xlu0 %v684, 80
      %v2595 = vpop.permute.xlu0 %2594
      %v2597 = vsel %vm687, %v2593, 0
      %v2600 = vsel %vm687, %v2595, 0
      %2602 = vmatprep.subr.bf16.mxu0 0
      %2603 = vmatpush1.bf16.xpose.msra.mxu0 %v2600
      %2604 = vmatprep.subr.bf16.mxu0 0
      %2605 = vmatpush1.bf16.xpose.msra.mxu0 0
      %2606 = vmatprep.subr.bf16.mxu0 0
      %2607 = vmatpush1.bf16.xpose.msra.mxu0 0
      %2608 = vmatprep.subr.bf16.mxu0 0
      %2609 = vmatpush1.bf16.xpose.msra.mxu0 0
      %2610 = vmatprep.subr.bf16.mxu0 0
      %2611 = vmatpush1.bf16.xpose.msra.mxu0 0
      %2612 = vmatprep.subr.bf16.mxu0 0
      %2613 = vmatpush1.bf16.xpose.msra.mxu0 0
      %2614 = vmatprep.subr.bf16.mxu0 0
      %2615 = vmatpush1.bf16.xpose.msra.mxu0 0
      %2616 = vmatprep.subr.bf16.mxu0 0
      %2617 = vmatpush1.bf16.xpose.msra.mxu0 0
      %2618 = vmatprep.subr.bf16.mxu0 0
      %2619 = vmatpush1.bf16.xpose.msra.mxu0 0
      %2620 = vmatprep.subr.bf16.mxu0 0
      %2621 = vmatpush1.bf16.xpose.msra.mxu0 0
      %2622 = vmatprep.subr.bf16.mxu0 0
      %2623 = vmatpush1.bf16.xpose.msra.mxu0 0
      %2624 = vmatprep.subr.bf16.mxu0 0
      %2625 = vmatpush1.bf16.xpose.msra.mxu0 0
      %2626 = vmatprep.subr.bf16.mxu0 0
      %2627 = vmatpush1.bf16.xpose.msra.mxu0 0
      %2628 = vmatprep.subr.bf16.mxu0 0
      %2629 = vmatpush1.bf16.xpose.msra.mxu0 0
      %2630 = vmatprep.subr.bf16.mxu0 0
      %2631 = vmatpush1.bf16.xpose.msra.mxu0 0
      %2632 = vmatprep.subr.bf16.mxu0 0
      %2633 = vmatpush1.bf16.xpose.msra.mxu0 0
      %2634 = vmatprep.mubr.bf16.mxu0 0
      %2635 = vmatmul.mubr.bf16.gmra.mrb[0].mxu0 %v2597
      %v2636 = vpop.f32.mrb[0].mxu0
      %v2637 = vadd.f32 0.0, %v2636
      %v2638 = vpop.f32.mrb[0].mxu0
      %v2639 = vpop.f32.mrb[0].mxu0
      %v2640 = vpop.f32.mrb[0].mxu0
      %2641 = vdwg.mxu0
      %2642 = vrot.lane.b32.xlu0 %v645, 112
      %v2643 = vpop.permute.xlu0 %2642
      %2644 = vrot.lane.b32.xlu0 %v734, 80
      %v2645 = vpop.permute.xlu0 %2644
      %v2647 = vsel %vm687, %v2643, 0
      %v2650 = vsel %vm687, %v2645, 0
      %2652 = vmatprep.subr.bf16.mxu0 0
      %2653 = vmatpush1.bf16.xpose.msra.mxu0 %v2650
      %2654 = vmatprep.subr.bf16.mxu0 0
      %2655 = vmatpush1.bf16.xpose.msra.mxu0 0
      %2656 = vmatprep.subr.bf16.mxu0 0
      %2657 = vmatpush1.bf16.xpose.msra.mxu0 0
      %2658 = vmatprep.subr.bf16.mxu0 0
      %2659 = vmatpush1.bf16.xpose.msra.mxu0 0
      %2660 = vmatprep.subr.bf16.mxu0 0
      %2661 = vmatpush1.bf16.xpose.msra.mxu0 0
      %2662 = vmatprep.subr.bf16.mxu0 0
      %2663 = vmatpush1.bf16.xpose.msra.mxu0 0
      %2664 = vmatprep.subr.bf16.mxu0 0
      %2665 = vmatpush1.bf16.xpose.msra.mxu0 0
      %2666 = vmatprep.subr.bf16.mxu0 0
      %2667 = vmatpush1.bf16.xpose.msra.mxu0 0
      %2668 = vmatprep.subr.bf16.mxu0 0
      %2669 = vmatpush1.bf16.xpose.msra.mxu0 0
      %2670 = vmatprep.subr.bf16.mxu0 0
      %2671 = vmatpush1.bf16.xpose.msra.mxu0 0
      %2672 = vmatprep.subr.bf16.mxu0 0
      %2673 = vmatpush1.bf16.xpose.msra.mxu0 0
      %2674 = vmatprep.subr.bf16.mxu0 0
      %2675 = vmatpush1.bf16.xpose.msra.mxu0 0
      %2676 = vmatprep.subr.bf16.mxu0 0
      %2677 = vmatpush1.bf16.xpose.msra.mxu0 0
      %2678 = vmatprep.subr.bf16.mxu0 0
      %2679 = vmatpush1.bf16.xpose.msra.mxu0 0
      %2680 = vmatprep.subr.bf16.mxu0 0
      %2681 = vmatpush1.bf16.xpose.msra.mxu0 0
      %2682 = vmatprep.subr.bf16.mxu0 0
      %2683 = vmatpush1.bf16.xpose.msra.mxu0 0
      %2684 = vmatprep.mubr.bf16.mxu0 0
      %2685 = vmatmul.mubr.bf16.gmra.mrb[0].mxu0 %v2647
      %v2686 = vpop.f32.mrb[0].mxu0
      %v2687 = vadd.f32 0.0, %v2686
      %v2688 = vpop.f32.mrb[0].mxu0
      %v2689 = vpop.f32.mrb[0].mxu0
      %v2690 = vpop.f32.mrb[0].mxu0
      %2691 = vdwg.mxu0
      %2692 = vrot.lane.b32.xlu0 %v646, 112
      %v2693 = vpop.permute.xlu0 %2692
      %2694 = vrot.lane.b32.xlu0 %v783, 80
      %v2695 = vpop.permute.xlu0 %2694
      %v2697 = vsel %vm687, %v2693, 0
      %v2700 = vsel %vm687, %v2695, 0
      %2702 = vmatprep.subr.bf16.mxu0 0
      %2703 = vmatpush1.bf16.xpose.msra.mxu0 %v2700
      %2704 = vmatprep.subr.bf16.mxu0 0
      %2705 = vmatpush1.bf16.xpose.msra.mxu0 0
      %2706 = vmatprep.subr.bf16.mxu0 0
      %2707 = vmatpush1.bf16.xpose.msra.mxu0 0
      %2708 = vmatprep.subr.bf16.mxu0 0
      %2709 = vmatpush1.bf16.xpose.msra.mxu0 0
      %2710 = vmatprep.subr.bf16.mxu0 0
      %2711 = vmatpush1.bf16.xpose.msra.mxu0 0
      %2712 = vmatprep.subr.bf16.mxu0 0
      %2713 = vmatpush1.bf16.xpose.msra.mxu0 0
      %2714 = vmatprep.subr.bf16.mxu0 0
      %2715 = vmatpush1.bf16.xpose.msra.mxu0 0
      %2716 = vmatprep.subr.bf16.mxu0 0
      %2717 = vmatpush1.bf16.xpose.msra.mxu0 0
      %2718 = vmatprep.subr.bf16.mxu0 0
      %2719 = vmatpush1.bf16.xpose.msra.mxu0 0
      %2720 = vmatprep.subr.bf16.mxu0 0
      %2721 = vmatpush1.bf16.xpose.msra.mxu0 0
      %2722 = vmatprep.subr.bf16.mxu0 0
      %2723 = vmatpush1.bf16.xpose.msra.mxu0 0
      %2724 = vmatprep.subr.bf16.mxu0 0
      %2725 = vmatpush1.bf16.xpose.msra.mxu0 0
      %2726 = vmatprep.subr.bf16.mxu0 0
      %2727 = vmatpush1.bf16.xpose.msra.mxu0 0
      %2728 = vmatprep.subr.bf16.mxu0 0
      %2729 = vmatpush1.bf16.xpose.msra.mxu0 0
      %2730 = vmatprep.subr.bf16.mxu0 0
      %2731 = vmatpush1.bf16.xpose.msra.mxu0 0
      %2732 = vmatprep.subr.bf16.mxu0 0
      %2733 = vmatpush1.bf16.xpose.msra.mxu0 0
      %2734 = vmatprep.mubr.bf16.mxu0 0
      %2735 = vmatmul.mubr.bf16.gmra.mrb[0].mxu0 %v2697
      %v2736 = vpop.f32.mrb[0].mxu0
      %v2737 = vadd.f32 0.0, %v2736
      %v2738 = vpop.f32.mrb[0].mxu0
      %v2739 = vpop.f32.mrb[0].mxu0
      %v2740 = vpop.f32.mrb[0].mxu0
      %2741 = vdwg.mxu0
      %2742 = vrot.lane.b32.xlu0 %v647, 112
      %v2743 = vpop.permute.xlu0 %2742
      %2744 = vrot.lane.b32.xlu0 %v832, 80
      %v2745 = vpop.permute.xlu0 %2744
      %v2747 = vsel %vm687, %v2743, 0
      %v2750 = vsel %vm687, %v2745, 0
      %2752 = vmatprep.subr.bf16.mxu0 0
      %2753 = vmatpush1.bf16.xpose.msra.mxu0 %v2750
      %2754 = vmatprep.subr.bf16.mxu0 0
      %2755 = vmatpush1.bf16.xpose.msra.mxu0 0
      %2756 = vmatprep.subr.bf16.mxu0 0
      %2757 = vmatpush1.bf16.xpose.msra.mxu0 0
      %2758 = vmatprep.subr.bf16.mxu0 0
      %2759 = vmatpush1.bf16.xpose.msra.mxu0 0
      %2760 = vmatprep.subr.bf16.mxu0 0
      %2761 = vmatpush1.bf16.xpose.msra.mxu0 0
      %2762 = vmatprep.subr.bf16.mxu0 0
      %2763 = vmatpush1.bf16.xpose.msra.mxu0 0
      %2764 = vmatprep.subr.bf16.mxu0 0
      %2765 = vmatpush1.bf16.xpose.msra.mxu0 0
      %2766 = vmatprep.subr.bf16.mxu0 0
      %2767 = vmatpush1.bf16.xpose.msra.mxu0 0
      %2768 = vmatprep.subr.bf16.mxu0 0
      %2769 = vmatpush1.bf16.xpose.msra.mxu0 0
      %2770 = vmatprep.subr.bf16.mxu0 0
      %2771 = vmatpush1.bf16.xpose.msra.mxu0 0
      %2772 = vmatprep.subr.bf16.mxu0 0
      %2773 = vmatpush1.bf16.xpose.msra.mxu0 0
      %2774 = vmatprep.subr.bf16.mxu0 0
      %2775 = vmatpush1.bf16.xpose.msra.mxu0 0
      %2776 = vmatprep.subr.bf16.mxu0 0
      %2777 = vmatpush1.bf16.xpose.msra.mxu0 0
      %2778 = vmatprep.subr.bf16.mxu0 0
      %2779 = vmatpush1.bf16.xpose.msra.mxu0 0
      %2780 = vmatprep.subr.bf16.mxu0 0
      %2781 = vmatpush1.bf16.xpose.msra.mxu0 0
      %2782 = vmatprep.subr.bf16.mxu0 0
      %2783 = vmatpush1.bf16.xpose.msra.mxu0 0
      %2784 = vmatprep.mubr.bf16.mxu0 0
      %2785 = vmatmul.mubr.bf16.gmra.mrb[0].mxu0 %v2747
      %v2786 = vpop.f32.mrb[0].mxu0
      %v2787 = vadd.f32 0.0, %v2786
      %v2788 = vpop.f32.mrb[0].mxu0
      %v2789 = vpop.f32.mrb[0].mxu0
      %v2790 = vpop.f32.mrb[0].mxu0
      %2791 = vdwg.mxu0
      %2792 = vrot.lane.b32.xlu0 %v648, 112
      %v2793 = vpop.permute.xlu0 %2792
      %2794 = vrot.lane.b32.xlu0 %v881, 80
      %v2795 = vpop.permute.xlu0 %2794
      %v2797 = vsel %vm687, %v2793, 0
      %v2800 = vsel %vm687, %v2795, 0
      %2802 = vmatprep.subr.bf16.mxu0 0
      %2803 = vmatpush1.bf16.xpose.msra.mxu0 %v2800
      %2804 = vmatprep.subr.bf16.mxu0 0
      %2805 = vmatpush1.bf16.xpose.msra.mxu0 0
      %2806 = vmatprep.subr.bf16.mxu0 0
      %2807 = vmatpush1.bf16.xpose.msra.mxu0 0
      %2808 = vmatprep.subr.bf16.mxu0 0
      %2809 = vmatpush1.bf16.xpose.msra.mxu0 0
      %2810 = vmatprep.subr.bf16.mxu0 0
      %2811 = vmatpush1.bf16.xpose.msra.mxu0 0
      %2812 = vmatprep.subr.bf16.mxu0 0
      %2813 = vmatpush1.bf16.xpose.msra.mxu0 0
      %2814 = vmatprep.subr.bf16.mxu0 0
      %2815 = vmatpush1.bf16.xpose.msra.mxu0 0
      %2816 = vmatprep.subr.bf16.mxu0 0
      %2817 = vmatpush1.bf16.xpose.msra.mxu0 0
      %2818 = vmatprep.subr.bf16.mxu0 0
      %2819 = vmatpush1.bf16.xpose.msra.mxu0 0
      %2820 = vmatprep.subr.bf16.mxu0 0
      %2821 = vmatpush1.bf16.xpose.msra.mxu0 0
      %2822 = vmatprep.subr.bf16.mxu0 0
      %2823 = vmatpush1.bf16.xpose.msra.mxu0 0
      %2824 = vmatprep.subr.bf16.mxu0 0
      %2825 = vmatpush1.bf16.xpose.msra.mxu0 0
      %2826 = vmatprep.subr.bf16.mxu0 0
      %2827 = vmatpush1.bf16.xpose.msra.mxu0 0
      %2828 = vmatprep.subr.bf16.mxu0 0
      %2829 = vmatpush1.bf16.xpose.msra.mxu0 0
      %2830 = vmatprep.subr.bf16.mxu0 0
      %2831 = vmatpush1.bf16.xpose.msra.mxu0 0
      %2832 = vmatprep.subr.bf16.mxu0 0
      %2833 = vmatpush1.bf16.xpose.msra.mxu0 0
      %2834 = vmatprep.mubr.bf16.mxu0 0
      %2835 = vmatmul.mubr.bf16.gmra.mrb[0].mxu0 %v2797
      %v2836 = vpop.f32.mrb[0].mxu0
      %v2837 = vadd.f32 0.0, %v2836
      %v2838 = vpop.f32.mrb[0].mxu0
      %v2839 = vpop.f32.mrb[0].mxu0
      %v2840 = vpop.f32.mrb[0].mxu0
      %2841 = vdwg.mxu0
      %2842 = vrot.lane.b32.xlu0 %v649, 112
      %v2843 = vpop.permute.xlu0 %2842
      %2844 = vrot.lane.b32.xlu0 %v930, 80
      %v2845 = vpop.permute.xlu0 %2844
      %v2847 = vsel %vm687, %v2843, 0
      %v2850 = vsel %vm687, %v2845, 0
      %2852 = vmatprep.subr.bf16.mxu0 0
      %2853 = vmatpush1.bf16.xpose.msra.mxu0 %v2850
      %2854 = vmatprep.subr.bf16.mxu0 0
      %2855 = vmatpush1.bf16.xpose.msra.mxu0 0
      %2856 = vmatprep.subr.bf16.mxu0 0
      %2857 = vmatpush1.bf16.xpose.msra.mxu0 0
      %2858 = vmatprep.subr.bf16.mxu0 0
      %2859 = vmatpush1.bf16.xpose.msra.mxu0 0
      %2860 = vmatprep.subr.bf16.mxu0 0
      %2861 = vmatpush1.bf16.xpose.msra.mxu0 0
      %2862 = vmatprep.subr.bf16.mxu0 0
      %2863 = vmatpush1.bf16.xpose.msra.mxu0 0
      %2864 = vmatprep.subr.bf16.mxu0 0
      %2865 = vmatpush1.bf16.xpose.msra.mxu0 0
      %2866 = vmatprep.subr.bf16.mxu0 0
      %2867 = vmatpush1.bf16.xpose.msra.mxu0 0
      %2868 = vmatprep.subr.bf16.mxu0 0
      %2869 = vmatpush1.bf16.xpose.msra.mxu0 0
      %2870 = vmatprep.subr.bf16.mxu0 0
      %2871 = vmatpush1.bf16.xpose.msra.mxu0 0
      %2872 = vmatprep.subr.bf16.mxu0 0
      %2873 = vmatpush1.bf16.xpose.msra.mxu0 0
      %2874 = vmatprep.subr.bf16.mxu0 0
      %2875 = vmatpush1.bf16.xpose.msra.mxu0 0
      %2876 = vmatprep.subr.bf16.mxu0 0
      %2877 = vmatpush1.bf16.xpose.msra.mxu0 0
      %2878 = vmatprep.subr.bf16.mxu0 0
      %2879 = vmatpush1.bf16.xpose.msra.mxu0 0
      %2880 = vmatprep.subr.bf16.mxu0 0
      %2881 = vmatpush1.bf16.xpose.msra.mxu0 0
      %2882 = vmatprep.subr.bf16.mxu0 0
      %2883 = vmatpush1.bf16.xpose.msra.mxu0 0
      %2884 = vmatprep.mubr.bf16.mxu0 0
      %2885 = vmatmul.mubr.bf16.gmra.mrb[0].mxu0 %v2847
      %v2886 = vpop.f32.mrb[0].mxu0
      %v2887 = vadd.f32 0.0, %v2886
      %v2888 = vpop.f32.mrb[0].mxu0
      %v2889 = vpop.f32.mrb[0].mxu0
      %v2890 = vpop.f32.mrb[0].mxu0
      %2891 = vdwg.mxu0
      %2892 = vrot.lane.b32.xlu0 %v650, 112
      %v2893 = vpop.permute.xlu0 %2892
      %2894 = vrot.lane.b32.xlu0 %v979, 80
      %v2895 = vpop.permute.xlu0 %2894
      %v2897 = vsel %vm687, %v2893, 0
      %v2900 = vsel %vm687, %v2895, 0
      %2902 = vmatprep.subr.bf16.mxu0 0
      %2903 = vmatpush1.bf16.xpose.msra.mxu0 %v2900
      %2904 = vmatprep.subr.bf16.mxu0 0
      %2905 = vmatpush1.bf16.xpose.msra.mxu0 0
      %2906 = vmatprep.subr.bf16.mxu0 0
      %2907 = vmatpush1.bf16.xpose.msra.mxu0 0
      %2908 = vmatprep.subr.bf16.mxu0 0
      %2909 = vmatpush1.bf16.xpose.msra.mxu0 0
      %2910 = vmatprep.subr.bf16.mxu0 0
      %2911 = vmatpush1.bf16.xpose.msra.mxu0 0
      %2912 = vmatprep.subr.bf16.mxu0 0
      %2913 = vmatpush1.bf16.xpose.msra.mxu0 0
      %2914 = vmatprep.subr.bf16.mxu0 0
      %2915 = vmatpush1.bf16.xpose.msra.mxu0 0
      %2916 = vmatprep.subr.bf16.mxu0 0
      %2917 = vmatpush1.bf16.xpose.msra.mxu0 0
      %2918 = vmatprep.subr.bf16.mxu0 0
      %2919 = vmatpush1.bf16.xpose.msra.mxu0 0
      %2920 = vmatprep.subr.bf16.mxu0 0
      %2921 = vmatpush1.bf16.xpose.msra.mxu0 0
      %2922 = vmatprep.subr.bf16.mxu0 0
      %2923 = vmatpush1.bf16.xpose.msra.mxu0 0
      %2924 = vmatprep.subr.bf16.mxu0 0
      %2925 = vmatpush1.bf16.xpose.msra.mxu0 0
      %2926 = vmatprep.subr.bf16.mxu0 0
      %2927 = vmatpush1.bf16.xpose.msra.mxu0 0
      %2928 = vmatprep.subr.bf16.mxu0 0
      %2929 = vmatpush1.bf16.xpose.msra.mxu0 0
      %2930 = vmatprep.subr.bf16.mxu0 0
      %2931 = vmatpush1.bf16.xpose.msra.mxu0 0
      %2932 = vmatprep.subr.bf16.mxu0 0
      %2933 = vmatpush1.bf16.xpose.msra.mxu0 0
      %2934 = vmatprep.mubr.bf16.mxu0 0
      %2935 = vmatmul.mubr.bf16.gmra.mrb[0].mxu0 %v2897
      %v2936 = vpop.f32.mrb[0].mxu0
      %v2937 = vadd.f32 0.0, %v2936
      %v2938 = vpop.f32.mrb[0].mxu0
      %v2939 = vpop.f32.mrb[0].mxu0
      %v2940 = vpop.f32.mrb[0].mxu0
      %2941 = vdwg.mxu0
      %2942 = vrot.lane.b32.xlu0 %v651, 112
      %v2943 = vpop.permute.xlu0 %2942
      %2944 = vrot.lane.b32.xlu0 %v1028, 80
      %v2945 = vpop.permute.xlu0 %2944
      %v2947 = vsel %vm687, %v2943, 0
      %v2950 = vsel %vm687, %v2945, 0
      %2952 = vmatprep.subr.bf16.mxu0 0
      %2953 = vmatpush1.bf16.xpose.msra.mxu0 %v2950
      %2954 = vmatprep.subr.bf16.mxu0 0
      %2955 = vmatpush1.bf16.xpose.msra.mxu0 0
      %2956 = vmatprep.subr.bf16.mxu0 0
      %2957 = vmatpush1.bf16.xpose.msra.mxu0 0
      %2958 = vmatprep.subr.bf16.mxu0 0
      %2959 = vmatpush1.bf16.xpose.msra.mxu0 0
      %2960 = vmatprep.subr.bf16.mxu0 0
      %2961 = vmatpush1.bf16.xpose.msra.mxu0 0
      %2962 = vmatprep.subr.bf16.mxu0 0
      %2963 = vmatpush1.bf16.xpose.msra.mxu0 0
      %2964 = vmatprep.subr.bf16.mxu0 0
      %2965 = vmatpush1.bf16.xpose.msra.mxu0 0
      %2966 = vmatprep.subr.bf16.mxu0 0
      %2967 = vmatpush1.bf16.xpose.msra.mxu0 0
      %2968 = vmatprep.subr.bf16.mxu0 0
      %2969 = vmatpush1.bf16.xpose.msra.mxu0 0
      %2970 = vmatprep.subr.bf16.mxu0 0
      %2971 = vmatpush1.bf16.xpose.msra.mxu0 0
      %2972 = vmatprep.subr.bf16.mxu0 0
      %2973 = vmatpush1.bf16.xpose.msra.mxu0 0
      %2974 = vmatprep.subr.bf16.mxu0 0
      %2975 = vmatpush1.bf16.xpose.msra.mxu0 0
      %2976 = vmatprep.subr.bf16.mxu0 0
      %2977 = vmatpush1.bf16.xpose.msra.mxu0 0
      %2978 = vmatprep.subr.bf16.mxu0 0
      %2979 = vmatpush1.bf16.xpose.msra.mxu0 0
      %2980 = vmatprep.subr.bf16.mxu0 0
      %2981 = vmatpush1.bf16.xpose.msra.mxu0 0
      %2982 = vmatprep.subr.bf16.mxu0 0
      %2983 = vmatpush1.bf16.xpose.msra.mxu0 0
      %2984 = vmatprep.mubr.bf16.mxu0 0
      %2985 = vmatmul.mubr.bf16.gmra.mrb[0].mxu0 %v2947
      %v2986 = vpop.f32.mrb[0].mxu0
      %v2987 = vadd.f32 0.0, %v2986
      %v2988 = vpop.f32.mrb[0].mxu0
      %v2989 = vpop.f32.mrb[0].mxu0
      %v2990 = vpop.f32.mrb[0].mxu0
      %2991 = vdwg.mxu0
      %v2992 = vsel %vm687, %v2637, -inf
      %2993 = vmax.xlane.f32.xlu0 %v2992
      %v2994 = vpop.xlane.xlu0 %2993
      %v2995 = vsel %vm687, %v2687, -inf
      %2996 = vmax.xlane.f32.xlu0 %v2995
      %v2997 = vpop.xlane.xlu0 %2996
      %v2998 = vsel %vm687, %v2737, -inf
      %2999 = vmax.xlane.f32.xlu0 %v2998
      %v3000 = vpop.xlane.xlu0 %2999
      %v3001 = vsel %vm687, %v2787, -inf
      %3002 = vmax.xlane.f32.xlu0 %v3001
      %v3003 = vpop.xlane.xlu0 %3002
      %v3004 = vsel %vm687, %v2837, -inf
      %3005 = vmax.xlane.f32.xlu0 %v3004
      %v3006 = vpop.xlane.xlu0 %3005
      %v3007 = vsel %vm687, %v2887, -inf
      %3008 = vmax.xlane.f32.xlu0 %v3007
      %v3009 = vpop.xlane.xlu0 %3008
      %v3010 = vsel %vm687, %v2937, -inf
      %3011 = vmax.xlane.f32.xlu0 %v3010
      %v3012 = vpop.xlane.xlu0 %3011
      %v3013 = vsel %vm687, %v2987, -inf
      %3014 = vmax.xlane.f32.xlu0 %v3013
      %v3015 = vpop.xlane.xlu0 %3014
      %v3016 = vsub.f32 %v2637, %v2994
      %v3017 = vsub.f32 %v2687, %v2997
      %v3018 = vsub.f32 %v2737, %v3000
      %v3019 = vsub.f32 %v2787, %v3003
      %v3020 = vsub.f32 %v2837, %v3006
      %v3021 = vsub.f32 %v2887, %v3009
      %v3022 = vsub.f32 %v2937, %v3012
      %v3023 = vsub.f32 %v2987, %v3015
      %v3024 = vmul.f32 %v3016, 1.442695
      %v3025 = vpow.pop %v3024
      %v3026 = vmul.f32 %v3017, 1.442695
      %v3027 = vpow.pop %v3026
      %v3028 = vmul.f32 %v3018, 1.442695
      %v3029 = vpow.pop %v3028
      %v3030 = vmul.f32 %v3019, 1.442695
      %v3031 = vpow.pop %v3030
      %v3032 = vmul.f32 %v3020, 1.442695
      %v3033 = vpow.pop %v3032
      %v3034 = vmul.f32 %v3021, 1.442695
      %v3035 = vpow.pop %v3034
      %v3036 = vmul.f32 %v3022, 1.442695
      %v3037 = vpow.pop %v3036
      %v3038 = vmul.f32 %v3023, 1.442695
      %v3039 = vpow.pop %v3038
      %v3040 = vsel %vm687, %v3025, 0.0
      %3041 = vadd.xlane.f32.xlu0 %v3040
      %v3042 = vpop.xlane.xlu0 %3041
      %v3043 = vsel %vm687, %v3027, 0.0
      %3044 = vadd.xlane.f32.xlu0 %v3043
      %v3045 = vpop.xlane.xlu0 %3044
      %v3046 = vsel %vm687, %v3029, 0.0
      %3047 = vadd.xlane.f32.xlu0 %v3046
      %v3048 = vpop.xlane.xlu0 %3047
      %v3049 = vsel %vm687, %v3031, 0.0
      %3050 = vadd.xlane.f32.xlu0 %v3049
      %v3051 = vpop.xlane.xlu0 %3050
      %v3052 = vsel %vm687, %v3033, 0.0
      %3053 = vadd.xlane.f32.xlu0 %v3052
      %v3054 = vpop.xlane.xlu0 %3053
      %v3055 = vsel %vm687, %v3035, 0.0
      %3056 = vadd.xlane.f32.xlu0 %v3055
      %v3057 = vpop.xlane.xlu0 %3056
      %v3058 = vsel %vm687, %v3037, 0.0
      %3059 = vadd.xlane.f32.xlu0 %v3058
      %v3060 = vpop.xlane.xlu0 %3059
      %v3061 = vsel %vm687, %v3039, 0.0
      %3062 = vadd.xlane.f32.xlu0 %v3061
      %v3063 = vpop.xlane.xlu0 %3062
      %v3064 = vrcp.pop %v3042
      %v3065 = vrcp.pop %v3045
      %v3066 = vrcp.pop %v3048
      %v3067 = vrcp.pop %v3051
      %v3068 = vrcp.pop %v3054
      %v3069 = vrcp.pop %v3057
      %v3070 = vrcp.pop %v3060
      %v3071 = vrcp.pop %v3063
      %v3072 = vmul.f32 %v3025, %v3064
      %v3073 = vmul.f32 %v3027, %v3065
      %v3074 = vmul.f32 %v3029, %v3066
      %v3075 = vmul.f32 %v3031, %v3067
      %v3076 = vmul.f32 %v3033, %v3068
      %v3077 = vmul.f32 %v3035, %v3069
      %v3078 = vmul.f32 %v3037, %v3070
      %v3079 = vmul.f32 %v3039, %v3071
      %v3080 = vpack.c.bf16 %v3072, %v3072
      %v3081 = vpack.c.bf16 %v3073, %v3073
      %v3082 = vpack.c.bf16 %v3074, %v3074
      %v3083 = vpack.c.bf16 %v3075, %v3075
      %v3084 = vpack.c.bf16 %v3076, %v3076
      %v3085 = vpack.c.bf16 %v3077, %v3077
      %v3086 = vpack.c.bf16 %v3078, %v3078
      %v3087 = vpack.c.bf16 %v3079, %v3079
      %3088 = vrot.lane.b32.xlu0 %v676, 112
      %v3089 = vpop.permute.xlu0 %3088
      %v3091 = vsel %vm687, %v3080, 0
      %v3094 = vsel %vm1176, %v3089, 0
      %3096 = vmatprep.subr.bf16.mxu0 0
      %3097 = vmatpush1.bf16.msra.mxu0 %v3094
      %3098 = vmatprep.subr.bf16.mxu0 0
      %3099 = vmatpush1.bf16.msra.mxu0 0
      %3100 = vmatprep.subr.bf16.mxu0 0
      %3101 = vmatpush1.bf16.msra.mxu0 0
      %3102 = vmatprep.subr.bf16.mxu0 0
      %3103 = vmatpush1.bf16.msra.mxu0 0
      %3104 = vmatprep.subr.bf16.mxu0 0
      %3105 = vmatpush1.bf16.msra.mxu0 0
      %3106 = vmatprep.subr.bf16.mxu0 0
      %3107 = vmatpush1.bf16.msra.mxu0 0
      %3108 = vmatprep.subr.bf16.mxu0 0
      %3109 = vmatpush1.bf16.msra.mxu0 0
      %3110 = vmatprep.subr.bf16.mxu0 0
      %3111 = vmatpush1.bf16.msra.mxu0 0
      %3112 = vmatprep.subr.bf16.mxu0 0
      %3113 = vmatpush1.bf16.msra.mxu0 0
      %3114 = vmatprep.subr.bf16.mxu0 0
      %3115 = vmatpush1.bf16.msra.mxu0 0
      %3116 = vmatprep.subr.bf16.mxu0 0
      %3117 = vmatpush1.bf16.msra.mxu0 0
      %3118 = vmatprep.subr.bf16.mxu0 0
      %3119 = vmatpush1.bf16.msra.mxu0 0
      %3120 = vmatprep.subr.bf16.mxu0 0
      %3121 = vmatpush1.bf16.msra.mxu0 0
      %3122 = vmatprep.subr.bf16.mxu0 0
      %3123 = vmatpush1.bf16.msra.mxu0 0
      %3124 = vmatprep.subr.bf16.mxu0 0
      %3125 = vmatpush1.bf16.msra.mxu0 0
      %3126 = vmatprep.subr.bf16.mxu0 0
      %3127 = vmatpush1.bf16.msra.mxu0 0
      %3128 = vmatprep.mubr.bf16.mxu0 0
      %3129 = vmatmul.mubr.bf16.gmra.mrb[0].mxu0 %v3091
      %v3130 = vpop.f32.mrb[0].mxu0
      %v3131 = vadd.f32 0.0, %v3130
      %v3132 = vpop.f32.mrb[0].mxu0
      %v3133 = vpop.f32.mrb[0].mxu0
      %v3134 = vpop.f32.mrb[0].mxu0
      %3135 = vdwg.mxu0
      %3136 = vrot.lane.b32.xlu0 %v677, 112
      %v3137 = vpop.permute.xlu0 %3136
      %v3139 = vsel %vm687, %v3081, 0
      %v3142 = vsel %vm1176, %v3137, 0
      %3144 = vmatprep.subr.bf16.mxu0 0
      %3145 = vmatpush1.bf16.msra.mxu0 %v3142
      %3146 = vmatprep.subr.bf16.mxu0 0
      %3147 = vmatpush1.bf16.msra.mxu0 0
      %3148 = vmatprep.subr.bf16.mxu0 0
      %3149 = vmatpush1.bf16.msra.mxu0 0
      %3150 = vmatprep.subr.bf16.mxu0 0
      %3151 = vmatpush1.bf16.msra.mxu0 0
      %3152 = vmatprep.subr.bf16.mxu0 0
      %3153 = vmatpush1.bf16.msra.mxu0 0
      %3154 = vmatprep.subr.bf16.mxu0 0
      %3155 = vmatpush1.bf16.msra.mxu0 0
      %3156 = vmatprep.subr.bf16.mxu0 0
      %3157 = vmatpush1.bf16.msra.mxu0 0
      %3158 = vmatprep.subr.bf16.mxu0 0
      %3159 = vmatpush1.bf16.msra.mxu0 0
      %3160 = vmatprep.subr.bf16.mxu0 0
      %3161 = vmatpush1.bf16.msra.mxu0 0
      %3162 = vmatprep.subr.bf16.mxu0 0
      %3163 = vmatpush1.bf16.msra.mxu0 0
      %3164 = vmatprep.subr.bf16.mxu0 0
      %3165 = vmatpush1.bf16.msra.mxu0 0
      %3166 = vmatprep.subr.bf16.mxu0 0
      %3167 = vmatpush1.bf16.msra.mxu0 0
      %3168 = vmatprep.subr.bf16.mxu0 0
      %3169 = vmatpush1.bf16.msra.mxu0 0
      %3170 = vmatprep.subr.bf16.mxu0 0
      %3171 = vmatpush1.bf16.msra.mxu0 0
      %3172 = vmatprep.subr.bf16.mxu0 0
      %3173 = vmatpush1.bf16.msra.mxu0 0
      %3174 = vmatprep.subr.bf16.mxu0 0
      %3175 = vmatpush1.bf16.msra.mxu0 0
      %3176 = vmatprep.mubr.bf16.mxu0 0
      %3177 = vmatmul.mubr.bf16.gmra.mrb[0].mxu0 %v3139
      %v3178 = vpop.f32.mrb[0].mxu0
      %v3179 = vadd.f32 0.0, %v3178
      %v3180 = vpop.f32.mrb[0].mxu0
      %v3181 = vpop.f32.mrb[0].mxu0
      %v3182 = vpop.f32.mrb[0].mxu0
      %3183 = vdwg.mxu0
      %3184 = vrot.lane.b32.xlu0 %v678, 112
      %v3185 = vpop.permute.xlu0 %3184
      %v3187 = vsel %vm687, %v3082, 0
      %v3190 = vsel %vm1176, %v3185, 0
      %3192 = vmatprep.subr.bf16.mxu0 0
      %3193 = vmatpush1.bf16.msra.mxu0 %v3190
      %3194 = vmatprep.subr.bf16.mxu0 0
      %3195 = vmatpush1.bf16.msra.mxu0 0
      %3196 = vmatprep.subr.bf16.mxu0 0
      %3197 = vmatpush1.bf16.msra.mxu0 0
      %3198 = vmatprep.subr.bf16.mxu0 0
      %3199 = vmatpush1.bf16.msra.mxu0 0
      %3200 = vmatprep.subr.bf16.mxu0 0
      %3201 = vmatpush1.bf16.msra.mxu0 0
      %3202 = vmatprep.subr.bf16.mxu0 0
      %3203 = vmatpush1.bf16.msra.mxu0 0
      %3204 = vmatprep.subr.bf16.mxu0 0
      %3205 = vmatpush1.bf16.msra.mxu0 0
      %3206 = vmatprep.subr.bf16.mxu0 0
      %3207 = vmatpush1.bf16.msra.mxu0 0
      %3208 = vmatprep.subr.bf16.mxu0 0
      %3209 = vmatpush1.bf16.msra.mxu0 0
      %3210 = vmatprep.subr.bf16.mxu0 0
      %3211 = vmatpush1.bf16.msra.mxu0 0
      %3212 = vmatprep.subr.bf16.mxu0 0
      %3213 = vmatpush1.bf16.msra.mxu0 0
      %3214 = vmatprep.subr.bf16.mxu0 0
      %3215 = vmatpush1.bf16.msra.mxu0 0
      %3216 = vmatprep.subr.bf16.mxu0 0
      %3217 = vmatpush1.bf16.msra.mxu0 0
      %3218 = vmatprep.subr.bf16.mxu0 0
      %3219 = vmatpush1.bf16.msra.mxu0 0
      %3220 = vmatprep.subr.bf16.mxu0 0
      %3221 = vmatpush1.bf16.msra.mxu0 0
      %3222 = vmatprep.subr.bf16.mxu0 0
      %3223 = vmatpush1.bf16.msra.mxu0 0
      %3224 = vmatprep.mubr.bf16.mxu0 0
      %3225 = vmatmul.mubr.bf16.gmra.mrb[0].mxu0 %v3187
      %v3226 = vpop.f32.mrb[0].mxu0
      %v3227 = vadd.f32 0.0, %v3226
      %v3228 = vpop.f32.mrb[0].mxu0
      %v3229 = vpop.f32.mrb[0].mxu0
      %v3230 = vpop.f32.mrb[0].mxu0
      %3231 = vdwg.mxu0
      %3232 = vrot.lane.b32.xlu0 %v679, 112
      %v3233 = vpop.permute.xlu0 %3232
      %v3235 = vsel %vm687, %v3083, 0
      %v3238 = vsel %vm1176, %v3233, 0
      %3240 = vmatprep.subr.bf16.mxu0 0
      %3241 = vmatpush1.bf16.msra.mxu0 %v3238
      %3242 = vmatprep.subr.bf16.mxu0 0
      %3243 = vmatpush1.bf16.msra.mxu0 0
      %3244 = vmatprep.subr.bf16.mxu0 0
      %3245 = vmatpush1.bf16.msra.mxu0 0
      %3246 = vmatprep.subr.bf16.mxu0 0
      %3247 = vmatpush1.bf16.msra.mxu0 0
      %3248 = vmatprep.subr.bf16.mxu0 0
      %3249 = vmatpush1.bf16.msra.mxu0 0
      %3250 = vmatprep.subr.bf16.mxu0 0
      %3251 = vmatpush1.bf16.msra.mxu0 0
      %3252 = vmatprep.subr.bf16.mxu0 0
      %3253 = vmatpush1.bf16.msra.mxu0 0
      %3254 = vmatprep.subr.bf16.mxu0 0
      %3255 = vmatpush1.bf16.msra.mxu0 0
      %3256 = vmatprep.subr.bf16.mxu0 0
      %3257 = vmatpush1.bf16.msra.mxu0 0
      %3258 = vmatprep.subr.bf16.mxu0 0
      %3259 = vmatpush1.bf16.msra.mxu0 0
      %3260 = vmatprep.subr.bf16.mxu0 0
      %3261 = vmatpush1.bf16.msra.mxu0 0
      %3262 = vmatprep.subr.bf16.mxu0 0
      %3263 = vmatpush1.bf16.msra.mxu0 0
      %3264 = vmatprep.subr.bf16.mxu0 0
      %3265 = vmatpush1.bf16.msra.mxu0 0
      %3266 = vmatprep.subr.bf16.mxu0 0
      %3267 = vmatpush1.bf16.msra.mxu0 0
      %3268 = vmatprep.subr.bf16.mxu0 0
      %3269 = vmatpush1.bf16.msra.mxu0 0
      %3270 = vmatprep.subr.bf16.mxu0 0
      %3271 = vmatpush1.bf16.msra.mxu0 0
      %3272 = vmatprep.mubr.bf16.mxu0 0
      %3273 = vmatmul.mubr.bf16.gmra.mrb[0].mxu0 %v3235
      %v3274 = vpop.f32.mrb[0].mxu0
      %v3275 = vadd.f32 0.0, %v3274
      %v3276 = vpop.f32.mrb[0].mxu0
      %v3277 = vpop.f32.mrb[0].mxu0
      %v3278 = vpop.f32.mrb[0].mxu0
      %3279 = vdwg.mxu0
      %3280 = vrot.lane.b32.xlu0 %v680, 112
      %v3281 = vpop.permute.xlu0 %3280
      %v3283 = vsel %vm687, %v3084, 0
      %v3286 = vsel %vm1176, %v3281, 0
      %3288 = vmatprep.subr.bf16.mxu0 0
      %3289 = vmatpush1.bf16.msra.mxu0 %v3286
      %3290 = vmatprep.subr.bf16.mxu0 0
      %3291 = vmatpush1.bf16.msra.mxu0 0
      %3292 = vmatprep.subr.bf16.mxu0 0
      %3293 = vmatpush1.bf16.msra.mxu0 0
      %3294 = vmatprep.subr.bf16.mxu0 0
      %3295 = vmatpush1.bf16.msra.mxu0 0
      %3296 = vmatprep.subr.bf16.mxu0 0
      %3297 = vmatpush1.bf16.msra.mxu0 0
      %3298 = vmatprep.subr.bf16.mxu0 0
      %3299 = vmatpush1.bf16.msra.mxu0 0
      %3300 = vmatprep.subr.bf16.mxu0 0
      %3301 = vmatpush1.bf16.msra.mxu0 0
      %3302 = vmatprep.subr.bf16.mxu0 0
      %3303 = vmatpush1.bf16.msra.mxu0 0
      %3304 = vmatprep.subr.bf16.mxu0 0
      %3305 = vmatpush1.bf16.msra.mxu0 0
      %3306 = vmatprep.subr.bf16.mxu0 0
      %3307 = vmatpush1.bf16.msra.mxu0 0
      %3308 = vmatprep.subr.bf16.mxu0 0
      %3309 = vmatpush1.bf16.msra.mxu0 0
      %3310 = vmatprep.subr.bf16.mxu0 0
      %3311 = vmatpush1.bf16.msra.mxu0 0
      %3312 = vmatprep.subr.bf16.mxu0 0
      %3313 = vmatpush1.bf16.msra.mxu0 0
      %3314 = vmatprep.subr.bf16.mxu0 0
      %3315 = vmatpush1.bf16.msra.mxu0 0
      %3316 = vmatprep.subr.bf16.mxu0 0
      %3317 = vmatpush1.bf16.msra.mxu0 0
      %3318 = vmatprep.subr.bf16.mxu0 0
      %3319 = vmatpush1.bf16.msra.mxu0 0
      %3320 = vmatprep.mubr.bf16.mxu0 0
      %3321 = vmatmul.mubr.bf16.gmra.mrb[0].mxu0 %v3283
      %v3322 = vpop.f32.mrb[0].mxu0
      %v3323 = vadd.f32 0.0, %v3322
      %v3324 = vpop.f32.mrb[0].mxu0
      %v3325 = vpop.f32.mrb[0].mxu0
      %v3326 = vpop.f32.mrb[0].mxu0
      %3327 = vdwg.mxu0
      %3328 = vrot.lane.b32.xlu0 %v681, 112
      %v3329 = vpop.permute.xlu0 %3328
      %v3331 = vsel %vm687, %v3085, 0
      %v3334 = vsel %vm1176, %v3329, 0
      %3336 = vmatprep.subr.bf16.mxu0 0
      %3337 = vmatpush1.bf16.msra.mxu0 %v3334
      %3338 = vmatprep.subr.bf16.mxu0 0
      %3339 = vmatpush1.bf16.msra.mxu0 0
      %3340 = vmatprep.subr.bf16.mxu0 0
      %3341 = vmatpush1.bf16.msra.mxu0 0
      %3342 = vmatprep.subr.bf16.mxu0 0
      %3343 = vmatpush1.bf16.msra.mxu0 0
      %3344 = vmatprep.subr.bf16.mxu0 0
      %3345 = vmatpush1.bf16.msra.mxu0 0
      %3346 = vmatprep.subr.bf16.mxu0 0
      %3347 = vmatpush1.bf16.msra.mxu0 0
      %3348 = vmatprep.subr.bf16.mxu0 0
      %3349 = vmatpush1.bf16.msra.mxu0 0
      %3350 = vmatprep.subr.bf16.mxu0 0
      %3351 = vmatpush1.bf16.msra.mxu0 0
      %3352 = vmatprep.subr.bf16.mxu0 0
      %3353 = vmatpush1.bf16.msra.mxu0 0
      %3354 = vmatprep.subr.bf16.mxu0 0
      %3355 = vmatpush1.bf16.msra.mxu0 0
      %3356 = vmatprep.subr.bf16.mxu0 0
      %3357 = vmatpush1.bf16.msra.mxu0 0
      %3358 = vmatprep.subr.bf16.mxu0 0
      %3359 = vmatpush1.bf16.msra.mxu0 0
      %3360 = vmatprep.subr.bf16.mxu0 0
      %3361 = vmatpush1.bf16.msra.mxu0 0
      %3362 = vmatprep.subr.bf16.mxu0 0
      %3363 = vmatpush1.bf16.msra.mxu0 0
      %3364 = vmatprep.subr.bf16.mxu0 0
      %3365 = vmatpush1.bf16.msra.mxu0 0
      %3366 = vmatprep.subr.bf16.mxu0 0
      %3367 = vmatpush1.bf16.msra.mxu0 0
      %3368 = vmatprep.mubr.bf16.mxu0 0
      %3369 = vmatmul.mubr.bf16.gmra.mrb[0].mxu0 %v3331
      %v3370 = vpop.f32.mrb[0].mxu0
      %v3371 = vadd.f32 0.0, %v3370
      %v3372 = vpop.f32.mrb[0].mxu0
      %v3373 = vpop.f32.mrb[0].mxu0
      %v3374 = vpop.f32.mrb[0].mxu0
      %3375 = vdwg.mxu0
      %3376 = vrot.lane.b32.xlu0 %v682, 112
      %v3377 = vpop.permute.xlu0 %3376
      %v3379 = vsel %vm687, %v3086, 0
      %v3382 = vsel %vm1176, %v3377, 0
      %3384 = vmatprep.subr.bf16.mxu0 0
      %3385 = vmatpush1.bf16.msra.mxu0 %v3382
      %3386 = vmatprep.subr.bf16.mxu0 0
      %3387 = vmatpush1.bf16.msra.mxu0 0
      %3388 = vmatprep.subr.bf16.mxu0 0
      %3389 = vmatpush1.bf16.msra.mxu0 0
      %3390 = vmatprep.subr.bf16.mxu0 0
      %3391 = vmatpush1.bf16.msra.mxu0 0
      %3392 = vmatprep.subr.bf16.mxu0 0
      %3393 = vmatpush1.bf16.msra.mxu0 0
      %3394 = vmatprep.subr.bf16.mxu0 0
      %3395 = vmatpush1.bf16.msra.mxu0 0
      %3396 = vmatprep.subr.bf16.mxu0 0
      %3397 = vmatpush1.bf16.msra.mxu0 0
      %3398 = vmatprep.subr.bf16.mxu0 0
      %3399 = vmatpush1.bf16.msra.mxu0 0
      %3400 = vmatprep.subr.bf16.mxu0 0
      %3401 = vmatpush1.bf16.msra.mxu0 0
      %3402 = vmatprep.subr.bf16.mxu0 0
      %3403 = vmatpush1.bf16.msra.mxu0 0
      %3404 = vmatprep.subr.bf16.mxu0 0
      %3405 = vmatpush1.bf16.msra.mxu0 0
      %3406 = vmatprep.subr.bf16.mxu0 0
      %3407 = vmatpush1.bf16.msra.mxu0 0
      %3408 = vmatprep.subr.bf16.mxu0 0
      %3409 = vmatpush1.bf16.msra.mxu0 0
      %3410 = vmatprep.subr.bf16.mxu0 0
      %3411 = vmatpush1.bf16.msra.mxu0 0
      %3412 = vmatprep.subr.bf16.mxu0 0
      %3413 = vmatpush1.bf16.msra.mxu0 0
      %3414 = vmatprep.subr.bf16.mxu0 0
      %3415 = vmatpush1.bf16.msra.mxu0 0
      %3416 = vmatprep.mubr.bf16.mxu0 0
      %3417 = vmatmul.mubr.bf16.gmra.mrb[0].mxu0 %v3379
      %v3418 = vpop.f32.mrb[0].mxu0
      %v3419 = vadd.f32 0.0, %v3418
      %v3420 = vpop.f32.mrb[0].mxu0
      %v3421 = vpop.f32.mrb[0].mxu0
      %v3422 = vpop.f32.mrb[0].mxu0
      %3423 = vdwg.mxu0
      %3424 = vrot.lane.b32.xlu0 %v683, 112
      %v3425 = vpop.permute.xlu0 %3424
      %v3427 = vsel %vm687, %v3087, 0
      %v3430 = vsel %vm1176, %v3425, 0
      %3432 = vmatprep.subr.bf16.mxu0 0
      %3433 = vmatpush1.bf16.msra.mxu0 %v3430
      %3434 = vmatprep.subr.bf16.mxu0 0
      %3435 = vmatpush1.bf16.msra.mxu0 0
      %3436 = vmatprep.subr.bf16.mxu0 0
      %3437 = vmatpush1.bf16.msra.mxu0 0
      %3438 = vmatprep.subr.bf16.mxu0 0
      %3439 = vmatpush1.bf16.msra.mxu0 0
      %3440 = vmatprep.subr.bf16.mxu0 0
      %3441 = vmatpush1.bf16.msra.mxu0 0
      %3442 = vmatprep.subr.bf16.mxu0 0
      %3443 = vmatpush1.bf16.msra.mxu0 0
      %3444 = vmatprep.subr.bf16.mxu0 0
      %3445 = vmatpush1.bf16.msra.mxu0 0
      %3446 = vmatprep.subr.bf16.mxu0 0
      %3447 = vmatpush1.bf16.msra.mxu0 0
      %3448 = vmatprep.subr.bf16.mxu0 0
      %3449 = vmatpush1.bf16.msra.mxu0 0
      %3450 = vmatprep.subr.bf16.mxu0 0
      %3451 = vmatpush1.bf16.msra.mxu0 0
      %3452 = vmatprep.subr.bf16.mxu0 0
      %3453 = vmatpush1.bf16.msra.mxu0 0
      %3454 = vmatprep.subr.bf16.mxu0 0
      %3455 = vmatpush1.bf16.msra.mxu0 0
      %3456 = vmatprep.subr.bf16.mxu0 0
      %3457 = vmatpush1.bf16.msra.mxu0 0
      %3458 = vmatprep.subr.bf16.mxu0 0
      %3459 = vmatpush1.bf16.msra.mxu0 0
      %3460 = vmatprep.subr.bf16.mxu0 0
      %3461 = vmatpush1.bf16.msra.mxu0 0
      %3462 = vmatprep.subr.bf16.mxu0 0
      %3463 = vmatpush1.bf16.msra.mxu0 0
      %3464 = vmatprep.mubr.bf16.mxu0 0
      %3465 = vmatmul.mubr.bf16.gmra.mrb[0].mxu0 %v3427
      %v3466 = vpop.f32.mrb[0].mxu0
      %v3467 = vadd.f32 0.0, %v3466
      %v3468 = vpop.f32.mrb[0].mxu0
      %v3469 = vpop.f32.mrb[0].mxu0
      %v3470 = vpop.f32.mrb[0].mxu0
      %3471 = vdwg.mxu0
      %v3472 = vpack.c.bf16 %v3179, %v3131
      %v3473 = vpack.c.bf16 %v3275, %v3227
      %v3474 = vpack.c.bf16 %v3371, %v3323
      %v3475 = vpack.c.bf16 %v3467, %v3419
      %v3476 = vld [vmem:[%s4 + $0x8] sm:$0xf]
      %v3478 = vsel %vm687, %v3472, 0
      %v3481 = vsel %vm687, %v3473, 0
      %v3484 = vsel %vm687, %v3474, 0
      %v3487 = vsel %vm687, %v3475, 0
      %v3490 = vsel %vm1176, %v3476, 0
      %3492 = vmatprep.subr.bf16.mxu0 0
      %3493 = vmatpush1.bf16.msra.mxu0 %v3490
      %3494 = vmatprep.subr.bf16.mxu0 0
      %3495 = vmatpush1.bf16.msra.mxu0 0
      %3496 = vmatprep.subr.bf16.mxu0 0
      %3497 = vmatpush1.bf16.msra.mxu0 0
      %3498 = vmatprep.subr.bf16.mxu0 0
      %3499 = vmatpush1.bf16.msra.mxu0 0
      %3500 = vmatprep.subr.bf16.mxu0 0
      %3501 = vmatpush1.bf16.msra.mxu0 0
      %3502 = vmatprep.subr.bf16.mxu0 0
      %3503 = vmatpush1.bf16.msra.mxu0 0
      %3504 = vmatprep.subr.bf16.mxu0 0
      %3505 = vmatpush1.bf16.msra.mxu0 0
      %3506 = vmatprep.subr.bf16.mxu0 0
      %3507 = vmatpush1.bf16.msra.mxu0 0
      %3508 = vmatprep.subr.bf16.mxu0 0
      %3509 = vmatpush1.bf16.msra.mxu0 0
      %3510 = vmatprep.subr.bf16.mxu0 0
      %3511 = vmatpush1.bf16.msra.mxu0 0
      %3512 = vmatprep.subr.bf16.mxu0 0
      %3513 = vmatpush1.bf16.msra.mxu0 0
      %3514 = vmatprep.subr.bf16.mxu0 0
      %3515 = vmatpush1.bf16.msra.mxu0 0
      %3516 = vmatprep.subr.bf16.mxu0 0
      %3517 = vmatpush1.bf16.msra.mxu0 0
      %3518 = vmatprep.subr.bf16.mxu0 0
      %3519 = vmatpush1.bf16.msra.mxu0 0
      %3520 = vmatprep.subr.bf16.mxu0 0
      %3521 = vmatpush1.bf16.msra.mxu0 0
      %3522 = vmatprep.subr.bf16.mxu0 0
      %3523 = vmatpush1.bf16.msra.mxu0 0
      %3524 = vmatprep.mubr.bf16.mxu0 0
      %3525 = vmatmul.mubr.bf16.gmra.mrb[0].mxu0 %v3478
      %v3526 = vpop.f32.mrb[0].mxu0
      %v3527 = vadd.f32 0.0, %v3526
      %v3528 = vpop.f32.mrb[0].mxu0
      %v3529 = vpop.f32.mrb[0].mxu0
      %v3530 = vadd.f32 0.0, %v3529
      %v3531 = vpop.f32.mrb[0].mxu0
      %3532 = vmatprep.mubr.bf16.mxu0 0
      %3533 = vmatmul.mubr.bf16.gmra.mrb[0].mxu0 %v3481
      %v3534 = vpop.f32.mrb[0].mxu0
      %v3535 = vadd.f32 0.0, %v3534
      %v3536 = vpop.f32.mrb[0].mxu0
      %v3537 = vpop.f32.mrb[0].mxu0
      %v3538 = vadd.f32 0.0, %v3537
      %v3539 = vpop.f32.mrb[0].mxu0
      %3540 = vmatprep.mubr.bf16.mxu0 0
      %3541 = vmatmul.mubr.bf16.gmra.mrb[0].mxu0 %v3484
      %v3542 = vpop.f32.mrb[0].mxu0
      %v3543 = vadd.f32 0.0, %v3542
      %v3544 = vpop.f32.mrb[0].mxu0
      %v3545 = vpop.f32.mrb[0].mxu0
      %v3546 = vadd.f32 0.0, %v3545
      %v3547 = vpop.f32.mrb[0].mxu0
      %3548 = vmatprep.mubr.bf16.mxu0 0
      %3549 = vmatmul.mubr.bf16.gmra.mrb[0].mxu0 %v3487
      %v3550 = vpop.f32.mrb[0].mxu0
      %v3551 = vadd.f32 0.0, %v3550
      %v3552 = vpop.f32.mrb[0].mxu0
      %v3553 = vpop.f32.mrb[0].mxu0
      %v3554 = vadd.f32 0.0, %v3553
      %v3555 = vpop.f32.mrb[0].mxu0
      %3556 = vdwg.mxu0
      %v3557 = vadd.f32 %v2562, %v3527
      %v3558 = vadd.f32 %v2565, %v3530
      %v3559 = vadd.f32 %v2570, %v3535
      %v3560 = vadd.f32 %v2573, %v3538
      %v3561 = vadd.f32 %v2578, %v3543
      %v3562 = vadd.f32 %v2581, %v3546
      %v3563 = vadd.f32 %v2586, %v3551
      %v3564 = vadd.f32 %v2589, %v3554
      %3565 = vrot.lane.b32.xlu0 %v644, 104
      %v3566 = vpop.permute.xlu0 %3565
      %3567 = vrot.lane.b32.xlu0 %v684, 72
      %v3568 = vpop.permute.xlu0 %3567
      %v3570 = vsel %vm687, %v3566, 0
      %v3573 = vsel %vm687, %v3568, 0
      %3575 = vmatprep.subr.bf16.mxu0 0
      %3576 = vmatpush1.bf16.xpose.msra.mxu0 %v3573
      %3577 = vmatprep.subr.bf16.mxu0 0
      %3578 = vmatpush1.bf16.xpose.msra.mxu0 0
      %3579 = vmatprep.subr.bf16.mxu0 0
      %3580 = vmatpush1.bf16.xpose.msra.mxu0 0
      %3581 = vmatprep.subr.bf16.mxu0 0
      %3582 = vmatpush1.bf16.xpose.msra.mxu0 0
      %3583 = vmatprep.subr.bf16.mxu0 0
      %3584 = vmatpush1.bf16.xpose.msra.mxu0 0
      %3585 = vmatprep.subr.bf16.mxu0 0
      %3586 = vmatpush1.bf16.xpose.msra.mxu0 0
      %3587 = vmatprep.subr.bf16.mxu0 0
      %3588 = vmatpush1.bf16.xpose.msra.mxu0 0
      %3589 = vmatprep.subr.bf16.mxu0 0
      %3590 = vmatpush1.bf16.xpose.msra.mxu0 0
      %3591 = vmatprep.subr.bf16.mxu0 0
      %3592 = vmatpush1.bf16.xpose.msra.mxu0 0
      %3593 = vmatprep.subr.bf16.mxu0 0
      %3594 = vmatpush1.bf16.xpose.msra.mxu0 0
      %3595 = vmatprep.subr.bf16.mxu0 0
      %3596 = vmatpush1.bf16.xpose.msra.mxu0 0
      %3597 = vmatprep.subr.bf16.mxu0 0
      %3598 = vmatpush1.bf16.xpose.msra.mxu0 0
      %3599 = vmatprep.subr.bf16.mxu0 0
      %3600 = vmatpush1.bf16.xpose.msra.mxu0 0
      %3601 = vmatprep.subr.bf16.mxu0 0
      %3602 = vmatpush1.bf16.xpose.msra.mxu0 0
      %3603 = vmatprep.subr.bf16.mxu0 0
      %3604 = vmatpush1.bf16.xpose.msra.mxu0 0
      %3605 = vmatprep.subr.bf16.mxu0 0
      %3606 = vmatpush1.bf16.xpose.msra.mxu0 0
      %3607 = vmatprep.mubr.bf16.mxu0 0
      %3608 = vmatmul.mubr.bf16.gmra.mrb[0].mxu0 %v3570
      %v3609 = vpop.f32.mrb[0].mxu0
      %v3610 = vadd.f32 0.0, %v3609
      %v3611 = vpop.f32.mrb[0].mxu0
      %v3612 = vpop.f32.mrb[0].mxu0
      %v3613 = vpop.f32.mrb[0].mxu0
      %3614 = vdwg.mxu0
      %3615 = vrot.lane.b32.xlu0 %v645, 104
      %v3616 = vpop.permute.xlu0 %3615
      %3617 = vrot.lane.b32.xlu0 %v734, 72
      %v3618 = vpop.permute.xlu0 %3617
      %v3620 = vsel %vm687, %v3616, 0
      %v3623 = vsel %vm687, %v3618, 0
      %3625 = vmatprep.subr.bf16.mxu0 0
      %3626 = vmatpush1.bf16.xpose.msra.mxu0 %v3623
      %3627 = vmatprep.subr.bf16.mxu0 0
      %3628 = vmatpush1.bf16.xpose.msra.mxu0 0
      %3629 = vmatprep.subr.bf16.mxu0 0
      %3630 = vmatpush1.bf16.xpose.msra.mxu0 0
      %3631 = vmatprep.subr.bf16.mxu0 0
      %3632 = vmatpush1.bf16.xpose.msra.mxu0 0
      %3633 = vmatprep.subr.bf16.mxu0 0
      %3634 = vmatpush1.bf16.xpose.msra.mxu0 0
      %3635 = vmatprep.subr.bf16.mxu0 0
      %3636 = vmatpush1.bf16.xpose.msra.mxu0 0
      %3637 = vmatprep.subr.bf16.mxu0 0
      %3638 = vmatpush1.bf16.xpose.msra.mxu0 0
      %3639 = vmatprep.subr.bf16.mxu0 0
      %3640 = vmatpush1.bf16.xpose.msra.mxu0 0
      %3641 = vmatprep.subr.bf16.mxu0 0
      %3642 = vmatpush1.bf16.xpose.msra.mxu0 0
      %3643 = vmatprep.subr.bf16.mxu0 0
      %3644 = vmatpush1.bf16.xpose.msra.mxu0 0
      %3645 = vmatprep.subr.bf16.mxu0 0
      %3646 = vmatpush1.bf16.xpose.msra.mxu0 0
      %3647 = vmatprep.subr.bf16.mxu0 0
      %3648 = vmatpush1.bf16.xpose.msra.mxu0 0
      %3649 = vmatprep.subr.bf16.mxu0 0
      %3650 = vmatpush1.bf16.xpose.msra.mxu0 0
      %3651 = vmatprep.subr.bf16.mxu0 0
      %3652 = vmatpush1.bf16.xpose.msra.mxu0 0
      %3653 = vmatprep.subr.bf16.mxu0 0
      %3654 = vmatpush1.bf16.xpose.msra.mxu0 0
      %3655 = vmatprep.subr.bf16.mxu0 0
      %3656 = vmatpush1.bf16.xpose.msra.mxu0 0
      %3657 = vmatprep.mubr.bf16.mxu0 0
      %3658 = vmatmul.mubr.bf16.gmra.mrb[0].mxu0 %v3620
      %v3659 = vpop.f32.mrb[0].mxu0
      %v3660 = vadd.f32 0.0, %v3659
      %v3661 = vpop.f32.mrb[0].mxu0
      %v3662 = vpop.f32.mrb[0].mxu0
      %v3663 = vpop.f32.mrb[0].mxu0
      %3664 = vdwg.mxu0
      %3665 = vrot.lane.b32.xlu0 %v646, 104
      %v3666 = vpop.permute.xlu0 %3665
      %3667 = vrot.lane.b32.xlu0 %v783, 72
      %v3668 = vpop.permute.xlu0 %3667
      %v3670 = vsel %vm687, %v3666, 0
      %v3673 = vsel %vm687, %v3668, 0
      %3675 = vmatprep.subr.bf16.mxu0 0
      %3676 = vmatpush1.bf16.xpose.msra.mxu0 %v3673
      %3677 = vmatprep.subr.bf16.mxu0 0
      %3678 = vmatpush1.bf16.xpose.msra.mxu0 0
      %3679 = vmatprep.subr.bf16.mxu0 0
      %3680 = vmatpush1.bf16.xpose.msra.mxu0 0
      %3681 = vmatprep.subr.bf16.mxu0 0
      %3682 = vmatpush1.bf16.xpose.msra.mxu0 0
      %3683 = vmatprep.subr.bf16.mxu0 0
      %3684 = vmatpush1.bf16.xpose.msra.mxu0 0
      %3685 = vmatprep.subr.bf16.mxu0 0
      %3686 = vmatpush1.bf16.xpose.msra.mxu0 0
      %3687 = vmatprep.subr.bf16.mxu0 0
      %3688 = vmatpush1.bf16.xpose.msra.mxu0 0
      %3689 = vmatprep.subr.bf16.mxu0 0
      %3690 = vmatpush1.bf16.xpose.msra.mxu0 0
      %3691 = vmatprep.subr.bf16.mxu0 0
      %3692 = vmatpush1.bf16.xpose.msra.mxu0 0
      %3693 = vmatprep.subr.bf16.mxu0 0
      %3694 = vmatpush1.bf16.xpose.msra.mxu0 0
      %3695 = vmatprep.subr.bf16.mxu0 0
      %3696 = vmatpush1.bf16.xpose.msra.mxu0 0
      %3697 = vmatprep.subr.bf16.mxu0 0
      %3698 = vmatpush1.bf16.xpose.msra.mxu0 0
      %3699 = vmatprep.subr.bf16.mxu0 0
      %3700 = vmatpush1.bf16.xpose.msra.mxu0 0
      %3701 = vmatprep.subr.bf16.mxu0 0
      %3702 = vmatpush1.bf16.xpose.msra.mxu0 0
      %3703 = vmatprep.subr.bf16.mxu0 0
      %3704 = vmatpush1.bf16.xpose.msra.mxu0 0
      %3705 = vmatprep.subr.bf16.mxu0 0
      %3706 = vmatpush1.bf16.xpose.msra.mxu0 0
      %3707 = vmatprep.mubr.bf16.mxu0 0
      %3708 = vmatmul.mubr.bf16.gmra.mrb[0].mxu0 %v3670
      %v3709 = vpop.f32.mrb[0].mxu0
      %v3710 = vadd.f32 0.0, %v3709
      %v3711 = vpop.f32.mrb[0].mxu0
      %v3712 = vpop.f32.mrb[0].mxu0
      %v3713 = vpop.f32.mrb[0].mxu0
      %3714 = vdwg.mxu0
      %3715 = vrot.lane.b32.xlu0 %v647, 104
      %v3716 = vpop.permute.xlu0 %3715
      %3717 = vrot.lane.b32.xlu0 %v832, 72
      %v3718 = vpop.permute.xlu0 %3717
      %v3720 = vsel %vm687, %v3716, 0
      %v3723 = vsel %vm687, %v3718, 0
      %3725 = vmatprep.subr.bf16.mxu0 0
      %3726 = vmatpush1.bf16.xpose.msra.mxu0 %v3723
      %3727 = vmatprep.subr.bf16.mxu0 0
      %3728 = vmatpush1.bf16.xpose.msra.mxu0 0
      %3729 = vmatprep.subr.bf16.mxu0 0
      %3730 = vmatpush1.bf16.xpose.msra.mxu0 0
      %3731 = vmatprep.subr.bf16.mxu0 0
      %3732 = vmatpush1.bf16.xpose.msra.mxu0 0
      %3733 = vmatprep.subr.bf16.mxu0 0
      %3734 = vmatpush1.bf16.xpose.msra.mxu0 0
      %3735 = vmatprep.subr.bf16.mxu0 0
      %3736 = vmatpush1.bf16.xpose.msra.mxu0 0
      %3737 = vmatprep.subr.bf16.mxu0 0
      %3738 = vmatpush1.bf16.xpose.msra.mxu0 0
      %3739 = vmatprep.subr.bf16.mxu0 0
      %3740 = vmatpush1.bf16.xpose.msra.mxu0 0
      %3741 = vmatprep.subr.bf16.mxu0 0
      %3742 = vmatpush1.bf16.xpose.msra.mxu0 0
      %3743 = vmatprep.subr.bf16.mxu0 0
      %3744 = vmatpush1.bf16.xpose.msra.mxu0 0
      %3745 = vmatprep.subr.bf16.mxu0 0
      %3746 = vmatpush1.bf16.xpose.msra.mxu0 0
      %3747 = vmatprep.subr.bf16.mxu0 0
      %3748 = vmatpush1.bf16.xpose.msra.mxu0 0
      %3749 = vmatprep.subr.bf16.mxu0 0
      %3750 = vmatpush1.bf16.xpose.msra.mxu0 0
      %3751 = vmatprep.subr.bf16.mxu0 0
      %3752 = vmatpush1.bf16.xpose.msra.mxu0 0
      %3753 = vmatprep.subr.bf16.mxu0 0
      %3754 = vmatpush1.bf16.xpose.msra.mxu0 0
      %3755 = vmatprep.subr.bf16.mxu0 0
      %3756 = vmatpush1.bf16.xpose.msra.mxu0 0
      %3757 = vmatprep.mubr.bf16.mxu0 0
      %3758 = vmatmul.mubr.bf16.gmra.mrb[0].mxu0 %v3720
      %v3759 = vpop.f32.mrb[0].mxu0
      %v3760 = vadd.f32 0.0, %v3759
      %v3761 = vpop.f32.mrb[0].mxu0
      %v3762 = vpop.f32.mrb[0].mxu0
      %v3763 = vpop.f32.mrb[0].mxu0
      %3764 = vdwg.mxu0
      %3765 = vrot.lane.b32.xlu0 %v648, 104
      %v3766 = vpop.permute.xlu0 %3765
      %3767 = vrot.lane.b32.xlu0 %v881, 72
      %v3768 = vpop.permute.xlu0 %3767
      %v3770 = vsel %vm687, %v3766, 0
      %v3773 = vsel %vm687, %v3768, 0
      %3775 = vmatprep.subr.bf16.mxu0 0
      %3776 = vmatpush1.bf16.xpose.msra.mxu0 %v3773
      %3777 = vmatprep.subr.bf16.mxu0 0
      %3778 = vmatpush1.bf16.xpose.msra.mxu0 0
      %3779 = vmatprep.subr.bf16.mxu0 0
      %3780 = vmatpush1.bf16.xpose.msra.mxu0 0
      %3781 = vmatprep.subr.bf16.mxu0 0
      %3782 = vmatpush1.bf16.xpose.msra.mxu0 0
      %3783 = vmatprep.subr.bf16.mxu0 0
      %3784 = vmatpush1.bf16.xpose.msra.mxu0 0
      %3785 = vmatprep.subr.bf16.mxu0 0
      %3786 = vmatpush1.bf16.xpose.msra.mxu0 0
      %3787 = vmatprep.subr.bf16.mxu0 0
      %3788 = vmatpush1.bf16.xpose.msra.mxu0 0
      %3789 = vmatprep.subr.bf16.mxu0 0
      %3790 = vmatpush1.bf16.xpose.msra.mxu0 0
      %3791 = vmatprep.subr.bf16.mxu0 0
      %3792 = vmatpush1.bf16.xpose.msra.mxu0 0
      %3793 = vmatprep.subr.bf16.mxu0 0
      %3794 = vmatpush1.bf16.xpose.msra.mxu0 0
      %3795 = vmatprep.subr.bf16.mxu0 0
      %3796 = vmatpush1.bf16.xpose.msra.mxu0 0
      %3797 = vmatprep.subr.bf16.mxu0 0
      %3798 = vmatpush1.bf16.xpose.msra.mxu0 0
      %3799 = vmatprep.subr.bf16.mxu0 0
      %3800 = vmatpush1.bf16.xpose.msra.mxu0 0
      %3801 = vmatprep.subr.bf16.mxu0 0
      %3802 = vmatpush1.bf16.xpose.msra.mxu0 0
      %3803 = vmatprep.subr.bf16.mxu0 0
      %3804 = vmatpush1.bf16.xpose.msra.mxu0 0
      %3805 = vmatprep.subr.bf16.mxu0 0
      %3806 = vmatpush1.bf16.xpose.msra.mxu0 0
      %3807 = vmatprep.mubr.bf16.mxu0 0
      %3808 = vmatmul.mubr.bf16.gmra.mrb[0].mxu0 %v3770
      %v3809 = vpop.f32.mrb[0].mxu0
      %v3810 = vadd.f32 0.0, %v3809
      %v3811 = vpop.f32.mrb[0].mxu0
      %v3812 = vpop.f32.mrb[0].mxu0
      %v3813 = vpop.f32.mrb[0].mxu0
      %3814 = vdwg.mxu0
      %3815 = vrot.lane.b32.xlu0 %v649, 104
      %v3816 = vpop.permute.xlu0 %3815
      %3817 = vrot.lane.b32.xlu0 %v930, 72
      %v3818 = vpop.permute.xlu0 %3817
      %v3820 = vsel %vm687, %v3816, 0
      %v3823 = vsel %vm687, %v3818, 0
      %3825 = vmatprep.subr.bf16.mxu0 0
      %3826 = vmatpush1.bf16.xpose.msra.mxu0 %v3823
      %3827 = vmatprep.subr.bf16.mxu0 0
      %3828 = vmatpush1.bf16.xpose.msra.mxu0 0
      %3829 = vmatprep.subr.bf16.mxu0 0
      %3830 = vmatpush1.bf16.xpose.msra.mxu0 0
      %3831 = vmatprep.subr.bf16.mxu0 0
      %3832 = vmatpush1.bf16.xpose.msra.mxu0 0
      %3833 = vmatprep.subr.bf16.mxu0 0
      %3834 = vmatpush1.bf16.xpose.msra.mxu0 0
      %3835 = vmatprep.subr.bf16.mxu0 0
      %3836 = vmatpush1.bf16.xpose.msra.mxu0 0
      %3837 = vmatprep.subr.bf16.mxu0 0
      %3838 = vmatpush1.bf16.xpose.msra.mxu0 0
      %3839 = vmatprep.subr.bf16.mxu0 0
      %3840 = vmatpush1.bf16.xpose.msra.mxu0 0
      %3841 = vmatprep.subr.bf16.mxu0 0
      %3842 = vmatpush1.bf16.xpose.msra.mxu0 0
      %3843 = vmatprep.subr.bf16.mxu0 0
      %3844 = vmatpush1.bf16.xpose.msra.mxu0 0
      %3845 = vmatprep.subr.bf16.mxu0 0
      %3846 = vmatpush1.bf16.xpose.msra.mxu0 0
      %3847 = vmatprep.subr.bf16.mxu0 0
      %3848 = vmatpush1.bf16.xpose.msra.mxu0 0
      %3849 = vmatprep.subr.bf16.mxu0 0
      %3850 = vmatpush1.bf16.xpose.msra.mxu0 0
      %3851 = vmatprep.subr.bf16.mxu0 0
      %3852 = vmatpush1.bf16.xpose.msra.mxu0 0
      %3853 = vmatprep.subr.bf16.mxu0 0
      %3854 = vmatpush1.bf16.xpose.msra.mxu0 0
      %3855 = vmatprep.subr.bf16.mxu0 0
      %3856 = vmatpush1.bf16.xpose.msra.mxu0 0
      %3857 = vmatprep.mubr.bf16.mxu0 0
      %3858 = vmatmul.mubr.bf16.gmra.mrb[0].mxu0 %v3820
      %v3859 = vpop.f32.mrb[0].mxu0
      %v3860 = vadd.f32 0.0, %v3859
      %v3861 = vpop.f32.mrb[0].mxu0
      %v3862 = vpop.f32.mrb[0].mxu0
      %v3863 = vpop.f32.mrb[0].mxu0
      %3864 = vdwg.mxu0
      %3865 = vrot.lane.b32.xlu0 %v650, 104
      %v3866 = vpop.permute.xlu0 %3865
      %3867 = vrot.lane.b32.xlu0 %v979, 72
      %v3868 = vpop.permute.xlu0 %3867
      %v3870 = vsel %vm687, %v3866, 0
      %v3873 = vsel %vm687, %v3868, 0
      %3875 = vmatprep.subr.bf16.mxu0 0
      %3876 = vmatpush1.bf16.xpose.msra.mxu0 %v3873
      %3877 = vmatprep.subr.bf16.mxu0 0
      %3878 = vmatpush1.bf16.xpose.msra.mxu0 0
      %3879 = vmatprep.subr.bf16.mxu0 0
      %3880 = vmatpush1.bf16.xpose.msra.mxu0 0
      %3881 = vmatprep.subr.bf16.mxu0 0
      %3882 = vmatpush1.bf16.xpose.msra.mxu0 0
      %3883 = vmatprep.subr.bf16.mxu0 0
      %3884 = vmatpush1.bf16.xpose.msra.mxu0 0
      %3885 = vmatprep.subr.bf16.mxu0 0
      %3886 = vmatpush1.bf16.xpose.msra.mxu0 0
      %3887 = vmatprep.subr.bf16.mxu0 0
      %3888 = vmatpush1.bf16.xpose.msra.mxu0 0
      %3889 = vmatprep.subr.bf16.mxu0 0
      %3890 = vmatpush1.bf16.xpose.msra.mxu0 0
      %3891 = vmatprep.subr.bf16.mxu0 0
      %3892 = vmatpush1.bf16.xpose.msra.mxu0 0
      %3893 = vmatprep.subr.bf16.mxu0 0
      %3894 = vmatpush1.bf16.xpose.msra.mxu0 0
      %3895 = vmatprep.subr.bf16.mxu0 0
      %3896 = vmatpush1.bf16.xpose.msra.mxu0 0
      %3897 = vmatprep.subr.bf16.mxu0 0
      %3898 = vmatpush1.bf16.xpose.msra.mxu0 0
      %3899 = vmatprep.subr.bf16.mxu0 0
      %3900 = vmatpush1.bf16.xpose.msra.mxu0 0
      %3901 = vmatprep.subr.bf16.mxu0 0
      %3902 = vmatpush1.bf16.xpose.msra.mxu0 0
      %3903 = vmatprep.subr.bf16.mxu0 0
      %3904 = vmatpush1.bf16.xpose.msra.mxu0 0
      %3905 = vmatprep.subr.bf16.mxu0 0
      %3906 = vmatpush1.bf16.xpose.msra.mxu0 0
      %3907 = vmatprep.mubr.bf16.mxu0 0
      %3908 = vmatmul.mubr.bf16.gmra.mrb[0].mxu0 %v3870
      %v3909 = vpop.f32.mrb[0].mxu0
      %v3910 = vadd.f32 0.0, %v3909
      %v3911 = vpop.f32.mrb[0].mxu0
      %v3912 = vpop.f32.mrb[0].mxu0
      %v3913 = vpop.f32.mrb[0].mxu0
      %3914 = vdwg.mxu0
      %3915 = vrot.lane.b32.xlu0 %v651, 104
      %v3916 = vpop.permute.xlu0 %3915
      %3917 = vrot.lane.b32.xlu0 %v1028, 72
      %v3918 = vpop.permute.xlu0 %3917
      %v3920 = vsel %vm687, %v3916, 0
      %v3923 = vsel %vm687, %v3918, 0
      %3925 = vmatprep.subr.bf16.mxu0 0
      %3926 = vmatpush1.bf16.xpose.msra.mxu0 %v3923
      %3927 = vmatprep.subr.bf16.mxu0 0
      %3928 = vmatpush1.bf16.xpose.msra.mxu0 0
      %3929 = vmatprep.subr.bf16.mxu0 0
      %3930 = vmatpush1.bf16.xpose.msra.mxu0 0
      %3931 = vmatprep.subr.bf16.mxu0 0
      %3932 = vmatpush1.bf16.xpose.msra.mxu0 0
      %3933 = vmatprep.subr.bf16.mxu0 0
      %3934 = vmatpush1.bf16.xpose.msra.mxu0 0
      %3935 = vmatprep.subr.bf16.mxu0 0
      %3936 = vmatpush1.bf16.xpose.msra.mxu0 0
      %3937 = vmatprep.subr.bf16.mxu0 0
      %3938 = vmatpush1.bf16.xpose.msra.mxu0 0
      %3939 = vmatprep.subr.bf16.mxu0 0
      %3940 = vmatpush1.bf16.xpose.msra.mxu0 0
      %3941 = vmatprep.subr.bf16.mxu0 0
      %3942 = vmatpush1.bf16.xpose.msra.mxu0 0
      %3943 = vmatprep.subr.bf16.mxu0 0
      %3944 = vmatpush1.bf16.xpose.msra.mxu0 0
      %3945 = vmatprep.subr.bf16.mxu0 0
      %3946 = vmatpush1.bf16.xpose.msra.mxu0 0
      %3947 = vmatprep.subr.bf16.mxu0 0
      %3948 = vmatpush1.bf16.xpose.msra.mxu0 0
      %3949 = vmatprep.subr.bf16.mxu0 0
      %3950 = vmatpush1.bf16.xpose.msra.mxu0 0
      %3951 = vmatprep.subr.bf16.mxu0 0
      %3952 = vmatpush1.bf16.xpose.msra.mxu0 0
      %3953 = vmatprep.subr.bf16.mxu0 0
      %3954 = vmatpush1.bf16.xpose.msra.mxu0 0
      %3955 = vmatprep.subr.bf16.mxu0 0
      %3956 = vmatpush1.bf16.xpose.msra.mxu0 0
      %3957 = vmatprep.mubr.bf16.mxu0 0
      %3958 = vmatmul.mubr.bf16.gmra.mrb[0].mxu0 %v3920
      %v3959 = vpop.f32.mrb[0].mxu0
      %v3960 = vadd.f32 0.0, %v3959
      %v3961 = vpop.f32.mrb[0].mxu0
      %v3962 = vpop.f32.mrb[0].mxu0
      %v3963 = vpop.f32.mrb[0].mxu0
      %3964 = vdwg.mxu0
      %v3965 = vsel %vm687, %v3610, -inf
      %3966 = vmax.xlane.f32.xlu0 %v3965
      %v3967 = vpop.xlane.xlu0 %3966
      %v3968 = vsel %vm687, %v3660, -inf
      %3969 = vmax.xlane.f32.xlu0 %v3968
      %v3970 = vpop.xlane.xlu0 %3969
      %v3971 = vsel %vm687, %v3710, -inf
      %3972 = vmax.xlane.f32.xlu0 %v3971
      %v3973 = vpop.xlane.xlu0 %3972
      %v3974 = vsel %vm687, %v3760, -inf
      %3975 = vmax.xlane.f32.xlu0 %v3974
      %v3976 = vpop.xlane.xlu0 %3975
      %v3977 = vsel %vm687, %v3810, -inf
      %3978 = vmax.xlane.f32.xlu0 %v3977
      %v3979 = vpop.xlane.xlu0 %3978
      %v3980 = vsel %vm687, %v3860, -inf
      %3981 = vmax.xlane.f32.xlu0 %v3980
      %v3982 = vpop.xlane.xlu0 %3981
      %v3983 = vsel %vm687, %v3910, -inf
      %3984 = vmax.xlane.f32.xlu0 %v3983
      %v3985 = vpop.xlane.xlu0 %3984
      %v3986 = vsel %vm687, %v3960, -inf
      %3987 = vmax.xlane.f32.xlu0 %v3986
      %v3988 = vpop.xlane.xlu0 %3987
      %v3989 = vsub.f32 %v3610, %v3967
      %v3990 = vsub.f32 %v3660, %v3970
      %v3991 = vsub.f32 %v3710, %v3973
      %v3992 = vsub.f32 %v3760, %v3976
      %v3993 = vsub.f32 %v3810, %v3979
      %v3994 = vsub.f32 %v3860, %v3982
      %v3995 = vsub.f32 %v3910, %v3985
      %v3996 = vsub.f32 %v3960, %v3988
      %v3997 = vmul.f32 %v3989, 1.442695
      %v3998 = vpow.pop %v3997
      %v3999 = vmul.f32 %v3990, 1.442695
      %v4000 = vpow.pop %v3999
      %v4001 = vmul.f32 %v3991, 1.442695
      %v4002 = vpow.pop %v4001
      %v4003 = vmul.f32 %v3992, 1.442695
      %v4004 = vpow.pop %v4003
      %v4005 = vmul.f32 %v3993, 1.442695
      %v4006 = vpow.pop %v4005
      %v4007 = vmul.f32 %v3994, 1.442695
      %v4008 = vpow.pop %v4007
      %v4009 = vmul.f32 %v3995, 1.442695
      %v4010 = vpow.pop %v4009
      %v4011 = vmul.f32 %v3996, 1.442695
      %v4012 = vpow.pop %v4011
      %v4013 = vsel %vm687, %v3998, 0.0
      %4014 = vadd.xlane.f32.xlu0 %v4013
      %v4015 = vpop.xlane.xlu0 %4014
      %v4016 = vsel %vm687, %v4000, 0.0
      %4017 = vadd.xlane.f32.xlu0 %v4016
      %v4018 = vpop.xlane.xlu0 %4017
      %v4019 = vsel %vm687, %v4002, 0.0
      %4020 = vadd.xlane.f32.xlu0 %v4019
      %v4021 = vpop.xlane.xlu0 %4020
      %v4022 = vsel %vm687, %v4004, 0.0
      %4023 = vadd.xlane.f32.xlu0 %v4022
      %v4024 = vpop.xlane.xlu0 %4023
      %v4025 = vsel %vm687, %v4006, 0.0
      %4026 = vadd.xlane.f32.xlu0 %v4025
      %v4027 = vpop.xlane.xlu0 %4026
      %v4028 = vsel %vm687, %v4008, 0.0
      %4029 = vadd.xlane.f32.xlu0 %v4028
      %v4030 = vpop.xlane.xlu0 %4029
      %v4031 = vsel %vm687, %v4010, 0.0
      %4032 = vadd.xlane.f32.xlu0 %v4031
      %v4033 = vpop.xlane.xlu0 %4032
      %v4034 = vsel %vm687, %v4012, 0.0
      %4035 = vadd.xlane.f32.xlu0 %v4034
      %v4036 = vpop.xlane.xlu0 %4035
      %v4037 = vrcp.pop %v4015
      %v4038 = vrcp.pop %v4018
      %v4039 = vrcp.pop %v4021
      %v4040 = vrcp.pop %v4024
      %v4041 = vrcp.pop %v4027
      %v4042 = vrcp.pop %v4030
      %v4043 = vrcp.pop %v4033
      %v4044 = vrcp.pop %v4036
      %v4045 = vmul.f32 %v3998, %v4037
      %v4046 = vmul.f32 %v4000, %v4038
      %v4047 = vmul.f32 %v4002, %v4039
      %v4048 = vmul.f32 %v4004, %v4040
      %v4049 = vmul.f32 %v4006, %v4041
      %v4050 = vmul.f32 %v4008, %v4042
      %v4051 = vmul.f32 %v4010, %v4043
      %v4052 = vmul.f32 %v4012, %v4044
      %v4053 = vpack.c.bf16 %v4045, %v4045
      %v4054 = vpack.c.bf16 %v4046, %v4046
      %v4055 = vpack.c.bf16 %v4047, %v4047
      %v4056 = vpack.c.bf16 %v4048, %v4048
      %v4057 = vpack.c.bf16 %v4049, %v4049
      %v4058 = vpack.c.bf16 %v4050, %v4050
      %v4059 = vpack.c.bf16 %v4051, %v4051
      %v4060 = vpack.c.bf16 %v4052, %v4052
      %4061 = vrot.lane.b32.xlu0 %v676, 104
      %v4062 = vpop.permute.xlu0 %4061
      %v4064 = vsel %vm687, %v4053, 0
      %v4067 = vsel %vm1176, %v4062, 0
      %4069 = vmatprep.subr.bf16.mxu0 0
      %4070 = vmatpush1.bf16.msra.mxu0 %v4067
      %4071 = vmatprep.subr.bf16.mxu0 0
      %4072 = vmatpush1.bf16.msra.mxu0 0
      %4073 = vmatprep.subr.bf16.mxu0 0
      %4074 = vmatpush1.bf16.msra.mxu0 0
      %4075 = vmatprep.subr.bf16.mxu0 0
      %4076 = vmatpush1.bf16.msra.mxu0 0
      %4077 = vmatprep.subr.bf16.mxu0 0
      %4078 = vmatpush1.bf16.msra.mxu0 0
      %4079 = vmatprep.subr.bf16.mxu0 0
      %4080 = vmatpush1.bf16.msra.mxu0 0
      %4081 = vmatprep.subr.bf16.mxu0 0
      %4082 = vmatpush1.bf16.msra.mxu0 0
      %4083 = vmatprep.subr.bf16.mxu0 0
      %4084 = vmatpush1.bf16.msra.mxu0 0
      %4085 = vmatprep.subr.bf16.mxu0 0
      %4086 = vmatpush1.bf16.msra.mxu0 0
      %4087 = vmatprep.subr.bf16.mxu0 0
      %4088 = vmatpush1.bf16.msra.mxu0 0
      %4089 = vmatprep.subr.bf16.mxu0 0
      %4090 = vmatpush1.bf16.msra.mxu0 0
      %4091 = vmatprep.subr.bf16.mxu0 0
      %4092 = vmatpush1.bf16.msra.mxu0 0
      %4093 = vmatprep.subr.bf16.mxu0 0
      %4094 = vmatpush1.bf16.msra.mxu0 0
      %4095 = vmatprep.subr.bf16.mxu0 0
      %4096 = vmatpush1.bf16.msra.mxu0 0
      %4097 = vmatprep.subr.bf16.mxu0 0
      %4098 = vmatpush1.bf16.msra.mxu0 0
      %4099 = vmatprep.subr.bf16.mxu0 0
      %4100 = vmatpush1.bf16.msra.mxu0 0
      %4101 = vmatprep.mubr.bf16.mxu0 0
      %4102 = vmatmul.mubr.bf16.gmra.mrb[0].mxu0 %v4064
      %v4103 = vpop.f32.mrb[0].mxu0
      %v4104 = vadd.f32 0.0, %v4103
      %v4105 = vpop.f32.mrb[0].mxu0
      %v4106 = vpop.f32.mrb[0].mxu0
      %v4107 = vpop.f32.mrb[0].mxu0
      %4108 = vdwg.mxu0
      %4109 = vrot.lane.b32.xlu0 %v677, 104
      %v4110 = vpop.permute.xlu0 %4109
      %v4112 = vsel %vm687, %v4054, 0
      %v4115 = vsel %vm1176, %v4110, 0
      %4117 = vmatprep.subr.bf16.mxu0 0
      %4118 = vmatpush1.bf16.msra.mxu0 %v4115
      %4119 = vmatprep.subr.bf16.mxu0 0
      %4120 = vmatpush1.bf16.msra.mxu0 0
      %4121 = vmatprep.subr.bf16.mxu0 0
      %4122 = vmatpush1.bf16.msra.mxu0 0
      %4123 = vmatprep.subr.bf16.mxu0 0
      %4124 = vmatpush1.bf16.msra.mxu0 0
      %4125 = vmatprep.subr.bf16.mxu0 0
      %4126 = vmatpush1.bf16.msra.mxu0 0
      %4127 = vmatprep.subr.bf16.mxu0 0
      %4128 = vmatpush1.bf16.msra.mxu0 0
      %4129 = vmatprep.subr.bf16.mxu0 0
      %4130 = vmatpush1.bf16.msra.mxu0 0
      %4131 = vmatprep.subr.bf16.mxu0 0
      %4132 = vmatpush1.bf16.msra.mxu0 0
      %4133 = vmatprep.subr.bf16.mxu0 0
      %4134 = vmatpush1.bf16.msra.mxu0 0
      %4135 = vmatprep.subr.bf16.mxu0 0
      %4136 = vmatpush1.bf16.msra.mxu0 0
      %4137 = vmatprep.subr.bf16.mxu0 0
      %4138 = vmatpush1.bf16.msra.mxu0 0
      %4139 = vmatprep.subr.bf16.mxu0 0
      %4140 = vmatpush1.bf16.msra.mxu0 0
      %4141 = vmatprep.subr.bf16.mxu0 0
      %4142 = vmatpush1.bf16.msra.mxu0 0
      %4143 = vmatprep.subr.bf16.mxu0 0
      %4144 = vmatpush1.bf16.msra.mxu0 0
      %4145 = vmatprep.subr.bf16.mxu0 0
      %4146 = vmatpush1.bf16.msra.mxu0 0
      %4147 = vmatprep.subr.bf16.mxu0 0
      %4148 = vmatpush1.bf16.msra.mxu0 0
      %4149 = vmatprep.mubr.bf16.mxu0 0
      %4150 = vmatmul.mubr.bf16.gmra.mrb[0].mxu0 %v4112
      %v4151 = vpop.f32.mrb[0].mxu0
      %v4152 = vadd.f32 0.0, %v4151
      %v4153 = vpop.f32.mrb[0].mxu0
      %v4154 = vpop.f32.mrb[0].mxu0
      %v4155 = vpop.f32.mrb[0].mxu0
      %4156 = vdwg.mxu0
      %4157 = vrot.lane.b32.xlu0 %v678, 104
      %v4158 = vpop.permute.xlu0 %4157
      %v4160 = vsel %vm687, %v4055, 0
      %v4163 = vsel %vm1176, %v4158, 0
      %4165 = vmatprep.subr.bf16.mxu0 0
      %4166 = vmatpush1.bf16.msra.mxu0 %v4163
      %4167 = vmatprep.subr.bf16.mxu0 0
      %4168 = vmatpush1.bf16.msra.mxu0 0
      %4169 = vmatprep.subr.bf16.mxu0 0
      %4170 = vmatpush1.bf16.msra.mxu0 0
      %4171 = vmatprep.subr.bf16.mxu0 0
      %4172 = vmatpush1.bf16.msra.mxu0 0
      %4173 = vmatprep.subr.bf16.mxu0 0
      %4174 = vmatpush1.bf16.msra.mxu0 0
      %4175 = vmatprep.subr.bf16.mxu0 0
      %4176 = vmatpush1.bf16.msra.mxu0 0
      %4177 = vmatprep.subr.bf16.mxu0 0
      %4178 = vmatpush1.bf16.msra.mxu0 0
      %4179 = vmatprep.subr.bf16.mxu0 0
      %4180 = vmatpush1.bf16.msra.mxu0 0
      %4181 = vmatprep.subr.bf16.mxu0 0
      %4182 = vmatpush1.bf16.msra.mxu0 0
      %4183 = vmatprep.subr.bf16.mxu0 0
      %4184 = vmatpush1.bf16.msra.mxu0 0
      %4185 = vmatprep.subr.bf16.mxu0 0
      %4186 = vmatpush1.bf16.msra.mxu0 0
      %4187 = vmatprep.subr.bf16.mxu0 0
      %4188 = vmatpush1.bf16.msra.mxu0 0
      %4189 = vmatprep.subr.bf16.mxu0 0
      %4190 = vmatpush1.bf16.msra.mxu0 0
      %4191 = vmatprep.subr.bf16.mxu0 0
      %4192 = vmatpush1.bf16.msra.mxu0 0
      %4193 = vmatprep.subr.bf16.mxu0 0
      %4194 = vmatpush1.bf16.msra.mxu0 0
      %4195 = vmatprep.subr.bf16.mxu0 0
      %4196 = vmatpush1.bf16.msra.mxu0 0
      %4197 = vmatprep.mubr.bf16.mxu0 0
      %4198 = vmatmul.mubr.bf16.gmra.mrb[0].mxu0 %v4160
      %v4199 = vpop.f32.mrb[0].mxu0
      %v4200 = vadd.f32 0.0, %v4199
      %v4201 = vpop.f32.mrb[0].mxu0
      %v4202 = vpop.f32.mrb[0].mxu0
      %v4203 = vpop.f32.mrb[0].mxu0
      %4204 = vdwg.mxu0
      %4205 = vrot.lane.b32.xlu0 %v679, 104
      %v4206 = vpop.permute.xlu0 %4205
      %v4208 = vsel %vm687, %v4056, 0
      %v4211 = vsel %vm1176, %v4206, 0
      %4213 = vmatprep.subr.bf16.mxu0 0
      %4214 = vmatpush1.bf16.msra.mxu0 %v4211
      %4215 = vmatprep.subr.bf16.mxu0 0
      %4216 = vmatpush1.bf16.msra.mxu0 0
      %4217 = vmatprep.subr.bf16.mxu0 0
      %4218 = vmatpush1.bf16.msra.mxu0 0
      %4219 = vmatprep.subr.bf16.mxu0 0
      %4220 = vmatpush1.bf16.msra.mxu0 0
      %4221 = vmatprep.subr.bf16.mxu0 0
      %4222 = vmatpush1.bf16.msra.mxu0 0
      %4223 = vmatprep.subr.bf16.mxu0 0
      %4224 = vmatpush1.bf16.msra.mxu0 0
      %4225 = vmatprep.subr.bf16.mxu0 0
      %4226 = vmatpush1.bf16.msra.mxu0 0
      %4227 = vmatprep.subr.bf16.mxu0 0
      %4228 = vmatpush1.bf16.msra.mxu0 0
      %4229 = vmatprep.subr.bf16.mxu0 0
      %4230 = vmatpush1.bf16.msra.mxu0 0
      %4231 = vmatprep.subr.bf16.mxu0 0
      %4232 = vmatpush1.bf16.msra.mxu0 0
      %4233 = vmatprep.subr.bf16.mxu0 0
      %4234 = vmatpush1.bf16.msra.mxu0 0
      %4235 = vmatprep.subr.bf16.mxu0 0
      %4236 = vmatpush1.bf16.msra.mxu0 0
      %4237 = vmatprep.subr.bf16.mxu0 0
      %4238 = vmatpush1.bf16.msra.mxu0 0
      %4239 = vmatprep.subr.bf16.mxu0 0
      %4240 = vmatpush1.bf16.msra.mxu0 0
      %4241 = vmatprep.subr.bf16.mxu0 0
      %4242 = vmatpush1.bf16.msra.mxu0 0
      %4243 = vmatprep.subr.bf16.mxu0 0
      %4244 = vmatpush1.bf16.msra.mxu0 0
      %4245 = vmatprep.mubr.bf16.mxu0 0
      %4246 = vmatmul.mubr.bf16.gmra.mrb[0].mxu0 %v4208
      %v4247 = vpop.f32.mrb[0].mxu0
      %v4248 = vadd.f32 0.0, %v4247
      %v4249 = vpop.f32.mrb[0].mxu0
      %v4250 = vpop.f32.mrb[0].mxu0
      %v4251 = vpop.f32.mrb[0].mxu0
      %4252 = vdwg.mxu0
      %4253 = vrot.lane.b32.xlu0 %v680, 104
      %v4254 = vpop.permute.xlu0 %4253
      %v4256 = vsel %vm687, %v4057, 0
      %v4259 = vsel %vm1176, %v4254, 0
      %4261 = vmatprep.subr.bf16.mxu0 0
      %4262 = vmatpush1.bf16.msra.mxu0 %v4259
      %4263 = vmatprep.subr.bf16.mxu0 0
      %4264 = vmatpush1.bf16.msra.mxu0 0
      %4265 = vmatprep.subr.bf16.mxu0 0
      %4266 = vmatpush1.bf16.msra.mxu0 0
      %4267 = vmatprep.subr.bf16.mxu0 0
      %4268 = vmatpush1.bf16.msra.mxu0 0
      %4269 = vmatprep.subr.bf16.mxu0 0
      %4270 = vmatpush1.bf16.msra.mxu0 0
      %4271 = vmatprep.subr.bf16.mxu0 0
      %4272 = vmatpush1.bf16.msra.mxu0 0
      %4273 = vmatprep.subr.bf16.mxu0 0
      %4274 = vmatpush1.bf16.msra.mxu0 0
      %4275 = vmatprep.subr.bf16.mxu0 0
      %4276 = vmatpush1.bf16.msra.mxu0 0
      %4277 = vmatprep.subr.bf16.mxu0 0
      %4278 = vmatpush1.bf16.msra.mxu0 0
      %4279 = vmatprep.subr.bf16.mxu0 0
      %4280 = vmatpush1.bf16.msra.mxu0 0
      %4281 = vmatprep.subr.bf16.mxu0 0
      %4282 = vmatpush1.bf16.msra.mxu0 0
      %4283 = vmatprep.subr.bf16.mxu0 0
      %4284 = vmatpush1.bf16.msra.mxu0 0
      %4285 = vmatprep.subr.bf16.mxu0 0
      %4286 = vmatpush1.bf16.msra.mxu0 0
      %4287 = vmatprep.subr.bf16.mxu0 0
      %4288 = vmatpush1.bf16.msra.mxu0 0
      %4289 = vmatprep.subr.bf16.mxu0 0
      %4290 = vmatpush1.bf16.msra.mxu0 0
      %4291 = vmatprep.subr.bf16.mxu0 0
      %4292 = vmatpush1.bf16.msra.mxu0 0
      %4293 = vmatprep.mubr.bf16.mxu0 0
      %4294 = vmatmul.mubr.bf16.gmra.mrb[0].mxu0 %v4256
      %v4295 = vpop.f32.mrb[0].mxu0
      %v4296 = vadd.f32 0.0, %v4295
      %v4297 = vpop.f32.mrb[0].mxu0
      %v4298 = vpop.f32.mrb[0].mxu0
      %v4299 = vpop.f32.mrb[0].mxu0
      %4300 = vdwg.mxu0
      %4301 = vrot.lane.b32.xlu0 %v681, 104
      %v4302 = vpop.permute.xlu0 %4301
      %v4304 = vsel %vm687, %v4058, 0
      %v4307 = vsel %vm1176, %v4302, 0
      %4309 = vmatprep.subr.bf16.mxu0 0
      %4310 = vmatpush1.bf16.msra.mxu0 %v4307
      %4311 = vmatprep.subr.bf16.mxu0 0
      %4312 = vmatpush1.bf16.msra.mxu0 0
      %4313 = vmatprep.subr.bf16.mxu0 0
      %4314 = vmatpush1.bf16.msra.mxu0 0
      %4315 = vmatprep.subr.bf16.mxu0 0
      %4316 = vmatpush1.bf16.msra.mxu0 0
      %4317 = vmatprep.subr.bf16.mxu0 0
      %4318 = vmatpush1.bf16.msra.mxu0 0
      %4319 = vmatprep.subr.bf16.mxu0 0
      %4320 = vmatpush1.bf16.msra.mxu0 0
      %4321 = vmatprep.subr.bf16.mxu0 0
      %4322 = vmatpush1.bf16.msra.mxu0 0
      %4323 = vmatprep.subr.bf16.mxu0 0
      %4324 = vmatpush1.bf16.msra.mxu0 0
      %4325 = vmatprep.subr.bf16.mxu0 0
      %4326 = vmatpush1.bf16.msra.mxu0 0
      %4327 = vmatprep.subr.bf16.mxu0 0
      %4328 = vmatpush1.bf16.msra.mxu0 0
      %4329 = vmatprep.subr.bf16.mxu0 0
      %4330 = vmatpush1.bf16.msra.mxu0 0
      %4331 = vmatprep.subr.bf16.mxu0 0
      %4332 = vmatpush1.bf16.msra.mxu0 0
      %4333 = vmatprep.subr.bf16.mxu0 0
      %4334 = vmatpush1.bf16.msra.mxu0 0
      %4335 = vmatprep.subr.bf16.mxu0 0
      %4336 = vmatpush1.bf16.msra.mxu0 0
      %4337 = vmatprep.subr.bf16.mxu0 0
      %4338 = vmatpush1.bf16.msra.mxu0 0
      %4339 = vmatprep.subr.bf16.mxu0 0
      %4340 = vmatpush1.bf16.msra.mxu0 0
      %4341 = vmatprep.mubr.bf16.mxu0 0
      %4342 = vmatmul.mubr.bf16.gmra.mrb[0].mxu0 %v4304
      %v4343 = vpop.f32.mrb[0].mxu0
      %v4344 = vadd.f32 0.0, %v4343
      %v4345 = vpop.f32.mrb[0].mxu0
      %v4346 = vpop.f32.mrb[0].mxu0
      %v4347 = vpop.f32.mrb[0].mxu0
      %4348 = vdwg.mxu0
      %4349 = vrot.lane.b32.xlu0 %v682, 104
      %v4350 = vpop.permute.xlu0 %4349
      %v4352 = vsel %vm687, %v4059, 0
      %v4355 = vsel %vm1176, %v4350, 0
      %4357 = vmatprep.subr.bf16.mxu0 0
      %4358 = vmatpush1.bf16.msra.mxu0 %v4355
      %4359 = vmatprep.subr.bf16.mxu0 0
      %4360 = vmatpush1.bf16.msra.mxu0 0
      %4361 = vmatprep.subr.bf16.mxu0 0
      %4362 = vmatpush1.bf16.msra.mxu0 0
      %4363 = vmatprep.subr.bf16.mxu0 0
      %4364 = vmatpush1.bf16.msra.mxu0 0
      %4365 = vmatprep.subr.bf16.mxu0 0
      %4366 = vmatpush1.bf16.msra.mxu0 0
      %4367 = vmatprep.subr.bf16.mxu0 0
      %4368 = vmatpush1.bf16.msra.mxu0 0
      %4369 = vmatprep.subr.bf16.mxu0 0
      %4370 = vmatpush1.bf16.msra.mxu0 0
      %4371 = vmatprep.subr.bf16.mxu0 0
      %4372 = vmatpush1.bf16.msra.mxu0 0
      %4373 = vmatprep.subr.bf16.mxu0 0
      %4374 = vmatpush1.bf16.msra.mxu0 0
      %4375 = vmatprep.subr.bf16.mxu0 0
      %4376 = vmatpush1.bf16.msra.mxu0 0
      %4377 = vmatprep.subr.bf16.mxu0 0
      %4378 = vmatpush1.bf16.msra.mxu0 0
      %4379 = vmatprep.subr.bf16.mxu0 0
      %4380 = vmatpush1.bf16.msra.mxu0 0
      %4381 = vmatprep.subr.bf16.mxu0 0
      %4382 = vmatpush1.bf16.msra.mxu0 0
      %4383 = vmatprep.subr.bf16.mxu0 0
      %4384 = vmatpush1.bf16.msra.mxu0 0
      %4385 = vmatprep.subr.bf16.mxu0 0
      %4386 = vmatpush1.bf16.msra.mxu0 0
      %4387 = vmatprep.subr.bf16.mxu0 0
      %4388 = vmatpush1.bf16.msra.mxu0 0
      %4389 = vmatprep.mubr.bf16.mxu0 0
      %4390 = vmatmul.mubr.bf16.gmra.mrb[0].mxu0 %v4352
      %v4391 = vpop.f32.mrb[0].mxu0
      %v4392 = vadd.f32 0.0, %v4391
      %v4393 = vpop.f32.mrb[0].mxu0
      %v4394 = vpop.f32.mrb[0].mxu0
      %v4395 = vpop.f32.mrb[0].mxu0
      %4396 = vdwg.mxu0
      %4397 = vrot.lane.b32.xlu0 %v683, 104
      %v4398 = vpop.permute.xlu0 %4397
      %v4400 = vsel %vm687, %v4060, 0
      %v4403 = vsel %vm1176, %v4398, 0
      %4405 = vmatprep.subr.bf16.mxu0 0
      %4406 = vmatpush1.bf16.msra.mxu0 %v4403
      %4407 = vmatprep.subr.bf16.mxu0 0
      %4408 = vmatpush1.bf16.msra.mxu0 0
      %4409 = vmatprep.subr.bf16.mxu0 0
      %4410 = vmatpush1.bf16.msra.mxu0 0
      %4411 = vmatprep.subr.bf16.mxu0 0
      %4412 = vmatpush1.bf16.msra.mxu0 0
      %4413 = vmatprep.subr.bf16.mxu0 0
      %4414 = vmatpush1.bf16.msra.mxu0 0
      %4415 = vmatprep.subr.bf16.mxu0 0
      %4416 = vmatpush1.bf16.msra.mxu0 0
      %4417 = vmatprep.subr.bf16.mxu0 0
      %4418 = vmatpush1.bf16.msra.mxu0 0
      %4419 = vmatprep.subr.bf16.mxu0 0
      %4420 = vmatpush1.bf16.msra.mxu0 0
      %4421 = vmatprep.subr.bf16.mxu0 0
      %4422 = vmatpush1.bf16.msra.mxu0 0
      %4423 = vmatprep.subr.bf16.mxu0 0
      %4424 = vmatpush1.bf16.msra.mxu0 0
      %4425 = vmatprep.subr.bf16.mxu0 0
      %4426 = vmatpush1.bf16.msra.mxu0 0
      %4427 = vmatprep.subr.bf16.mxu0 0
      %4428 = vmatpush1.bf16.msra.mxu0 0
      %4429 = vmatprep.subr.bf16.mxu0 0
      %4430 = vmatpush1.bf16.msra.mxu0 0
      %4431 = vmatprep.subr.bf16.mxu0 0
      %4432 = vmatpush1.bf16.msra.mxu0 0
      %4433 = vmatprep.subr.bf16.mxu0 0
      %4434 = vmatpush1.bf16.msra.mxu0 0
      %4435 = vmatprep.subr.bf16.mxu0 0
      %4436 = vmatpush1.bf16.msra.mxu0 0
      %4437 = vmatprep.mubr.bf16.mxu0 0
      %4438 = vmatmul.mubr.bf16.gmra.mrb[0].mxu0 %v4400
      %v4439 = vpop.f32.mrb[0].mxu0
      %v4440 = vadd.f32 0.0, %v4439
      %v4441 = vpop.f32.mrb[0].mxu0
      %v4442 = vpop.f32.mrb[0].mxu0
      %v4443 = vpop.f32.mrb[0].mxu0
      %4444 = vdwg.mxu0
      %v4445 = vpack.c.bf16 %v4152, %v4104
      %v4446 = vpack.c.bf16 %v4248, %v4200
      %v4447 = vpack.c.bf16 %v4344, %v4296
      %v4448 = vpack.c.bf16 %v4440, %v4392
      %v4449 = vld [vmem:[%s4 + $0xc] sm:$0xf]
      %v4451 = vsel %vm687, %v4445, 0
      %v4454 = vsel %vm687, %v4446, 0
      %v4457 = vsel %vm687, %v4447, 0
      %v4460 = vsel %vm687, %v4448, 0
      %v4463 = vsel %vm1176, %v4449, 0
      %4465 = vmatprep.subr.bf16.mxu0 0
      %4466 = vmatpush1.bf16.msra.mxu0 %v4463
      %4467 = vmatprep.subr.bf16.mxu0 0
      %4468 = vmatpush1.bf16.msra.mxu0 0
      %4469 = vmatprep.subr.bf16.mxu0 0
      %4470 = vmatpush1.bf16.msra.mxu0 0
      %4471 = vmatprep.subr.bf16.mxu0 0
      %4472 = vmatpush1.bf16.msra.mxu0 0
      %4473 = vmatprep.subr.bf16.mxu0 0
      %4474 = vmatpush1.bf16.msra.mxu0 0
      %4475 = vmatprep.subr.bf16.mxu0 0
      %4476 = vmatpush1.bf16.msra.mxu0 0
      %4477 = vmatprep.subr.bf16.mxu0 0
      %4478 = vmatpush1.bf16.msra.mxu0 0
      %4479 = vmatprep.subr.bf16.mxu0 0
      %4480 = vmatpush1.bf16.msra.mxu0 0
      %4481 = vmatprep.subr.bf16.mxu0 0
      %4482 = vmatpush1.bf16.msra.mxu0 0
      %4483 = vmatprep.subr.bf16.mxu0 0
      %4484 = vmatpush1.bf16.msra.mxu0 0
      %4485 = vmatprep.subr.bf16.mxu0 0
      %4486 = vmatpush1.bf16.msra.mxu0 0
      %4487 = vmatprep.subr.bf16.mxu0 0
      %4488 = vmatpush1.bf16.msra.mxu0 0
      %4489 = vmatprep.subr.bf16.mxu0 0
      %4490 = vmatpush1.bf16.msra.mxu0 0
      %4491 = vmatprep.subr.bf16.mxu0 0
      %4492 = vmatpush1.bf16.msra.mxu0 0
      %4493 = vmatprep.subr.bf16.mxu0 0
      %4494 = vmatpush1.bf16.msra.mxu0 0
      %4495 = vmatprep.subr.bf16.mxu0 0
      %4496 = vmatpush1.bf16.msra.mxu0 0
      %4497 = vmatprep.mubr.bf16.mxu0 0
      %4498 = vmatmul.mubr.bf16.gmra.mrb[0].mxu0 %v4451
      %v4499 = vpop.f32.mrb[0].mxu0
      %v4500 = vadd.f32 0.0, %v4499
      %v4501 = vpop.f32.mrb[0].mxu0
      %v4502 = vpop.f32.mrb[0].mxu0
      %v4503 = vadd.f32 0.0, %v4502
      %v4504 = vpop.f32.mrb[0].mxu0
      %4505 = vmatprep.mubr.bf16.mxu0 0
      %4506 = vmatmul.mubr.bf16.gmra.mrb[0].mxu0 %v4454
      %v4507 = vpop.f32.mrb[0].mxu0
      %v4508 = vadd.f32 0.0, %v4507
      %v4509 = vpop.f32.mrb[0].mxu0
      %v4510 = vpop.f32.mrb[0].mxu0
      %v4511 = vadd.f32 0.0, %v4510
      %v4512 = vpop.f32.mrb[0].mxu0
      %4513 = vmatprep.mubr.bf16.mxu0 0
      %4514 = vmatmul.mubr.bf16.gmra.mrb[0].mxu0 %v4457
      %v4515 = vpop.f32.mrb[0].mxu0
      %v4516 = vadd.f32 0.0, %v4515
      %v4517 = vpop.f32.mrb[0].mxu0
      %v4518 = vpop.f32.mrb[0].mxu0
      %v4519 = vadd.f32 0.0, %v4518
      %v4520 = vpop.f32.mrb[0].mxu0
      %4521 = vmatprep.mubr.bf16.mxu0 0
      %4522 = vmatmul.mubr.bf16.gmra.mrb[0].mxu0 %v4460
      %v4523 = vpop.f32.mrb[0].mxu0
      %v4524 = vadd.f32 0.0, %v4523
      %v4525 = vpop.f32.mrb[0].mxu0
      %v4526 = vpop.f32.mrb[0].mxu0
      %v4527 = vadd.f32 0.0, %v4526
      %v4528 = vpop.f32.mrb[0].mxu0
      %4529 = vdwg.mxu0
      %v4530 = vadd.f32 %v3557, %v4500
      %v4531 = vadd.f32 %v3558, %v4503
      %v4532 = vadd.f32 %v3559, %v4508
      %v4533 = vadd.f32 %v3560, %v4511
      %v4534 = vadd.f32 %v3561, %v4516
      %v4535 = vadd.f32 %v3562, %v4519
      %v4536 = vadd.f32 %v3563, %v4524
      %v4537 = vadd.f32 %v3564, %v4527
      %v4538 = vlaneseq
      %v4539 = vshrl.u32 %v4538, 7
      %v4540 = vsub.s32 3, %v4539
      %v4541 = vrot.slane %v375, %v4540
      %v4542 = vadd.f32 %v4530, %v4541
      %v4543 = vadd.f32 %v4531, %v4541
      %v4544 = vadd.f32 %v4532, %v4541
      %v4545 = vadd.f32 %v4533, %v4541
      %v4546 = vadd.f32 %v4534, %v4541
      %v4547 = vadd.f32 %v4535, %v4541
      %v4548 = vadd.f32 %v4536, %v4541
      %v4549 = vadd.f32 %v4537, %v4541
      %v4550 = vadd.f32 %v359, %v4542
      %v4551 = vadd.f32 %v360, %v4543
      %v4552 = vadd.f32 %v361, %v4544
      %v4553 = vadd.f32 %v362, %v4545
      %v4554 = vadd.f32 %v363, %v4546
      %v4555 = vadd.f32 %v364, %v4547
      %v4556 = vadd.f32 %v365, %v4548
      %v4557 = vadd.f32 %v366, %v4549
      %v4558 = vsel %vm409, %v4550, 0.0
      %4559 = vadd.xlane.f32.xlu0 %v4558
      %v4560 = vpop.xlane.xlu0 %4559
      %v4561 = vsel %vm409, %v4551, 0.0
      %4562 = vadd.xlane.f32.xlu0 %v4561
      %v4563 = vpop.xlane.xlu0 %4562
      %v4564 = vsel %vm409, %v4552, 0.0
      %4565 = vadd.xlane.f32.xlu0 %v4564
      %v4566 = vpop.xlane.xlu0 %4565
      %v4567 = vsel %vm409, %v4553, 0.0
      %4568 = vadd.xlane.f32.xlu0 %v4567
      %v4569 = vpop.xlane.xlu0 %4568
      %v4570 = vsel %vm409, %v4554, 0.0
      %4571 = vadd.xlane.f32.xlu0 %v4570
      %v4572 = vpop.xlane.xlu0 %4571
      %v4573 = vsel %vm409, %v4555, 0.0
      %4574 = vadd.xlane.f32.xlu0 %v4573
      %v4575 = vpop.xlane.xlu0 %4574
      %v4576 = vsel %vm409, %v4556, 0.0
      %4577 = vadd.xlane.f32.xlu0 %v4576
      %v4578 = vpop.xlane.xlu0 %4577
      %v4579 = vsel %vm409, %v4557, 0.0
      %4580 = vadd.xlane.f32.xlu0 %v4579
      %v4581 = vpop.xlane.xlu0 %4580
      %v4582 = vrcp.pop 32.0
      %v4583 = vmul.f32 %v4560, %v4582
      %v4584 = vmul.f32 %v4563, %v4582
      %v4585 = vmul.f32 %v4566, %v4582
      %v4586 = vmul.f32 %v4569, %v4582
      %v4587 = vmul.f32 %v4572, %v4582
      %v4588 = vmul.f32 %v4575, %v4582
      %v4589 = vmul.f32 %v4578, %v4582
      %v4590 = vmul.f32 %v4581, %v4582
      %v4591 = vsub.f32 %v4550, %v4583
      %v4592 = vsub.f32 %v4551, %v4584
      %v4593 = vsub.f32 %v4552, %v4585
      %v4594 = vsub.f32 %v4553, %v4586
      %v4595 = vsub.f32 %v4554, %v4587
      %v4596 = vsub.f32 %v4555, %v4588
      %v4597 = vsub.f32 %v4556, %v4589
      %v4598 = vsub.f32 %v4557, %v4590
      %v4599 = vmul.f32 %v4591, %v4591
      %v4600 = vmul.f32 %v4592, %v4592
      %v4601 = vmul.f32 %v4593, %v4593
      %v4602 = vmul.f32 %v4594, %v4594
      %v4603 = vmul.f32 %v4595, %v4595
      %v4604 = vmul.f32 %v4596, %v4596
      %v4605 = vmul.f32 %v4597, %v4597
      %v4606 = vmul.f32 %v4598, %v4598
      %v4607 = vsel %vm409, %v4599, 0.0
      %4608 = vadd.xlane.f32.xlu0 %v4607
      %v4609 = vpop.xlane.xlu0 %4608
      %v4610 = vsel %vm409, %v4600, 0.0
      %4611 = vadd.xlane.f32.xlu0 %v4610
      %v4612 = vpop.xlane.xlu0 %4611
      %v4613 = vsel %vm409, %v4601, 0.0
      %4614 = vadd.xlane.f32.xlu0 %v4613
      %v4615 = vpop.xlane.xlu0 %4614
      %v4616 = vsel %vm409, %v4602, 0.0
      %4617 = vadd.xlane.f32.xlu0 %v4616
      %v4618 = vpop.xlane.xlu0 %4617
      %v4619 = vsel %vm409, %v4603, 0.0
      %4620 = vadd.xlane.f32.xlu0 %v4619
      %v4621 = vpop.xlane.xlu0 %4620
      %v4622 = vsel %vm409, %v4604, 0.0
      %4623 = vadd.xlane.f32.xlu0 %v4622
      %v4624 = vpop.xlane.xlu0 %4623
      %v4625 = vsel %vm409, %v4605, 0.0
      %4626 = vadd.xlane.f32.xlu0 %v4625
      %v4627 = vpop.xlane.xlu0 %4626
      %v4628 = vsel %vm409, %v4606, 0.0
      %4629 = vadd.xlane.f32.xlu0 %v4628
      %v4630 = vpop.xlane.xlu0 %4629
      %v4631 = vmul.f32 %v4609, %v4582
      %v4632 = vmul.f32 %v4612, %v4582
      %v4633 = vmul.f32 %v4615, %v4582
      %v4634 = vmul.f32 %v4618, %v4582
      %v4635 = vmul.f32 %v4621, %v4582
      %v4636 = vmul.f32 %v4624, %v4582
      %v4637 = vmul.f32 %v4627, %v4582
      %v4638 = vmul.f32 %v4630, %v4582
      %v4639 = vadd.f32 %v4631, 1e-05
      %v4640 = vadd.f32 %v4632, 1e-05
      %v4641 = vadd.f32 %v4633, 1e-05
      %v4642 = vadd.f32 %v4634, 1e-05
      %v4643 = vadd.f32 %v4635, 1e-05
      %v4644 = vadd.f32 %v4636, 1e-05
      %v4645 = vadd.f32 %v4637, 1e-05
      %v4646 = vadd.f32 %v4638, 1e-05
      %v4647 = vrsqrt.pop %v4639
      %v4648 = vrsqrt.pop %v4640
      %v4649 = vrsqrt.pop %v4641
      %v4650 = vrsqrt.pop %v4642
      %v4651 = vrsqrt.pop %v4643
      %v4652 = vrsqrt.pop %v4644
      %v4653 = vrsqrt.pop %v4645
      %v4654 = vrsqrt.pop %v4646
      %v4655 = vmul.f32 %v4591, %v4647
      %v4656 = vmul.f32 %v4592, %v4648
      %v4657 = vmul.f32 %v4593, %v4649
      %v4658 = vmul.f32 %v4594, %v4650
      %v4659 = vmul.f32 %v4595, %v4651
      %v4660 = vmul.f32 %v4596, %v4652
      %v4661 = vmul.f32 %v4597, %v4653
      %v4662 = vmul.f32 %v4598, %v4654
      %v4663 = vlaneseq
      %v4664 = vshrl.u32 %v4663, 7
      %v4665 = vsub.s32 5, %v4664
      %v4666 = vrot.slane %v375, %v4665
      %v4667 = vmul.f32 %v4655, %v4666
      %v4668 = vmul.f32 %v4656, %v4666
      %v4669 = vmul.f32 %v4657, %v4666
      %v4670 = vmul.f32 %v4658, %v4666
      %v4671 = vmul.f32 %v4659, %v4666
      %v4672 = vmul.f32 %v4660, %v4666
      %v4673 = vmul.f32 %v4661, %v4666
      %v4674 = vmul.f32 %v4662, %v4666
      %v4675 = vlaneseq
      %v4676 = vshrl.u32 %v4675, 7
      %v4677 = vsub.s32 6, %v4676
      %v4678 = vrot.slane %v375, %v4677
      %v4679 = vadd.f32 %v4667, %v4678
      %v4680 = vadd.f32 %v4668, %v4678
      %v4681 = vadd.f32 %v4669, %v4678
      %v4682 = vadd.f32 %v4670, %v4678
      %v4683 = vadd.f32 %v4671, %v4678
      %v4684 = vadd.f32 %v4672, %v4678
      %v4685 = vadd.f32 %v4673, %v4678
      %v4686 = vadd.f32 %v4674, %v4678
      %v4687 = vpack.c.bf16 %v4680, %v4679
      %v4688 = vpack.c.bf16 %v4682, %v4681
      %v4689 = vpack.c.bf16 %v4684, %v4683
      %v4690 = vpack.c.bf16 %v4686, %v4685
      %v4691 = vld [vmem:[%s5] sm:$0xf]
      %v4692 = vld [vmem:[%s5 + $0x4] sm:$0xf]
      %v4693 = vld [vmem:[%s5 + $0x8] sm:$0xf]
      %v4694 = vld [vmem:[%s5 + $0xc] sm:$0xf]
      %v4695 = vld [vmem:[%s7] sm:$0x1]
      %v4697 = vlaneseq
      %v4698 = vshrl.u32 %v4697, 7
      %v4699 = vsub.s32 0, %v4698
      %v4700 = vrot.slane %v4695, %v4699
      %v4706 = vunpack.c.l.b16 %v4691
      %v4707 = vunpack.c.l.b16 %v4692
      %v4708 = vunpack.c.l.b16 %v4693
      %v4709 = vunpack.c.l.b16 %v4694
      %v4710 = vpack.c.b16 %v4707, %v4706
      %v4711 = vpack.c.b16 %v4709, %v4708
      %v4715 = vsel %vm409, %v4687, 0
      %v4718 = vsel %vm409, %v4688, 0
      %v4721 = vsel %vm409, %v4689, 0
      %v4724 = vsel %vm409, %v4690, 0
      %4726 = vmatprep.subr.bf16.mxu0 0
      %4727 = vmatpush1.bf16.msra.mxu0 %v4710
      %4728 = vmatprep.subr.bf16.mxu0 0
      %4729 = vmatpush1.bf16.msra.mxu0 %v4711
      %4730 = vmatprep.subr.bf16.mxu0 0
      %4731 = vmatpush1.bf16.msra.mxu0 0
      %4732 = vmatprep.subr.bf16.mxu0 0
      %4733 = vmatpush1.bf16.msra.mxu0 0
      %4734 = vmatprep.subr.bf16.mxu0 0
      %4735 = vmatpush1.bf16.msra.mxu0 0
      %4736 = vmatprep.subr.bf16.mxu0 0
      %4737 = vmatpush1.bf16.msra.mxu0 0
      %4738 = vmatprep.subr.bf16.mxu0 0
      %4739 = vmatpush1.bf16.msra.mxu0 0
      %4740 = vmatprep.subr.bf16.mxu0 0
      %4741 = vmatpush1.bf16.msra.mxu0 0
      %4742 = vmatprep.subr.bf16.mxu0 0
      %4743 = vmatpush1.bf16.msra.mxu0 0
      %4744 = vmatprep.subr.bf16.mxu0 0
      %4745 = vmatpush1.bf16.msra.mxu0 0
      %4746 = vmatprep.subr.bf16.mxu0 0
      %4747 = vmatpush1.bf16.msra.mxu0 0
      %4748 = vmatprep.subr.bf16.mxu0 0
      %4749 = vmatpush1.bf16.msra.mxu0 0
      %4750 = vmatprep.subr.bf16.mxu0 0
      %4751 = vmatpush1.bf16.msra.mxu0 0
      %4752 = vmatprep.subr.bf16.mxu0 0
      %4753 = vmatpush1.bf16.msra.mxu0 0
      %4754 = vmatprep.subr.bf16.mxu0 0
      %4755 = vmatpush1.bf16.msra.mxu0 0
      %4756 = vmatprep.subr.bf16.mxu0 0
      %4757 = vmatpush1.bf16.msra.mxu0 0
      %4758 = vmatprep.mubr.bf16.mxu0 0
      %4759 = vmatmul.mubr.bf16.gmra.mrb[0].mxu0 %v4715
      %v4760 = vpop.f32.mrb[0].mxu0
      %v4761 = vadd.f32 %v4700, %v4760
      %v4762 = vpop.f32.mrb[0].mxu0
      %v4763 = vpop.f32.mrb[0].mxu0
      %v4764 = vadd.f32 %v4700, %v4763
      %v4765 = vpop.f32.mrb[0].mxu0
      %4766 = vmatprep.mubr.bf16.mxu0 0
      %4767 = vmatmul.mubr.bf16.gmra.mrb[0].mxu0 %v4718
      %v4768 = vpop.f32.mrb[0].mxu0
      %v4769 = vadd.f32 %v4700, %v4768
      %v4770 = vpop.f32.mrb[0].mxu0
      %v4771 = vpop.f32.mrb[0].mxu0
      %v4772 = vadd.f32 %v4700, %v4771
      %v4773 = vpop.f32.mrb[0].mxu0
      %4774 = vmatprep.mubr.bf16.mxu0 0
      %4775 = vmatmul.mubr.bf16.gmra.mrb[0].mxu0 %v4721
      %v4776 = vpop.f32.mrb[0].mxu0
      %v4777 = vadd.f32 %v4700, %v4776
      %v4778 = vpop.f32.mrb[0].mxu0
      %v4779 = vpop.f32.mrb[0].mxu0
      %v4780 = vadd.f32 %v4700, %v4779
      %v4781 = vpop.f32.mrb[0].mxu0
      %4782 = vmatprep.mubr.bf16.mxu0 0
      %4783 = vmatmul.mubr.bf16.gmra.mrb[0].mxu0 %v4724
      %v4784 = vpop.f32.mrb[0].mxu0
      %v4785 = vadd.f32 %v4700, %v4784
      %v4786 = vpop.f32.mrb[0].mxu0
      %v4787 = vpop.f32.mrb[0].mxu0
      %v4788 = vadd.f32 %v4700, %v4787
      %v4789 = vpop.f32.mrb[0].mxu0
      %4790 = vdwg.mxu0
      %v4791 = vmax.f32 %v4761, 0.0
      %v4792 = vmax.f32 %v4764, 0.0
      %v4793 = vmax.f32 %v4769, 0.0
      %v4794 = vmax.f32 %v4772, 0.0
      %v4795 = vmax.f32 %v4777, 0.0
      %v4796 = vmax.f32 %v4780, 0.0
      %v4797 = vmax.f32 %v4785, 0.0
      %v4798 = vmax.f32 %v4788, 0.0
      %v4799 = vpack.c.bf16 %v4792, %v4791
      %v4800 = vpack.c.bf16 %v4794, %v4793
      %v4801 = vpack.c.bf16 %v4796, %v4795
      %v4802 = vpack.c.bf16 %v4798, %v4797
      %v4803 = vld [vmem:[%s6] sm:$0xf]
      %v4804 = vld [vmem:[%s6 + $0x4] sm:$0xf]
      %v4805 = vld [vmem:[%s6 + $0x8] sm:$0xf]
      %v4806 = vld [vmem:[%s6 + $0xc] sm:$0xf]
      %v4807 = vld [vmem:[%s6 + $0x10] sm:$0xf]
      %v4808 = vld [vmem:[%s6 + $0x14] sm:$0xf]
      %v4809 = vld [vmem:[%s6 + $0x18] sm:$0xf]
      %v4810 = vld [vmem:[%s6 + $0x1c] sm:$0xf]
      %v4811 = vlaneseq
      %v4812 = vshrl.u32 %v4811, 7
      %v4813 = vsub.s32 4, %v4812
      %v4814 = vrot.slane %v375, %v4813
      %v4823 = vunpack.c.l.b16 %v4803
      %v4824 = vunpack.c.l.b16 %v4804
      %v4825 = vunpack.c.l.b16 %v4805
      %v4826 = vunpack.c.l.b16 %v4806
      %v4827 = vunpack.c.l.b16 %v4807
      %v4828 = vunpack.c.l.b16 %v4808
      %v4829 = vunpack.c.l.b16 %v4809
      %v4830 = vunpack.c.l.b16 %v4810
      %v4831 = vpack.c.b16 %v4824, %v4823
      %v4832 = vpack.c.b16 %v4826, %v4825
      %v4833 = vpack.c.b16 %v4828, %v4827
      %v4834 = vpack.c.b16 %v4830, %v4829
      %vm4839 = vcmask 523264
      %v4841 = vsel %vm4839, %v4799, 0
      %v4844 = vsel %vm4839, %v4800, 0
      %v4847 = vsel %vm4839, %v4801, 0
      %v4850 = vsel %vm4839, %v4802, 0
      %4852 = vmatprep.subr.bf16.mxu0 0
      %4853 = vmatpush1.bf16.msra.mxu0 %v4831
      %4854 = vmatprep.subr.bf16.mxu0 0
      %4855 = vmatpush1.bf16.msra.mxu0 %v4832
      %4856 = vmatprep.subr.bf16.mxu0 0
      %4857 = vmatpush1.bf16.msra.mxu0 %v4833
      %4858 = vmatprep.subr.bf16.mxu0 0
      %4859 = vmatpush1.bf16.msra.mxu0 %v4834
      %4860 = vmatprep.subr.bf16.mxu0 0
      %4861 = vmatpush1.bf16.msra.mxu0 0
      %4862 = vmatprep.subr.bf16.mxu0 0
      %4863 = vmatpush1.bf16.msra.mxu0 0
      %4864 = vmatprep.subr.bf16.mxu0 0
      %4865 = vmatpush1.bf16.msra.mxu0 0
      %4866 = vmatprep.subr.bf16.mxu0 0
      %4867 = vmatpush1.bf16.msra.mxu0 0
      %4868 = vmatprep.subr.bf16.mxu0 0
      %4869 = vmatpush1.bf16.msra.mxu0 0
      %4870 = vmatprep.subr.bf16.mxu0 0
      %4871 = vmatpush1.bf16.msra.mxu0 0
      %4872 = vmatprep.subr.bf16.mxu0 0
      %4873 = vmatpush1.bf16.msra.mxu0 0
      %4874 = vmatprep.subr.bf16.mxu0 0
      %4875 = vmatpush1.bf16.msra.mxu0 0
      %4876 = vmatprep.subr.bf16.mxu0 0
      %4877 = vmatpush1.bf16.msra.mxu0 0
      %4878 = vmatprep.subr.bf16.mxu0 0
      %4879 = vmatpush1.bf16.msra.mxu0 0
      %4880 = vmatprep.subr.bf16.mxu0 0
      %4881 = vmatpush1.bf16.msra.mxu0 0
      %4882 = vmatprep.subr.bf16.mxu0 0
      %4883 = vmatpush1.bf16.msra.mxu0 0
      %4884 = vmatprep.mubr.bf16.mxu0 0
      %4885 = vmatmul.mubr.bf16.gmra.mrb[0].mxu0 %v4841
      %v4886 = vpop.f32.mrb[0].mxu0
      %v4887 = vadd.f32 %v4814, %v4886
      %v4888 = vpop.f32.mrb[0].mxu0
      %v4889 = vpop.f32.mrb[0].mxu0
      %v4890 = vadd.f32 %v4814, %v4889
      %v4891 = vpop.f32.mrb[0].mxu0
      %4892 = vmatprep.mubr.bf16.mxu0 0
      %4893 = vmatmul.mubr.bf16.gmra.mrb[0].mxu0 %v4844
      %v4894 = vpop.f32.mrb[0].mxu0
      %v4895 = vadd.f32 %v4814, %v4894
      %v4896 = vpop.f32.mrb[0].mxu0
      %v4897 = vpop.f32.mrb[0].mxu0
      %v4898 = vadd.f32 %v4814, %v4897
      %v4899 = vpop.f32.mrb[0].mxu0
      %4900 = vmatprep.mubr.bf16.mxu0 0
      %4901 = vmatmul.mubr.bf16.gmra.mrb[0].mxu0 %v4847
      %v4902 = vpop.f32.mrb[0].mxu0
      %v4903 = vadd.f32 %v4814, %v4902
      %v4904 = vpop.f32.mrb[0].mxu0
      %v4905 = vpop.f32.mrb[0].mxu0
      %v4906 = vadd.f32 %v4814, %v4905
      %v4907 = vpop.f32.mrb[0].mxu0
      %4908 = vmatprep.mubr.bf16.mxu0 0
      %4909 = vmatmul.mubr.bf16.gmra.mrb[0].mxu0 %v4850
      %v4910 = vpop.f32.mrb[0].mxu0
      %v4911 = vadd.f32 %v4814, %v4910
      %v4912 = vpop.f32.mrb[0].mxu0
      %v4913 = vpop.f32.mrb[0].mxu0
      %v4914 = vadd.f32 %v4814, %v4913
      %v4915 = vpop.f32.mrb[0].mxu0
      %4916 = vdwg.mxu0
      %v4917 = vadd.f32 %v4679, %v4887
      %v4918 = vadd.f32 %v4680, %v4890
      %v4919 = vadd.f32 %v4681, %v4895
      %v4920 = vadd.f32 %v4682, %v4898
      %v4921 = vadd.f32 %v4683, %v4903
      %v4922 = vadd.f32 %v4684, %v4906
      %v4923 = vadd.f32 %v4685, %v4911
      %v4924 = vadd.f32 %v4686, %v4914
      %v4925 = vsel %vm409, %v4917, 0.0
      %4926 = vadd.xlane.f32.xlu0 %v4925
      %v4927 = vpop.xlane.xlu0 %4926
      %v4928 = vsel %vm409, %v4918, 0.0
      %4929 = vadd.xlane.f32.xlu0 %v4928
      %v4930 = vpop.xlane.xlu0 %4929
      %v4931 = vsel %vm409, %v4919, 0.0
      %4932 = vadd.xlane.f32.xlu0 %v4931
      %v4933 = vpop.xlane.xlu0 %4932
      %v4934 = vsel %vm409, %v4920, 0.0
      %4935 = vadd.xlane.f32.xlu0 %v4934
      %v4936 = vpop.xlane.xlu0 %4935
      %v4937 = vsel %vm409, %v4921, 0.0
      %4938 = vadd.xlane.f32.xlu0 %v4937
      %v4939 = vpop.xlane.xlu0 %4938
      %v4940 = vsel %vm409, %v4922, 0.0
      %4941 = vadd.xlane.f32.xlu0 %v4940
      %v4942 = vpop.xlane.xlu0 %4941
      %v4943 = vsel %vm409, %v4923, 0.0
      %4944 = vadd.xlane.f32.xlu0 %v4943
      %v4945 = vpop.xlane.xlu0 %4944
      %v4946 = vsel %vm409, %v4924, 0.0
      %4947 = vadd.xlane.f32.xlu0 %v4946
      %v4948 = vpop.xlane.xlu0 %4947
      %v4949 = vmul.f32 %v4927, %v4582
      %v4950 = vmul.f32 %v4930, %v4582
      %v4951 = vmul.f32 %v4933, %v4582
      %v4952 = vmul.f32 %v4936, %v4582
      %v4953 = vmul.f32 %v4939, %v4582
      %v4954 = vmul.f32 %v4942, %v4582
      %v4955 = vmul.f32 %v4945, %v4582
      %v4956 = vmul.f32 %v4948, %v4582
      %v4957 = vsub.f32 %v4917, %v4949
      %v4958 = vsub.f32 %v4918, %v4950
      %v4959 = vsub.f32 %v4919, %v4951
      %v4960 = vsub.f32 %v4920, %v4952
      %v4961 = vsub.f32 %v4921, %v4953
      %v4962 = vsub.f32 %v4922, %v4954
      %v4963 = vsub.f32 %v4923, %v4955
      %v4964 = vsub.f32 %v4924, %v4956
      %v4965 = vmul.f32 %v4957, %v4957
      %v4966 = vmul.f32 %v4958, %v4958
      %v4967 = vmul.f32 %v4959, %v4959
      %v4968 = vmul.f32 %v4960, %v4960
      %v4969 = vmul.f32 %v4961, %v4961
      %v4970 = vmul.f32 %v4962, %v4962
      %v4971 = vmul.f32 %v4963, %v4963
      %v4972 = vmul.f32 %v4964, %v4964
      %v4973 = vsel %vm409, %v4965, 0.0
      %4974 = vadd.xlane.f32.xlu0 %v4973
      %v4975 = vpop.xlane.xlu0 %4974
      %v4976 = vsel %vm409, %v4966, 0.0
      %4977 = vadd.xlane.f32.xlu0 %v4976
      %v4978 = vpop.xlane.xlu0 %4977
      %v4979 = vsel %vm409, %v4967, 0.0
      %4980 = vadd.xlane.f32.xlu0 %v4979
      %v4981 = vpop.xlane.xlu0 %4980
      %v4982 = vsel %vm409, %v4968, 0.0
      %4983 = vadd.xlane.f32.xlu0 %v4982
      %v4984 = vpop.xlane.xlu0 %4983
      %v4985 = vsel %vm409, %v4969, 0.0
      %4986 = vadd.xlane.f32.xlu0 %v4985
      %v4987 = vpop.xlane.xlu0 %4986
      %v4988 = vsel %vm409, %v4970, 0.0
      %4989 = vadd.xlane.f32.xlu0 %v4988
      %v4990 = vpop.xlane.xlu0 %4989
      %v4991 = vsel %vm409, %v4971, 0.0
      %4992 = vadd.xlane.f32.xlu0 %v4991
      %v4993 = vpop.xlane.xlu0 %4992
      %v4994 = vsel %vm409, %v4972, 0.0
      %4995 = vadd.xlane.f32.xlu0 %v4994
      %v4996 = vpop.xlane.xlu0 %4995
      %v4997 = vmul.f32 %v4975, %v4582
      %v4998 = vmul.f32 %v4978, %v4582
      %v4999 = vmul.f32 %v4981, %v4582
      %v5000 = vmul.f32 %v4984, %v4582
      %v5001 = vmul.f32 %v4987, %v4582
      %v5002 = vmul.f32 %v4990, %v4582
      %v5003 = vmul.f32 %v4993, %v4582
      %v5004 = vmul.f32 %v4996, %v4582
      %v5005 = vadd.f32 %v4997, 1e-05
      %v5006 = vadd.f32 %v4998, 1e-05
      %v5007 = vadd.f32 %v4999, 1e-05
      %v5008 = vadd.f32 %v5000, 1e-05
      %v5009 = vadd.f32 %v5001, 1e-05
      %v5010 = vadd.f32 %v5002, 1e-05
      %v5011 = vadd.f32 %v5003, 1e-05
      %v5012 = vadd.f32 %v5004, 1e-05
      %v5013 = vrsqrt.pop %v5005
      %v5014 = vrsqrt.pop %v5006
      %v5015 = vrsqrt.pop %v5007
      %v5016 = vrsqrt.pop %v5008
      %v5017 = vrsqrt.pop %v5009
      %v5018 = vrsqrt.pop %v5010
      %v5019 = vrsqrt.pop %v5011
      %v5020 = vrsqrt.pop %v5012
      %v5021 = vmul.f32 %v4957, %v5013
      %v5022 = vmul.f32 %v4958, %v5014
      %v5023 = vmul.f32 %v4959, %v5015
      %v5024 = vmul.f32 %v4960, %v5016
      %v5025 = vmul.f32 %v4961, %v5017
      %v5026 = vmul.f32 %v4962, %v5018
      %v5027 = vmul.f32 %v4963, %v5019
      %v5028 = vmul.f32 %v4964, %v5020
      %v5029 = vlaneseq
      %v5030 = vshrl.u32 %v5029, 7
      %v5031 = vsub.s32 7, %v5030
      %v5032 = vrot.slane %v375, %v5031
      %v5033 = vmul.f32 %v5021, %v5032
      %v5034 = vmul.f32 %v5022, %v5032
      %v5035 = vmul.f32 %v5023, %v5032
      %v5036 = vmul.f32 %v5024, %v5032
      %v5037 = vmul.f32 %v5025, %v5032
      %v5038 = vmul.f32 %v5026, %v5032
      %v5039 = vmul.f32 %v5027, %v5032
      %v5040 = vmul.f32 %v5028, %v5032
      %v5041 = vlaneseq
      %v5042 = vshrl.u32 %v5041, 7
      %v5043 = vsub.s32 0, %v5042
      %v5044 = vrot.slane %v376, %v5043
      %v5045 = vadd.f32 %v5033, %v5044
      %v5046 = vadd.f32 %v5034, %v5044
      %v5047 = vadd.f32 %v5035, %v5044
      %v5048 = vadd.f32 %v5036, %v5044
      %v5049 = vadd.f32 %v5037, %v5044
      %v5050 = vadd.f32 %v5038, %v5044
      %v5051 = vadd.f32 %v5039, %v5044
      %v5052 = vadd.f32 %v5040, %v5044
      %5053 = vst.msk [vmem:[%s356] sm:$0xff] %vm409, %v5045
      %5054 = vst.msk [vmem:[%s356 + $0x8] sm:$0xff] %vm409, %v5046
      %5055 = vst.msk [vmem:[%s356 + $0x10] sm:$0xff] %vm409, %v5047
      %5056 = vst.msk [vmem:[%s356 + $0x18] sm:$0xff] %vm409, %v5048
      %5057 = vst.msk [vmem:[%s356 + $0x20] sm:$0xff] %vm409, %v5049
      %5058 = vst.msk [vmem:[%s356 + $0x28] sm:$0xff] %vm409, %v5050
      %5059 = vst.msk [vmem:[%s356 + $0x30] sm:$0xff] %vm409, %v5051
      %5060 = vst.msk [vmem:[%s356 + $0x38] sm:$0xff] %vm409, %v5052
      %s5061 = smul.u32 8, %s20
      %p5062 = scmp.lt.s32.totalorder %s5061, 31
      %s5063 = scalar_select %p5062, %s5061, 31
      %s5064 = smul.addr %s5063, 8
      %s5065 = scalar_lea.vmem %s9, %s5064
      // Predicated region
      $region57: #{tpu_custom_call.1} parent=55 // pred_check
        %p5066 = pneg %p237
      $region58: #{tpu_custom_call.1} parent=55 // pred_check_branch
        %5068 = sbr.rel (%p5066) target = $region60
      $region59: #{tpu_custom_call.1} parent=55 // pred_region
        %s5069 = smul.u32 8, %s20
      $region60: #{tpu_custom_call.1} parent=55 // pred_fallthru
        _
    $region56: #{tpu_custom_call.1} parent=5 // pred_fallthru
      _
    %p5070 = scmp.le.s32.totalorder 2, %s15
    // Predicated region
    $region61: #{tpu_custom_call.1} parent=5 // pred_check
      %p5071 = pneg %p5070
    $region62: #{tpu_custom_call.1} parent=5 // pred_check_branch
      %5073 = sbr.rel (%p5071) target = $region64
    $region63: #{tpu_custom_call.1} parent=5 // pred_region
      %s5074 = ssub.s32 %s15, 2
      // Predicated region
      $region65: #{tpu_custom_call.1} parent=63 // pred_check
        %p5075 = pneg %p243
      $region66: #{tpu_custom_call.1} parent=63 // pred_check_branch
        %5077 = sbr.rel (%p5075) target = $region68
      $region67: #{tpu_custom_call.1} parent=63 // pred_region
        %s5078 = smul.u32 8, %s21
        %p5079 = scmp.lt.s32.totalorder %s5078, 31
        %s5080 = scalar_select %p5079, %s5078, 31
        %s5081 = smul.addr %s5080, 8
        %s5082 = scalar_lea.vmem %s9, %s5081
      $region68: #{tpu_custom_call.1} parent=63 // pred_fallthru
        _
    $region64: #{tpu_custom_call.1} parent=5 // pred_fallthru
      _
  $region6: #{tpu_custom_call.1} parent=0 // loop_footer
    %s19 = sadd.s32 1, %s15
  $region7: #{tpu_custom_call.1} parent=0 // loop_footer_branch
    %14 = sbr.rel target = $region3
  $region8: #{tpu_custom_call.1} parent=0 // loop_exit
    _

</llo_original>
